<compile_context>
chip_gen: v7x
topology: tpu7x:2x2x1
jax: 0.10.0
libtpu: 0.0.40
codegen_flags: <defaults>
</compile_context>

<pallas_src>
import functools

import jax
import jax.numpy as jnp
import numpy as np
from jax import lax
from jax.experimental import pallas as pl
from jax.experimental.pallas import tpu as pltpu

# Left padding (in W) of the conv1-output scratch so the per-step interior
# store lands on a bf16 sublane-tile boundary (16 sublanes per bf16 vreg).
_PADW = 16


def _resnet_block_kernel(x_ref, w1_ref, w2_ref, wp_ref, b1_ref, b2_ref,
                         out_ref, y1p_ref, col1_ref, col2_ref,
                         *, stride, H1, W1, Cin, Cout, identity_shortcut):
    # x_ref : (1, H+2, W+2, Cin) bf16  zero-padded NHWC input for this image
    # w1_ref: (9*Cin, Cout)  bf16  conv1 weights (HWIO flat, BN1 scale folded)
    # w2_ref: (9*Cout, Cout) bf16  conv2 weights (HWIO flat, BN2 scale folded)
    # wp_ref: (Cin, Cout)    bf16  1x1 projection (pad_weight)
    # b1/b2 : (1, Cout)      f32   folded BN biases
    # y1p_ref: (H1+2, W1+2*_PADW, Cout) bf16 scratch (padded conv1 output)
    # col1_ref: (H1*W1, 9*Cin)  bf16 scratch (conv1 im2col)
    # col2_ref: (H1*W1, 9*Cout) bf16 scratch (conv2 im2col)
    M = H1 * W1

    # ------------------------------------------------------------------ taps
    if stride == 1:
        def patch1(kh, kw):                       # read tap window from the ref
            return x_ref[0, kh:kh + H1, kw:kw + W1, :]
        xc = x_ref[0, 1:1 + H1, 1:1 + W1, :]      # shortcut samples (center tap)
    else:
        # TODO(synk): for stride==2 a one-time parity subsampling would avoid
        #             the 9 strided slices (review #8); kept general here.
        span_h = stride * (H1 - 1) + 1
        span_w = stride * (W1 - 1) + 1
        xp_full = x_ref[0]
        def patch1(kh, kw):
            return lax.slice(xp_full, (kh, kw, 0),
                             (kh + span_h, kw + span_w, Cin),
                             (stride, stride, 1))
        xc = lax.slice(xp_full, (1, 1, 0), (1 + span_h, 1 + span_w, Cin),
                       (stride, stride, 1))

    # -------------------------------------------- conv1: im2col + one matmul
    for kh in range(3):
        for kw in range(3):
            t = 3 * kh + kw
            col1_ref[:, t * Cin:(t + 1) * Cin] = patch1(kh, kw).reshape(M, Cin)

    y1 = jnp.dot(col1_ref[...], w1_ref[...],
                 preferred_element_type=jnp.float32)          # (M, Cout) f32
    y1 = jnp.maximum(y1 + b1_ref[...], 0.0)                   # BN bias + ReLU

    # Stage conv1 output into the padded scratch.  Only the halo strips are
    # zeroed (cheap, done every step so it is correct under megacore grid
    # partitioning); the interior write starts at sublane offset _PADW (16).
    Wp = W1 + 2 * _PADW
    y1p_ref[0:1] = jnp.zeros((1, Wp, Cout), jnp.bfloat16)             # top row
    y1p_ref[H1 + 1:H1 + 2] = jnp.zeros((1, Wp, Cout), jnp.bfloat16)   # bottom
    y1p_ref[:, 0:_PADW, :] = jnp.zeros((H1 + 2, _PADW, Cout), jnp.bfloat16)
    y1p_ref[:, _PADW + W1:Wp, :] = jnp.zeros((H1 + 2, _PADW, Cout), jnp.bfloat16)
    y1p_ref[1:1 + H1, _PADW:_PADW + W1, :] = (
        y1.astype(jnp.bfloat16).reshape(H1, W1, Cout))

    # -------------------------------------------- conv2: im2col + one matmul
    for kh in range(3):
        for kw in range(3):
            t = 3 * kh + kw
            c0 = _PADW - 1 + kw
            col2_ref[:, t * Cout:(t + 1) * Cout] = (
                y1p_ref[kh:kh + H1, c0:c0 + W1, :].reshape(M, Cout))

    r = jnp.dot(col2_ref[...], w2_ref[...],
                preferred_element_type=jnp.float32) + b2_ref[...]    # (M, Cout)

    # ------------------------------------------------ shortcut (1x1, stride)
    if identity_shortcut:
        # pad_weight is eye(Cout, Cin) with Cin == Cout: pure pass-through.
        sc = xc.reshape(M, Cin).astype(jnp.float32)
    else:
        sc = jnp.dot(xc.reshape(M, Cin), wp_ref[...],
                     preferred_element_type=jnp.float32)

    out_ref[0] = jnp.maximum(sc + r, 0.0).astype(out_ref.dtype)


@functools.partial(jax.jit, static_argnames=("stride", "eps"))
def resnet_block_pallas(x_nchw, w1_oihw, w2_oihw, wp_oi,
                        gamma1, beta1, mean1, var1,
                        gamma2, beta2, mean2, var2,
                        *, stride=1, eps=1e-5):
    N, Cin, H, W = x_nchw.shape
    Cout = w1_oihw.shape[0]
    H1 = (H - 1) // stride + 1
    W1 = (W - 1) // stride + 1
    M = H1 * W1

    # ---- BN folding (eval mode): scale into bf16 weights, bias kept in f32.
    inv1 = gamma1 / jnp.sqrt(var1 + eps)
    inv2 = gamma2 / jnp.sqrt(var2 + eps)
    b1 = (beta1 - mean1 * inv1).reshape(1, Cout).astype(jnp.float32)
    b2 = (beta2 - mean2 * inv2).reshape(1, Cout).astype(jnp.float32)

    w1f = (jnp.transpose(w1_oihw, (2, 3, 1, 0)) * inv1[None, None, None, :]
           ).reshape(9 * Cin, Cout).astype(jnp.bfloat16)
    w2f = (jnp.transpose(w2_oihw, (2, 3, 1, 0)) * inv2[None, None, None, :]
           ).reshape(9 * Cout, Cout).astype(jnp.bfloat16)
    wpf = jnp.transpose(wp_oi, (1, 0)).astype(jnp.bfloat16)          # (Cin, Cout)

    # ---- layout: NCHW -> NHWC, bf16 cast, and the 3x3 halo pad.  The pad is
    # fused by XLA into the same transpose/cast fusion -> one HBM pass.
    x_nhwc = jnp.transpose(x_nchw, (0, 2, 3, 1)).astype(jnp.bfloat16)
    xpad = jnp.pad(x_nhwc, ((0, 0), (1, 1), (1, 1), (0, 0)))

    identity_shortcut = (stride == 1 and Cin == Cout)   # module's pad_weight=eye

    kernel = functools.partial(_resnet_block_kernel,
                               stride=stride, H1=H1, W1=W1, Cin=Cin, Cout=Cout,
                               identity_shortcut=identity_shortcut)

    out = pl.pallas_call(
        kernel,
        out_shape=jax.ShapeDtypeStruct((N, M, Cout), jnp.float32),
        grid_spec=pltpu.PrefetchScalarGridSpec(
            num_scalar_prefetch=0,
            grid=(N,),
            in_specs=[
                pl.BlockSpec((1, H + 2, W + 2, Cin), lambda n: (n, 0, 0, 0)),
                pl.BlockSpec((9 * Cin, Cout), lambda n: (0, 0)),
                pl.BlockSpec((9 * Cout, Cout), lambda n: (0, 0)),
                pl.BlockSpec((Cin, Cout), lambda n: (0, 0)),
                pl.BlockSpec((1, Cout), lambda n: (0, 0)),
                pl.BlockSpec((1, Cout), lambda n: (0, 0)),
            ],
            out_specs=pl.BlockSpec((1, M, Cout), lambda n: (n, 0, 0)),
            scratch_shapes=[
                pltpu.VMEM((H1 + 2, W1 + 2 * _PADW, Cout), jnp.bfloat16),
                pltpu.VMEM((M, 9 * Cin), jnp.bfloat16),
                pltpu.VMEM((M, 9 * Cout), jnp.bfloat16),
            ],
        ),
        compiler_params=pltpu.CompilerParams(
            dimension_semantics=("parallel",),
            # tiny usage here; explicit budget so large configs fail loudly
            # rather than silently thrashing (re-derive tiles for v7x 64 MiB).
            vmem_limit_bytes=32 * 1024 * 1024),
    )(xpad, w1f, w2f, wpf, b1, b2)

    out = out.reshape(N, H1, W1, Cout)
    return jnp.transpose(out, (0, 3, 1, 2))                      # back to NCHW


def resnet_block_reference(x, w1, w2, wp, g1, be1, m1, v1, g2, be2, m2, v2,
                           *, stride=1, eps=1e-5):
    """Pure-JAX NCHW reference mirroring the PyTorch forward (eval-mode BN)."""
    dn = ('NCHW', 'OIHW', 'NCHW')
    def bn(y, g, b, m, v):
        return (y - m[None, :, None, None]) / jnp.sqrt(v + eps)[None, :, None, None] \
               * g[None, :, None, None] + b[None, :, None, None]
    y = lax.conv_general_dilated(x, w1, (stride, stride), ((1, 1), (1, 1)),
                                 dimension_numbers=dn)
    y = jnp.maximum(bn(y, g1, be1, m1, v1), 0.0)
    y = lax.conv_general_dilated(y, w2, (1, 1), ((1, 1), (1, 1)),
                                 dimension_numbers=dn)
    r = bn(y, g2, be2, m2, v2)
    sc = lax.conv_general_dilated(x, wp[:, :, None, None], (stride, stride),
                                  ((0, 0), (0, 0)), dimension_numbers=dn)
    return jnp.maximum(sc + r, 0.0)


if __name__ == "__main__":
    key = jax.random.PRNGKey(0)
    N, Cin, H, W = 2, 4, 16, 16
    Cout, stride = 8, 1

    ks = jax.random.split(key, 10)
    x = jax.random.normal(ks[0], (N, Cin, H, W), jnp.float32)
    w1 = jax.random.normal(ks[1], (Cout, Cin, 3, 3), jnp.float32) * 0.2
    w2 = jax.random.normal(ks[2], (Cout, Cout, 3, 3), jnp.float32) * 0.2
    wp = jnp.eye(Cout, Cin, dtype=jnp.float32)                  # pad_weight (1x1)

    gamma1 = jax.random.normal(ks[3], (Cout,), jnp.float32) * 0.1 + 1.0
    beta1 = jax.random.normal(ks[4], (Cout,), jnp.float32) * 0.1
    mean1 = jax.random.normal(ks[5], (Cout,), jnp.float32) * 0.1
    var1 = jnp.abs(jax.random.normal(ks[6], (Cout,), jnp.float32)) * 0.2 + 0.5
    gamma2 = jax.random.normal(ks[7], (Cout,), jnp.float32) * 0.1 + 1.0
    beta2 = jax.random.normal(ks[8], (Cout,), jnp.float32) * 0.1
    mean2 = jax.random.normal(ks[9], (Cout,), jnp.float32) * 0.1
    var2 = jnp.abs(jax.random.normal(ks[0], (Cout,), jnp.float32)) * 0.2 + 0.5

    out = resnet_block_pallas(x, w1, w2, wp,
                              gamma1, beta1, mean1, var1,
                              gamma2, beta2, mean2, var2,
                              stride=stride)
    out = jax.block_until_ready(out)

    # Matched-precision reference: same bf16-rounded operands the kernel
    # consumes, f32 math (kernel also accumulates in f32).  Tolerance loosened
    # for the bf16 operand / intermediate rounding.
    q = lambda a: a.astype(jnp.bfloat16).astype(jnp.float32)
    ref = resnet_block_reference(q(x), q(w1), q(w2), q(wp),
                                 gamma1, beta1, mean1, var1,
                                 gamma2, beta2, mean2, var2,
                                 stride=stride)

    assert out.shape == (N, Cout, H // stride, W // stride)
    np.testing.assert_allclose(np.asarray(out), np.asarray(ref),
                               rtol=1e-1, atol=1e-1)
    print("KERNEL_OK")
</pallas_src>

<mosaic_0001>
module attributes {stable_mosaic.version = 11 : i64} {
  func.func @_resnet_block_kernel(%arg0: i32, %arg1: memref<1x18x18x4xbf16, #tpu.memory_space<vmem>>, %arg2: memref<36x8xbf16, #tpu.memory_space<vmem>>, %arg3: memref<72x8xbf16, #tpu.memory_space<vmem>>, %arg4: memref<4x8xbf16, #tpu.memory_space<vmem>>, %arg5: memref<1x8xf32, #tpu.memory_space<vmem>>, %arg6: memref<1x8xf32, #tpu.memory_space<vmem>>, %arg7: memref<1x256x8xf32, #tpu.memory_space<vmem>>, %arg8: memref<18x48x8xbf16, #tpu.memory_space<vmem>>, %arg9: memref<256x36xbf16, #tpu.memory_space<vmem>>, %arg10: memref<256x72xbf16, #tpu.memory_space<vmem>>) attributes {dimension_semantics = [#tpu.dimension_semantics<parallel>], iteration_bounds = array<i64: 2>, scalar_prefetch = 0 : i64, scratch_operands = 3 : i64, tpu.core_type = #tpu.core_type<tc>, window_params = [{transform_indices = @transform_0, window_bounds = array<i64: 1, 18, 18, 4>}, {pipeline_mode = #tpu.pipeline_mode<synchronous>, transform_indices = @transform_1, window_bounds = array<i64: 36, 8>}, {pipeline_mode = #tpu.pipeline_mode<synchronous>, transform_indices = @transform_2, window_bounds = array<i64: 72, 8>}, {pipeline_mode = #tpu.pipeline_mode<synchronous>, transform_indices = @transform_3, window_bounds = array<i64: 4, 8>}, {pipeline_mode = #tpu.pipeline_mode<synchronous>, transform_indices = @transform_4, window_bounds = array<i64: 1, 8>}, {pipeline_mode = #tpu.pipeline_mode<synchronous>, transform_indices = @transform_5, window_bounds = array<i64: 1, 8>}, {transform_indices = @transform_6, window_bounds = array<i64: 1, 256, 8>}]} {
    %c0 = arith.constant 0 : index
    %c1 = arith.constant 1 : index
    %c1_0 = arith.constant 1 : index
    %c0_1 = arith.constant 0 : index
    %0 = vector.load %arg1[%c0, %c1, %c1_0, %c0_1] : memref<1x18x18x4xbf16, #tpu.memory_space<vmem>>, vector<1x16x16x4xbf16>
    %1 = vector.shape_cast %0 : vector<1x16x16x4xbf16> to vector<16x16x4xbf16>
    %c0_2 = arith.constant 0 : index
    %c0_3 = arith.constant 0 : index
    %c0_4 = arith.constant 0 : index
    %c0_5 = arith.constant 0 : index
    %2 = vector.load %arg1[%c0_2, %c0_3, %c0_4, %c0_5] : memref<1x18x18x4xbf16, #tpu.memory_space<vmem>>, vector<1x16x16x4xbf16>
    %3 = vector.shape_cast %2 : vector<1x16x16x4xbf16> to vector<16x16x4xbf16>
    %4 = vector.shape_cast %3 : vector<16x16x4xbf16> to vector<256x4xbf16>
    %c0_6 = arith.constant 0 : index
    %c0_7 = arith.constant 0 : index
    %5 = vector.load %arg9[%c0_6, %c0_7] : memref<256x36xbf16, #tpu.memory_space<vmem>>, vector<256x4xbf16>
    tpu.vector_store %arg9[%c0_6, %c0_7], %4 {strides = array<i32>} : memref<256x36xbf16, #tpu.memory_space<vmem>>, vector<256x4xbf16>,
    %c0_8 = arith.constant 0 : index
    %c0_9 = arith.constant 0 : index
    %c1_10 = arith.constant 1 : index
    %c0_11 = arith.constant 0 : index
    %6 = vector.load %arg1[%c0_8, %c0_9, %c1_10, %c0_11] : memref<1x18x18x4xbf16, #tpu.memory_space<vmem>>, vector<1x16x16x4xbf16>
    %7 = vector.shape_cast %6 : vector<1x16x16x4xbf16> to vector<16x16x4xbf16>
    %8 = vector.shape_cast %7 : vector<16x16x4xbf16> to vector<256x4xbf16>
    %c0_12 = arith.constant 0 : index
    %c4 = arith.constant 4 : index
    %9 = vector.load %arg9[%c0_12, %c4] : memref<256x36xbf16, #tpu.memory_space<vmem>>, vector<256x4xbf16>
    tpu.vector_store %arg9[%c0_12, %c4], %8 {strides = array<i32>} : memref<256x36xbf16, #tpu.memory_space<vmem>>, vector<256x4xbf16>,
    %c0_13 = arith.constant 0 : index
    %c0_14 = arith.constant 0 : index
    %c2 = arith.constant 2 : index
    %c0_15 = arith.constant 0 : index
    %10 = vector.load %arg1[%c0_13, %c0_14, %c2, %c0_15] : memref<1x18x18x4xbf16, #tpu.memory_space<vmem>>, vector<1x16x16x4xbf16>
    %11 = vector.shape_cast %10 : vector<1x16x16x4xbf16> to vector<16x16x4xbf16>
    %12 = vector.shape_cast %11 : vector<16x16x4xbf16> to vector<256x4xbf16>
    %c0_16 = arith.constant 0 : index
    %c8 = arith.constant 8 : index
    %13 = vector.load %arg9[%c0_16, %c8] : memref<256x36xbf16, #tpu.memory_space<vmem>>, vector<256x4xbf16>
    tpu.vector_store %arg9[%c0_16, %c8], %12 {strides = array<i32>} : memref<256x36xbf16, #tpu.memory_space<vmem>>, vector<256x4xbf16>,
    %c0_17 = arith.constant 0 : index
    %c1_18 = arith.constant 1 : index
    %c0_19 = arith.constant 0 : index
    %c0_20 = arith.constant 0 : index
    %14 = vector.load %arg1[%c0_17, %c1_18, %c0_19, %c0_20] : memref<1x18x18x4xbf16, #tpu.memory_space<vmem>>, vector<1x16x16x4xbf16>
    %15 = vector.shape_cast %14 : vector<1x16x16x4xbf16> to vector<16x16x4xbf16>
    %16 = vector.shape_cast %15 : vector<16x16x4xbf16> to vector<256x4xbf16>
    %c0_21 = arith.constant 0 : index
    %c12 = arith.constant 12 : index
    %17 = vector.load %arg9[%c0_21, %c12] : memref<256x36xbf16, #tpu.memory_space<vmem>>, vector<256x4xbf16>
    tpu.vector_store %arg9[%c0_21, %c12], %16 {strides = array<i32>} : memref<256x36xbf16, #tpu.memory_space<vmem>>, vector<256x4xbf16>,
    %c0_22 = arith.constant 0 : index
    %c1_23 = arith.constant 1 : index
    %c1_24 = arith.constant 1 : index
    %c0_25 = arith.constant 0 : index
    %18 = vector.load %arg1[%c0_22, %c1_23, %c1_24, %c0_25] : memref<1x18x18x4xbf16, #tpu.memory_space<vmem>>, vector<1x16x16x4xbf16>
    %19 = vector.shape_cast %18 : vector<1x16x16x4xbf16> to vector<16x16x4xbf16>
    %20 = vector.shape_cast %19 : vector<16x16x4xbf16> to vector<256x4xbf16>
    %c0_26 = arith.constant 0 : index
    %c16 = arith.constant 16 : index
    %21 = vector.load %arg9[%c0_26, %c16] : memref<256x36xbf16, #tpu.memory_space<vmem>>, vector<256x4xbf16>
    tpu.vector_store %arg9[%c0_26, %c16], %20 {strides = array<i32>} : memref<256x36xbf16, #tpu.memory_space<vmem>>, vector<256x4xbf16>,
    %c0_27 = arith.constant 0 : index
    %c1_28 = arith.constant 1 : index
    %c2_29 = arith.constant 2 : index
    %c0_30 = arith.constant 0 : index
    %22 = vector.load %arg1[%c0_27, %c1_28, %c2_29, %c0_30] : memref<1x18x18x4xbf16, #tpu.memory_space<vmem>>, vector<1x16x16x4xbf16>
    %23 = vector.shape_cast %22 : vector<1x16x16x4xbf16> to vector<16x16x4xbf16>
    %24 = vector.shape_cast %23 : vector<16x16x4xbf16> to vector<256x4xbf16>
    %c0_31 = arith.constant 0 : index
    %c20 = arith.constant 20 : index
    %25 = vector.load %arg9[%c0_31, %c20] : memref<256x36xbf16, #tpu.memory_space<vmem>>, vector<256x4xbf16>
    tpu.vector_store %arg9[%c0_31, %c20], %24 {strides = array<i32>} : memref<256x36xbf16, #tpu.memory_space<vmem>>, vector<256x4xbf16>,
    %c0_32 = arith.constant 0 : index
    %c2_33 = arith.constant 2 : index
    %c0_34 = arith.constant 0 : index
    %c0_35 = arith.constant 0 : index
    %26 = vector.load %arg1[%c0_32, %c2_33, %c0_34, %c0_35] : memref<1x18x18x4xbf16, #tpu.memory_space<vmem>>, vector<1x16x16x4xbf16>
    %27 = vector.shape_cast %26 : vector<1x16x16x4xbf16> to vector<16x16x4xbf16>
    %28 = vector.shape_cast %27 : vector<16x16x4xbf16> to vector<256x4xbf16>
    %c0_36 = arith.constant 0 : index
    %c24 = arith.constant 24 : index
    %29 = vector.load %arg9[%c0_36, %c24] : memref<256x36xbf16, #tpu.memory_space<vmem>>, vector<256x4xbf16>
    tpu.vector_store %arg9[%c0_36, %c24], %28 {strides = array<i32>} : memref<256x36xbf16, #tpu.memory_space<vmem>>, vector<256x4xbf16>,
    %c0_37 = arith.constant 0 : index
    %c2_38 = arith.constant 2 : index
    %c1_39 = arith.constant 1 : index
    %c0_40 = arith.constant 0 : index
    %30 = vector.load %arg1[%c0_37, %c2_38, %c1_39, %c0_40] : memref<1x18x18x4xbf16, #tpu.memory_space<vmem>>, vector<1x16x16x4xbf16>
    %31 = vector.shape_cast %30 : vector<1x16x16x4xbf16> to vector<16x16x4xbf16>
    %32 = vector.shape_cast %31 : vector<16x16x4xbf16> to vector<256x4xbf16>
    %c0_41 = arith.constant 0 : index
    %c28 = arith.constant 28 : index
    %33 = vector.load %arg9[%c0_41, %c28] : memref<256x36xbf16, #tpu.memory_space<vmem>>, vector<256x4xbf16>
    tpu.vector_store %arg9[%c0_41, %c28], %32 {strides = array<i32>} : memref<256x36xbf16, #tpu.memory_space<vmem>>, vector<256x4xbf16>,
    %c0_42 = arith.constant 0 : index
    %c2_43 = arith.constant 2 : index
    %c2_44 = arith.constant 2 : index
    %c0_45 = arith.constant 0 : index
    %34 = vector.load %arg1[%c0_42, %c2_43, %c2_44, %c0_45] : memref<1x18x18x4xbf16, #tpu.memory_space<vmem>>, vector<1x16x16x4xbf16>
    %35 = vector.shape_cast %34 : vector<1x16x16x4xbf16> to vector<16x16x4xbf16>
    %36 = vector.shape_cast %35 : vector<16x16x4xbf16> to vector<256x4xbf16>
    %c0_46 = arith.constant 0 : index
    %c32 = arith.constant 32 : index
    %37 = vector.load %arg9[%c0_46, %c32] : memref<256x36xbf16, #tpu.memory_space<vmem>>, vector<256x4xbf16>
    tpu.vector_store %arg9[%c0_46, %c32], %36 {strides = array<i32>} : memref<256x36xbf16, #tpu.memory_space<vmem>>, vector<256x4xbf16>,
    %c0_47 = arith.constant 0 : index
    %c0_48 = arith.constant 0 : index
    %38 = vector.load %arg9[%c0_47, %c0_48] : memref<256x36xbf16, #tpu.memory_space<vmem>>, vector<256x36xbf16>
    %c0_49 = arith.constant 0 : index
    %c0_50 = arith.constant 0 : index
    %39 = vector.load %arg2[%c0_49, %c0_50] : memref<36x8xbf16, #tpu.memory_space<vmem>>, vector<36x8xbf16>
    %cst = arith.constant dense<0.000000e+00> : vector<256x8xf32>
    %40 = tpu.matmul %38, %39, %cst {dimension_numbers = #tpu.dot_dimension_numbers<[1], [0], [0], [1], [0, 0, 1, 1], [], []>} : vector<256x36xbf16>, vector<36x8xbf16>, vector<256x8xf32> -> vector<256x8xf32>
    %c0_51 = arith.constant 0 : index
    %c0_52 = arith.constant 0 : index
    %41 = vector.load %arg5[%c0_51, %c0_52] : memref<1x8xf32, #tpu.memory_space<vmem>>, vector<1x8xf32>
    %42 = vector.broadcast %41 : vector<1x8xf32> to vector<256x8xf32>
    %43 = arith.addf %40, %42 : vector<256x8xf32>
    %cst_53 = arith.constant 0.000000e+00 : f32
    %44 = vector.broadcast %cst_53 : f32 to vector<256x8xf32>
    %45 = arith.maximumf %43, %44 : vector<256x8xf32>
    %cst_54 = arith.constant 0.000000e+00 : bf16
    %46 = vector.broadcast %cst_54 : bf16 to vector<1x48x8xbf16>
    %c0_55 = arith.constant 0 : index
    %c0_56 = arith.constant 0 : index
    %c0_57 = arith.constant 0 : index
    %47 = vector.load %arg8[%c0_55, %c0_56, %c0_57] : memref<18x48x8xbf16, #tpu.memory_space<vmem>>, vector<1x48x8xbf16>
    tpu.vector_store %arg8[%c0_55, %c0_56, %c0_57], %46 {strides = array<i32>} : memref<18x48x8xbf16, #tpu.memory_space<vmem>>, vector<1x48x8xbf16>,
    %cst_58 = arith.constant 0.000000e+00 : bf16
    %48 = vector.broadcast %cst_58 : bf16 to vector<1x48x8xbf16>
    %c17 = arith.constant 17 : index
    %c0_59 = arith.constant 0 : index
    %c0_60 = arith.constant 0 : index
    %49 = vector.load %arg8[%c17, %c0_59, %c0_60] : memref<18x48x8xbf16, #tpu.memory_space<vmem>>, vector<1x48x8xbf16>
    tpu.vector_store %arg8[%c17, %c0_59, %c0_60], %48 {strides = array<i32>} : memref<18x48x8xbf16, #tpu.memory_space<vmem>>, vector<1x48x8xbf16>,
    %cst_61 = arith.constant 0.000000e+00 : bf16
    %50 = vector.broadcast %cst_61 : bf16 to vector<18x16x8xbf16>
    %c0_62 = arith.constant 0 : index
    %c0_63 = arith.constant 0 : index
    %c0_64 = arith.constant 0 : index
    %51 = vector.load %arg8[%c0_62, %c0_63, %c0_64] : memref<18x48x8xbf16, #tpu.memory_space<vmem>>, vector<18x16x8xbf16>
    tpu.vector_store %arg8[%c0_62, %c0_63, %c0_64], %50 {strides = array<i32>} : memref<18x48x8xbf16, #tpu.memory_space<vmem>>, vector<18x16x8xbf16>,
    %cst_65 = arith.constant 0.000000e+00 : bf16
    %52 = vector.broadcast %cst_65 : bf16 to vector<18x16x8xbf16>
    %c0_66 = arith.constant 0 : index
    %c32_67 = arith.constant 32 : index
    %c0_68 = arith.constant 0 : index
    %53 = vector.load %arg8[%c0_66, %c32_67, %c0_68] : memref<18x48x8xbf16, #tpu.memory_space<vmem>>, vector<18x16x8xbf16>
    tpu.vector_store %arg8[%c0_66, %c32_67, %c0_68], %52 {strides = array<i32>} : memref<18x48x8xbf16, #tpu.memory_space<vmem>>, vector<18x16x8xbf16>,
    %54 = arith.truncf %45 : vector<256x8xf32> to vector<256x8xbf16>
    %55 = vector.shape_cast %54 : vector<256x8xbf16> to vector<16x16x8xbf16>
    %c1_69 = arith.constant 1 : index
    %c16_70 = arith.constant 16 : index
    %c0_71 = arith.constant 0 : index
    %56 = vector.load %arg8[%c1_69, %c16_70, %c0_71] : memref<18x48x8xbf16, #tpu.memory_space<vmem>>, vector<16x16x8xbf16>
    tpu.vector_store %arg8[%c1_69, %c16_70, %c0_71], %55 {strides = array<i32>} : memref<18x48x8xbf16, #tpu.memory_space<vmem>>, vector<16x16x8xbf16>,
    %c0_72 = arith.constant 0 : index
    %c15 = arith.constant 15 : index
    %c0_73 = arith.constant 0 : index
    %57 = vector.load %arg8[%c0_72, %c15, %c0_73] : memref<18x48x8xbf16, #tpu.memory_space<vmem>>, vector<16x16x8xbf16>
    %58 = vector.shape_cast %57 : vector<16x16x8xbf16> to vector<256x8xbf16>
    %c0_74 = arith.constant 0 : index
    %c0_75 = arith.constant 0 : index
    %59 = vector.load %arg10[%c0_74, %c0_75] : memref<256x72xbf16, #tpu.memory_space<vmem>>, vector<256x8xbf16>
    tpu.vector_store %arg10[%c0_74, %c0_75], %58 {strides = array<i32>} : memref<256x72xbf16, #tpu.memory_space<vmem>>, vector<256x8xbf16>,
    %c0_76 = arith.constant 0 : index
    %c16_77 = arith.constant 16 : index
    %c0_78 = arith.constant 0 : index
    %60 = vector.load %arg8[%c0_76, %c16_77, %c0_78] : memref<18x48x8xbf16, #tpu.memory_space<vmem>>, vector<16x16x8xbf16>
    %61 = vector.shape_cast %60 : vector<16x16x8xbf16> to vector<256x8xbf16>
    %c0_79 = arith.constant 0 : index
    %c8_80 = arith.constant 8 : index
    %62 = vector.load %arg10[%c0_79, %c8_80] : memref<256x72xbf16, #tpu.memory_space<vmem>>, vector<256x8xbf16>
    tpu.vector_store %arg10[%c0_79, %c8_80], %61 {strides = array<i32>} : memref<256x72xbf16, #tpu.memory_space<vmem>>, vector<256x8xbf16>,
    %c0_81 = arith.constant 0 : index
    %c17_82 = arith.constant 17 : index
    %c0_83 = arith.constant 0 : index
    %63 = vector.load %arg8[%c0_81, %c17_82, %c0_83] : memref<18x48x8xbf16, #tpu.memory_space<vmem>>, vector<16x16x8xbf16>
    %64 = vector.shape_cast %63 : vector<16x16x8xbf16> to vector<256x8xbf16>
    %c0_84 = arith.constant 0 : index
    %c16_85 = arith.constant 16 : index
    %65 = vector.load %arg10[%c0_84, %c16_85] : memref<256x72xbf16, #tpu.memory_space<vmem>>, vector<256x8xbf16>
    tpu.vector_store %arg10[%c0_84, %c16_85], %64 {strides = array<i32>} : memref<256x72xbf16, #tpu.memory_space<vmem>>, vector<256x8xbf16>,
    %c1_86 = arith.constant 1 : index
    %c15_87 = arith.constant 15 : index
    %c0_88 = arith.constant 0 : index
    %66 = vector.load %arg8[%c1_86, %c15_87, %c0_88] : memref<18x48x8xbf16, #tpu.memory_space<vmem>>, vector<16x16x8xbf16>
    %67 = vector.shape_cast %66 : vector<16x16x8xbf16> to vector<256x8xbf16>
    %c0_89 = arith.constant 0 : index
    %c24_90 = arith.constant 24 : index
    %68 = vector.load %arg10[%c0_89, %c24_90] : memref<256x72xbf16, #tpu.memory_space<vmem>>, vector<256x8xbf16>
    tpu.vector_store %arg10[%c0_89, %c24_90], %67 {strides = array<i32>} : memref<256x72xbf16, #tpu.memory_space<vmem>>, vector<256x8xbf16>,
    %c1_91 = arith.constant 1 : index
    %c16_92 = arith.constant 16 : index
    %c0_93 = arith.constant 0 : index
    %69 = vector.load %arg8[%c1_91, %c16_92, %c0_93] : memref<18x48x8xbf16, #tpu.memory_space<vmem>>, vector<16x16x8xbf16>
    %70 = vector.shape_cast %69 : vector<16x16x8xbf16> to vector<256x8xbf16>
    %c0_94 = arith.constant 0 : index
    %c32_95 = arith.constant 32 : index
    %71 = vector.load %arg10[%c0_94, %c32_95] : memref<256x72xbf16, #tpu.memory_space<vmem>>, vector<256x8xbf16>
    tpu.vector_store %arg10[%c0_94, %c32_95], %70 {strides = array<i32>} : memref<256x72xbf16, #tpu.memory_space<vmem>>, vector<256x8xbf16>,
    %c1_96 = arith.constant 1 : index
    %c17_97 = arith.constant 17 : index
    %c0_98 = arith.constant 0 : index
    %72 = vector.load %arg8[%c1_96, %c17_97, %c0_98] : memref<18x48x8xbf16, #tpu.memory_space<vmem>>, vector<16x16x8xbf16>
    %73 = vector.shape_cast %72 : vector<16x16x8xbf16> to vector<256x8xbf16>
    %c0_99 = arith.constant 0 : index
    %c40 = arith.constant 40 : index
    %74 = vector.load %arg10[%c0_99, %c40] : memref<256x72xbf16, #tpu.memory_space<vmem>>, vector<256x8xbf16>
    tpu.vector_store %arg10[%c0_99, %c40], %73 {strides = array<i32>} : memref<256x72xbf16, #tpu.memory_space<vmem>>, vector<256x8xbf16>,
    %c2_100 = arith.constant 2 : index
    %c15_101 = arith.constant 15 : index
    %c0_102 = arith.constant 0 : index
    %75 = vector.load %arg8[%c2_100, %c15_101, %c0_102] : memref<18x48x8xbf16, #tpu.memory_space<vmem>>, vector<16x16x8xbf16>
    %76 = vector.shape_cast %75 : vector<16x16x8xbf16> to vector<256x8xbf16>
    %c0_103 = arith.constant 0 : index
    %c48 = arith.constant 48 : index
    %77 = vector.load %arg10[%c0_103, %c48] : memref<256x72xbf16, #tpu.memory_space<vmem>>, vector<256x8xbf16>
    tpu.vector_store %arg10[%c0_103, %c48], %76 {strides = array<i32>} : memref<256x72xbf16, #tpu.memory_space<vmem>>, vector<256x8xbf16>,
    %c2_104 = arith.constant 2 : index
    %c16_105 = arith.constant 16 : index
    %c0_106 = arith.constant 0 : index
    %78 = vector.load %arg8[%c2_104, %c16_105, %c0_106] : memref<18x48x8xbf16, #tpu.memory_space<vmem>>, vector<16x16x8xbf16>
    %79 = vector.shape_cast %78 : vector<16x16x8xbf16> to vector<256x8xbf16>
    %c0_107 = arith.constant 0 : index
    %c56 = arith.constant 56 : index
    %80 = vector.load %arg10[%c0_107, %c56] : memref<256x72xbf16, #tpu.memory_space<vmem>>, vector<256x8xbf16>
    tpu.vector_store %arg10[%c0_107, %c56], %79 {strides = array<i32>} : memref<256x72xbf16, #tpu.memory_space<vmem>>, vector<256x8xbf16>,
    %c2_108 = arith.constant 2 : index
    %c17_109 = arith.constant 17 : index
    %c0_110 = arith.constant 0 : index
    %81 = vector.load %arg8[%c2_108, %c17_109, %c0_110] : memref<18x48x8xbf16, #tpu.memory_space<vmem>>, vector<16x16x8xbf16>
    %82 = vector.shape_cast %81 : vector<16x16x8xbf16> to vector<256x8xbf16>
    %c0_111 = arith.constant 0 : index
    %c64 = arith.constant 64 : index
    %83 = vector.load %arg10[%c0_111, %c64] : memref<256x72xbf16, #tpu.memory_space<vmem>>, vector<256x8xbf16>
    tpu.vector_store %arg10[%c0_111, %c64], %82 {strides = array<i32>} : memref<256x72xbf16, #tpu.memory_space<vmem>>, vector<256x8xbf16>,
    %c0_112 = arith.constant 0 : index
    %c0_113 = arith.constant 0 : index
    %84 = vector.load %arg10[%c0_112, %c0_113] : memref<256x72xbf16, #tpu.memory_space<vmem>>, vector<256x72xbf16>
    %c0_114 = arith.constant 0 : index
    %c0_115 = arith.constant 0 : index
    %85 = vector.load %arg3[%c0_114, %c0_115] : memref<72x8xbf16, #tpu.memory_space<vmem>>, vector<72x8xbf16>
    %cst_116 = arith.constant dense<0.000000e+00> : vector<256x8xf32>
    %86 = tpu.matmul %84, %85, %cst_116 {dimension_numbers = #tpu.dot_dimension_numbers<[1], [0], [0], [1], [0, 0, 1, 1], [], []>} : vector<256x72xbf16>, vector<72x8xbf16>, vector<256x8xf32> -> vector<256x8xf32>
    %c0_117 = arith.constant 0 : index
    %c0_118 = arith.constant 0 : index
    %87 = vector.load %arg6[%c0_117, %c0_118] : memref<1x8xf32, #tpu.memory_space<vmem>>, vector<1x8xf32>
    %88 = vector.broadcast %87 : vector<1x8xf32> to vector<256x8xf32>
    %89 = arith.addf %86, %88 : vector<256x8xf32>
    %90 = vector.shape_cast %1 : vector<16x16x4xbf16> to vector<256x4xbf16>
    %c0_119 = arith.constant 0 : index
    %c0_120 = arith.constant 0 : index
    %91 = vector.load %arg4[%c0_119, %c0_120] : memref<4x8xbf16, #tpu.memory_space<vmem>>, vector<4x8xbf16>
    %cst_121 = arith.constant dense<0.000000e+00> : vector<256x8xf32>
    %92 = tpu.matmul %90, %91, %cst_121 {dimension_numbers = #tpu.dot_dimension_numbers<[1], [0], [0], [1], [0, 0, 1, 1], [], []>} : vector<256x4xbf16>, vector<4x8xbf16>, vector<256x8xf32> -> vector<256x8xf32>
    %93 = arith.addf %92, %89 : vector<256x8xf32>
    %cst_122 = arith.constant 0.000000e+00 : f32
    %94 = vector.broadcast %cst_122 : f32 to vector<256x8xf32>
    %95 = arith.maximumf %93, %94 : vector<256x8xf32>
    %c0_123 = arith.constant 0 : index
    %c0_124 = arith.constant 0 : index
    %c0_125 = arith.constant 0 : index
    %96 = vector.load %arg7[%c0_123, %c0_124, %c0_125] : memref<1x256x8xf32, #tpu.memory_space<vmem>>, vector<1x256x8xf32>
    %97 = vector.shape_cast %96 : vector<1x256x8xf32> to vector<256x8xf32>
    %98 = vector.shape_cast %95 : vector<256x8xf32> to vector<1x256x8xf32>
    tpu.vector_store %arg7[%c0_123, %c0_124, %c0_125], %98 {strides = array<i32>} : memref<1x256x8xf32, #tpu.memory_space<vmem>>, vector<1x256x8xf32>,
    return
  }
  func.func @transform_0(%arg0: i32) -> (i32, i32, i32, i32) {
    %c0_i32 = arith.constant 0 : i32
    %c0_i32_0 = arith.constant 0 : i32
    %c0_i32_1 = arith.constant 0 : i32
    %c0_i32_2 = arith.constant 0 : i32
    return %arg0, %c0_i32, %c0_i32_0, %c0_i32_1 : i32, i32, i32, i32
  }
  func.func @transform_1(%arg0: i32) -> (i32, i32) {
    %c0_i32 = arith.constant 0 : i32
    %c0_i32_0 = arith.constant 0 : i32
    %c0_i32_1 = arith.constant 0 : i32
    return %c0_i32, %c0_i32_0 : i32, i32
  }
  func.func @transform_2(%arg0: i32) -> (i32, i32) {
    %c0_i32 = arith.constant 0 : i32
    %c0_i32_0 = arith.constant 0 : i32
    %c0_i32_1 = arith.constant 0 : i32
    return %c0_i32, %c0_i32_0 : i32, i32
  }
  func.func @transform_3(%arg0: i32) -> (i32, i32) {
    %c0_i32 = arith.constant 0 : i32
    %c0_i32_0 = arith.constant 0 : i32
    %c0_i32_1 = arith.constant 0 : i32
    return %c0_i32, %c0_i32_0 : i32, i32
  }
  func.func @transform_4(%arg0: i32) -> (i32, i32) {
    %c0_i32 = arith.constant 0 : i32
    %c0_i32_0 = arith.constant 0 : i32
    %c0_i32_1 = arith.constant 0 : i32
    return %c0_i32, %c0_i32_0 : i32, i32
  }
  func.func @transform_5(%arg0: i32) -> (i32, i32) {
    %c0_i32 = arith.constant 0 : i32
    %c0_i32_0 = arith.constant 0 : i32
    %c0_i32_1 = arith.constant 0 : i32
    return %c0_i32, %c0_i32_0 : i32, i32
  }
  func.func @transform_6(%arg0: i32) -> (i32, i32, i32) {
    %c0_i32 = arith.constant 0 : i32
    %c0_i32_0 = arith.constant 0 : i32
    %c0_i32_1 = arith.constant 0 : i32
    return %arg0, %c0_i32, %c0_i32_0 : i32, i32, i32
  }
}

</mosaic_0001>

<llo_original>
// kernel: resnet_block_pallas.1
$region0: #{resnet_block_pallas.1}
  #allocation0 [shape = 'u32[]', space=smem, size = 0x4, offset = 0x4, fixed_abs, tag = 'smem constant byte address 0x4 - core index']
  #allocation1 [shape = 'u32[144,128]{1,0:T(1,128)}', space=vmem, size = 0x12000, scoped, tag = 'internal scratch']
  #allocation2 [shape = 'bf16[18,48,8]{2,1,0:T(16,128)(2,1)}', space=vmem, size = 0x36000, scoped, tag = 'scratch operand']
  #allocation3 [shape = 'bf16[256,36]{1,0:T(16,128)(2,1)}', space=vmem, size = 0x10000, scoped, tag = 'scratch operand']
  #allocation4 [shape = 'bf16[256,72]{1,0:T(16,128)(2,1)}', space=vmem, size = 0x10000, scoped, tag = 'scratch operand']
  %s0 = inlined_call_operand.vmem [shape: bf16[2,18,18,4], index: 0, kind: input, shape index: {}]
  %s1 = inlined_call_operand.vmem [shape: bf16[36,8], index: 1, kind: input, shape index: {}]
  %s2 = inlined_call_operand.vmem [shape: bf16[72,8], index: 2, kind: input, shape index: {}]
  %s3 = inlined_call_operand.vmem [shape: bf16[4,8], index: 3, kind: input, shape index: {}]
  %s4 = inlined_call_operand.vmem [shape: f32[1,8], index: 4, kind: input, shape index: {}]
  %s5 = inlined_call_operand.vmem [shape: f32[1,8], index: 5, kind: input, shape index: {}]
  %s6 = inlined_call_operand.vmem [shape: f32[2,256,8], index: 6, kind: output, shape index: {}]
  %s7 = sld [smem:[#allocation0]]
  $region57: #{resnet_block_pallas.1} parent=0
    _
  %s9 = ssub.s32 1, %s7
  %s10 = scalar_select 0, %s9, %s7
  loop: start=0, step=1, limit=4
  $region2: #{resnet_block_pallas.1} parent=0 // loop_pre_header
    _
  $region3: #{resnet_block_pallas.1} parent=0 // loop_header
    %s12 = sphi 0, %s16
    %p13 = scmp.ge.s32.totalorder %s12, 4
    %s22 = sphi 0, %s24
    %s25 = sphi 0, %s22
    %s26 = sphi 0, %s25
    %s42 = sphi 0, %s26
    %s46 = sphi 0, %s46
    %s48 = sphi 0, %s46
    %s49 = sphi 0, %s48
    %s63 = sphi 0, %s49
    %s67 = sphi 0, %s67
    %s69 = sphi 0, %s67
    %s70 = sphi 0, %s69
    %s84 = sphi 0, %s70
    %s88 = sphi 0, %s88
    %s90 = sphi 0, %s88
    %s91 = sphi 0, %s90
    %s105 = sphi 0, %s91
    %s109 = sphi 0, %s109
    %s111 = sphi 0, %s109
    %s112 = sphi 0, %s111
    %s126 = sphi 0, %s112
    %s130 = sphi 0, %s130
    %s132 = sphi 0, %s130
    %s133 = sphi 0, %s132
    %s147 = sphi 0, %s133
    %s153 = sphi 0, %s155
    %s156 = sphi 0, %s153
    %s157 = sphi 0, %s156
    %s173 = sphi 0, %s157
  $region4: #{resnet_block_pallas.1} parent=0 // loop_header_branch
    %15 = sbr.rel (%p13) target = $region8
  $region5: #{resnet_block_pallas.1} parent=0 // loop_body
    %s17 = ssub.s32 %s12, 1
    %s18 = ssub.s32 %s12, 2
    %s19 = sadd.s32 %s12, 1
    %s20 = ssub.s32 %s12, %s19
    %p21 = scmp.eq.s32.totalorder %s20, 0
    %s23 = sadd.s32 %s22, 1
    %s24 = scalar_select %p21, %s22, %s23
    %p27 = pneg %p21
    %p28 = scmp.eq.s32.totalorder %s12, 1
    %p29 = por %p27, %p28
    %p30 = scmp.ne.s32.totalorder %s22, %s25
    %p31 = scmp.eq.s32.totalorder %s12, 0
    %p32 = por %p30, %p31
    %p33 = scmp.ne.s32.totalorder %s22, %s25
    %p34 = scmp.eq.s32.totalorder %s17, 1
    %p35 = por %p33, %p34
    %p36 = scmp.ne.s32.totalorder %s25, %s26
    %p37 = scmp.eq.s32.totalorder %s17, 0
    %p38 = por %p36, %p37
    %p39 = scmp.ne.s32.totalorder %s25, %s26
    %p40 = scmp.eq.s32.totalorder %s18, 1
    %p41 = por %p39, %p40
    %p43 = scmp.ne.s32.totalorder %s26, %s42
    %p44 = scmp.eq.s32.totalorder %s18, 0
    %p45 = por %p43, %p44
    %s47 = sadd.s32 %s46, 1
    %p50 = scmp.eq.s32.totalorder %s12, 1
    %p51 = scmp.ne.s32.totalorder %s46, %s48
    %p52 = scmp.eq.s32.totalorder %s12, 0
    %p53 = por %p51, %p52
    %p54 = scmp.ne.s32.totalorder %s46, %s48
    %p55 = scmp.eq.s32.totalorder %s17, 1
    %p56 = por %p54, %p55
    %p57 = scmp.ne.s32.totalorder %s48, %s49
    %p58 = scmp.eq.s32.totalorder %s17, 0
    %p59 = por %p57, %p58
    %p60 = scmp.ne.s32.totalorder %s48, %s49
    %p61 = scmp.eq.s32.totalorder %s18, 1
    %p62 = por %p60, %p61
    %p64 = scmp.ne.s32.totalorder %s49, %s63
    %p65 = scmp.eq.s32.totalorder %s18, 0
    %p66 = por %p64, %p65
    %s68 = sadd.s32 %s67, 1
    %p71 = scmp.eq.s32.totalorder %s12, 1
    %p72 = scmp.ne.s32.totalorder %s67, %s69
    %p73 = scmp.eq.s32.totalorder %s12, 0
    %p74 = por %p72, %p73
    %p75 = scmp.ne.s32.totalorder %s67, %s69
    %p76 = scmp.eq.s32.totalorder %s17, 1
    %p77 = por %p75, %p76
    %p78 = scmp.ne.s32.totalorder %s69, %s70
    %p79 = scmp.eq.s32.totalorder %s17, 0
    %p80 = por %p78, %p79
    %p81 = scmp.ne.s32.totalorder %s69, %s70
    %p82 = scmp.eq.s32.totalorder %s18, 1
    %p83 = por %p81, %p82
    %p85 = scmp.ne.s32.totalorder %s70, %s84
    %p86 = scmp.eq.s32.totalorder %s18, 0
    %p87 = por %p85, %p86
    %s89 = sadd.s32 %s88, 1
    %p92 = scmp.eq.s32.totalorder %s12, 1
    %p93 = scmp.ne.s32.totalorder %s88, %s90
    %p94 = scmp.eq.s32.totalorder %s12, 0
    %p95 = por %p93, %p94
    %p96 = scmp.ne.s32.totalorder %s88, %s90
    %p97 = scmp.eq.s32.totalorder %s17, 1
    %p98 = por %p96, %p97
    %p99 = scmp.ne.s32.totalorder %s90, %s91
    %p100 = scmp.eq.s32.totalorder %s17, 0
    %p101 = por %p99, %p100
    %p102 = scmp.ne.s32.totalorder %s90, %s91
    %p103 = scmp.eq.s32.totalorder %s18, 1
    %p104 = por %p102, %p103
    %p106 = scmp.ne.s32.totalorder %s91, %s105
    %p107 = scmp.eq.s32.totalorder %s18, 0
    %p108 = por %p106, %p107
    %s110 = sadd.s32 %s109, 1
    %p113 = scmp.eq.s32.totalorder %s12, 1
    %p114 = scmp.ne.s32.totalorder %s109, %s111
    %p115 = scmp.eq.s32.totalorder %s12, 0
    %p116 = por %p114, %p115
    %p117 = scmp.ne.s32.totalorder %s109, %s111
    %p118 = scmp.eq.s32.totalorder %s17, 1
    %p119 = por %p117, %p118
    %p120 = scmp.ne.s32.totalorder %s111, %s112
    %p121 = scmp.eq.s32.totalorder %s17, 0
    %p122 = por %p120, %p121
    %p123 = scmp.ne.s32.totalorder %s111, %s112
    %p124 = scmp.eq.s32.totalorder %s18, 1
    %p125 = por %p123, %p124
    %p127 = scmp.ne.s32.totalorder %s112, %s126
    %p128 = scmp.eq.s32.totalorder %s18, 0
    %p129 = por %p127, %p128
    %s131 = sadd.s32 %s130, 1
    %p134 = scmp.eq.s32.totalorder %s12, 1
    %p135 = scmp.ne.s32.totalorder %s130, %s132
    %p136 = scmp.eq.s32.totalorder %s12, 0
    %p137 = por %p135, %p136
    %p138 = scmp.ne.s32.totalorder %s130, %s132
    %p139 = scmp.eq.s32.totalorder %s17, 1
    %p140 = por %p138, %p139
    %p141 = scmp.ne.s32.totalorder %s132, %s133
    %p142 = scmp.eq.s32.totalorder %s17, 0
    %p143 = por %p141, %p142
    %p144 = scmp.ne.s32.totalorder %s132, %s133
    %p145 = scmp.eq.s32.totalorder %s18, 1
    %p146 = por %p144, %p145
    %p148 = scmp.ne.s32.totalorder %s133, %s147
    %p149 = scmp.eq.s32.totalorder %s18, 0
    %p150 = por %p148, %p149
    %s151 = ssub.s32 %s12, %s19
    %p152 = scmp.eq.s32.totalorder %s151, 0
    %s154 = sadd.s32 %s153, 1
    %s155 = scalar_select %p152, %s153, %s154
    %p158 = pneg %p152
    %p159 = scmp.eq.s32.totalorder %s12, 1
    %p160 = por %p158, %p159
    %p161 = scmp.ne.s32.totalorder %s153, %s156
    %p162 = scmp.eq.s32.totalorder %s12, 0
    %p163 = por %p161, %p162
    %p164 = scmp.ne.s32.totalorder %s153, %s156
    %p165 = scmp.eq.s32.totalorder %s17, 1
    %p166 = por %p164, %p165
    %p167 = scmp.ne.s32.totalorder %s156, %s157
    %p168 = scmp.eq.s32.totalorder %s17, 0
    %p169 = por %p167, %p168
    %p170 = scmp.ne.s32.totalorder %s156, %s157
    %p171 = scmp.eq.s32.totalorder %s18, 1
    %p172 = por %p170, %p171
    %p174 = scmp.ne.s32.totalorder %s157, %s173
    %p175 = scmp.eq.s32.totalorder %s18, 0
    %p176 = por %p174, %p175
    %p177 = scmp.le.s32.totalorder 1, %s12
    %p178 = scmp.lt.s32.totalorder %s12, 3
    %p179 = pnand %p177, %p178
    %p180 = pneg %p179
    // Predicated region
    $region9: #{resnet_block_pallas.1} parent=5 // pred_check
      _
    $region10: #{resnet_block_pallas.1} parent=5 // pred_check_branch
      %182 = sbr.rel (%p179) target = $region12
    $region11: #{resnet_block_pallas.1} parent=5 // pred_region
      %s183 = ssub.s32 %s12, 1
      // Predicated region
      $region13: #{resnet_block_pallas.1} parent=11 // pred_check
        %p184 = pneg %p59
      $region14: #{resnet_block_pallas.1} parent=11 // pred_check_branch
        %186 = sbr.rel (%p184) target = $region16
      $region15: #{resnet_block_pallas.1} parent=11 // pred_region
        _
      $region16: #{resnet_block_pallas.1} parent=11 // pred_fallthru
        _
      // Predicated region
      $region17: #{resnet_block_pallas.1} parent=11 // pred_check
        %p187 = pneg %p80
      $region18: #{resnet_block_pallas.1} parent=11 // pred_check_branch
        %189 = sbr.rel (%p187) target = $region20
      $region19: #{resnet_block_pallas.1} parent=11 // pred_region
        _
      $region20: #{resnet_block_pallas.1} parent=11 // pred_fallthru
        _
      // Predicated region
      $region21: #{resnet_block_pallas.1} parent=11 // pred_check
        %p190 = pneg %p101
      $region22: #{resnet_block_pallas.1} parent=11 // pred_check_branch
        %192 = sbr.rel (%p190) target = $region24
      $region23: #{resnet_block_pallas.1} parent=11 // pred_region
        _
      $region24: #{resnet_block_pallas.1} parent=11 // pred_fallthru
        _
      // Predicated region
      $region25: #{resnet_block_pallas.1} parent=11 // pred_check
        %p193 = pneg %p122
      $region26: #{resnet_block_pallas.1} parent=11 // pred_check_branch
        %195 = sbr.rel (%p193) target = $region28
      $region27: #{resnet_block_pallas.1} parent=11 // pred_region
        _
      $region28: #{resnet_block_pallas.1} parent=11 // pred_fallthru
        _
      // Predicated region
      $region29: #{resnet_block_pallas.1} parent=11 // pred_check
        %p196 = pneg %p143
      $region30: #{resnet_block_pallas.1} parent=11 // pred_check_branch
        %198 = sbr.rel (%p196) target = $region32
      $region31: #{resnet_block_pallas.1} parent=11 // pred_region
        _
      $region32: #{resnet_block_pallas.1} parent=11 // pred_fallthru
        _
    $region12: #{resnet_block_pallas.1} parent=5 // pred_fallthru
      _
    %p199 = scmp.lt.s32.totalorder %s12, 2
    // Predicated region
    $region33: #{resnet_block_pallas.1} parent=5 // pred_check
      %p200 = pneg %p199
    $region34: #{resnet_block_pallas.1} parent=5 // pred_check_branch
      %202 = sbr.rel (%p200) target = $region36
    $region35: #{resnet_block_pallas.1} parent=5 // pred_region
      // Predicated region
      $region37: #{resnet_block_pallas.1} parent=35 // pred_check
        %p203 = pneg %p32
      $region38: #{resnet_block_pallas.1} parent=35 // pred_check_branch
        %205 = sbr.rel (%p203) target = $region40
      $region39: #{resnet_block_pallas.1} parent=35 // pred_region
        %p206 = scmp.lt.s32.totalorder %s12, 1
        %s207 = scalar_select %p206, %s12, 1
        %s208 = smul.addr %s207, 54
        %s209 = smul.addr %s208, 4
        %s210 = scalar_lea.vmem %s0, %s209
      $region40: #{resnet_block_pallas.1} parent=35 // pred_fallthru
        _
    $region36: #{resnet_block_pallas.1} parent=5 // pred_fallthru
      _
    %p211 = scmp.le.s32.totalorder 1, %s12
    %p212 = scmp.lt.s32.totalorder %s12, 3
    %p213 = pnand %p211, %p212
    %p214 = pneg %p213
    // Predicated region
    $region41: #{resnet_block_pallas.1} parent=5 // pred_check
      _
    $region42: #{resnet_block_pallas.1} parent=5 // pred_check_branch
      %216 = sbr.rel (%p213) target = $region44
    $region43: #{resnet_block_pallas.1} parent=5 // pred_region
      %s217 = ssub.s32 %s12, 1
      %p218 = scmp.lt.s32.totalorder %s17, 1
      %s219 = scalar_select %p218, %s17, 1
      %s220 = smul.addr %s219, 54
      %s221 = smul.addr %s220, 4
      %s222 = scalar_lea.vmem %s0, %s221
      %p223 = pneg %p38
      %p224 = pneg %p35
      %p225 = pneg %p59
      %p226 = pneg %p56
      %p227 = pneg %p80
      %p228 = pneg %p77
      %p229 = pneg %p101
      %p230 = pneg %p98
      %p231 = pneg %p122
      %p232 = pneg %p119
      %p233 = pneg %p143
      %p234 = pneg %p140
      %p235 = pneg %p169
      %p236 = pneg %p166
      %p237 = scmp.lt.s32.totalorder %s17, 1
      %s238 = scalar_select %p237, %s17, 1
      %s239 = smul.addr %s238, 32
      %s240 = smul.addr %s239, 8
      %s241 = scalar_lea.vmem %s6, %s240
      %p242 = scmp.lt.s32.totalorder %s17, 1
      %s243 = scalar_select %p242, %s17, 1
      %s244 = smul.addr %s243, 54
      %s245 = smul.addr %s244, 4
      %s246 = scalar_lea.vmem %s0, %s245
      %p247 = scmp.lt.s32.totalorder %s17, 1
      %s248 = scalar_select %p247, %s17, 1
      %s249 = smul.addr %s248, 32
      %s250 = smul.addr %s249, 8
      %s251 = scalar_lea.vmem %s6, %s250
      %s253 = scalar_lea.vmem %s246, 12
      %v254 = vld [vmem:[%s253] sm:$0xf]
      %v255 = vld [vmem:[%s253 + $0x4] sm:$0xf]
      %v256 = vld [vmem:[%s253 + $0x8] sm:$0x1]
      %v257 = vld [vmem:[%s253 + $0xc] sm:$0xf]
      %v258 = vld [vmem:[%s253 + $0x10] sm:$0xf]
      %v259 = vld [vmem:[%s253 + $0x14] sm:$0x1]
      %v260 = vld [vmem:[%s253 + $0x18] sm:$0xf]
      %v261 = vld [vmem:[%s253 + $0x1c] sm:$0xf]
      %v262 = vld [vmem:[%s253 + $0x20] sm:$0x1]
      %v263 = vld [vmem:[%s253 + $0x24] sm:$0xf]
      %v264 = vld [vmem:[%s253 + $0x28] sm:$0xf]
      %v265 = vld [vmem:[%s253 + $0x2c] sm:$0x1]
      %v266 = vld [vmem:[%s253 + $0x30] sm:$0xf]
      %v267 = vld [vmem:[%s253 + $0x34] sm:$0xf]
      %v268 = vld [vmem:[%s253 + $0x38] sm:$0x1]
      %v269 = vld [vmem:[%s253 + $0x3c] sm:$0xf]
      %v270 = vld [vmem:[%s253 + $0x40] sm:$0xf]
      %v271 = vld [vmem:[%s253 + $0x44] sm:$0x1]
      %v272 = vld [vmem:[%s253 + $0x48] sm:$0xf]
      %v273 = vld [vmem:[%s253 + $0x4c] sm:$0xf]
      %v274 = vld [vmem:[%s253 + $0x50] sm:$0x1]
      %v275 = vld [vmem:[%s253 + $0x54] sm:$0xf]
      %v276 = vld [vmem:[%s253 + $0x58] sm:$0xf]
      %v277 = vld [vmem:[%s253 + $0x5c] sm:$0x1]
      %v278 = vld [vmem:[%s253 + $0x60] sm:$0xf]
      %v279 = vld [vmem:[%s253 + $0x64] sm:$0xf]
      %v280 = vld [vmem:[%s253 + $0x68] sm:$0x1]
      %v281 = vld [vmem:[%s253 + $0x6c] sm:$0xf]
      %v282 = vld [vmem:[%s253 + $0x70] sm:$0xf]
      %v283 = vld [vmem:[%s253 + $0x74] sm:$0x1]
      %v284 = vld [vmem:[%s253 + $0x78] sm:$0xf]
      %v285 = vld [vmem:[%s253 + $0x7c] sm:$0xf]
      %v286 = vld [vmem:[%s253 + $0x80] sm:$0x1]
      %v287 = vld [vmem:[%s253 + $0x84] sm:$0xf]
      %v288 = vld [vmem:[%s253 + $0x88] sm:$0xf]
      %v289 = vld [vmem:[%s253 + $0x8c] sm:$0x1]
      %v290 = vld [vmem:[%s253 + $0x90] sm:$0xf]
      %v291 = vld [vmem:[%s253 + $0x94] sm:$0xf]
      %v292 = vld [vmem:[%s253 + $0x98] sm:$0x1]
      %v293 = vld [vmem:[%s253 + $0x9c] sm:$0xf]
      %v294 = vld [vmem:[%s253 + $0xa0] sm:$0xf]
      %v295 = vld [vmem:[%s253 + $0xa4] sm:$0x1]
      %v296 = vld [vmem:[%s253 + $0xa8] sm:$0xf]
      %v297 = vld [vmem:[%s253 + $0xac] sm:$0xf]
      %v298 = vld [vmem:[%s253 + $0xb0] sm:$0x1]
      %v299 = vld [vmem:[%s253 + $0xb4] sm:$0xf]
      %v300 = vld [vmem:[%s253 + $0xb8] sm:$0xf]
      %v301 = vld [vmem:[%s253 + $0xbc] sm:$0x1]
      %v302 = vld [vmem:[%s246] sm:$0xf]
      %v303 = vld [vmem:[%s246 + $0x4] sm:$0xf]
      %v304 = vld [vmem:[%s246 + $0xc] sm:$0xf]
      %v305 = vld [vmem:[%s246 + $0x10] sm:$0xf]
      %v306 = vld [vmem:[%s246 + $0x18] sm:$0xf]
      %v307 = vld [vmem:[%s246 + $0x1c] sm:$0xf]
      %v308 = vld [vmem:[%s246 + $0x24] sm:$0xf]
      %v309 = vld [vmem:[%s246 + $0x28] sm:$0xf]
      %v310 = vld [vmem:[%s246 + $0x30] sm:$0xf]
      %v311 = vld [vmem:[%s246 + $0x34] sm:$0xf]
      %v312 = vld [vmem:[%s246 + $0x3c] sm:$0xf]
      %v313 = vld [vmem:[%s246 + $0x40] sm:$0xf]
      %v314 = vld [vmem:[%s246 + $0x48] sm:$0xf]
      %v315 = vld [vmem:[%s246 + $0x4c] sm:$0xf]
      %v316 = vld [vmem:[%s246 + $0x54] sm:$0xf]
      %v317 = vld [vmem:[%s246 + $0x58] sm:$0xf]
      %v318 = vld [vmem:[%s246 + $0x60] sm:$0xf]
      %v319 = vld [vmem:[%s246 + $0x64] sm:$0xf]
      %v320 = vld [vmem:[%s246 + $0x6c] sm:$0xf]
      %v321 = vld [vmem:[%s246 + $0x70] sm:$0xf]
      %v322 = vld [vmem:[%s246 + $0x78] sm:$0xf]
      %v323 = vld [vmem:[%s246 + $0x7c] sm:$0xf]
      %v324 = vld [vmem:[%s246 + $0x84] sm:$0xf]
      %v325 = vld [vmem:[%s246 + $0x88] sm:$0xf]
      %v326 = vld [vmem:[%s246 + $0x90] sm:$0xf]
      %v327 = vld [vmem:[%s246 + $0x94] sm:$0xf]
      %v328 = vld [vmem:[%s246 + $0x9c] sm:$0xf]
      %v329 = vld [vmem:[%s246 + $0xa0] sm:$0xf]
      %v330 = vld [vmem:[%s246 + $0xa8] sm:$0xf]
      %v331 = vld [vmem:[%s246 + $0xac] sm:$0xf]
      %v332 = vld [vmem:[%s246 + $0xb4] sm:$0xf]
      %v333 = vld [vmem:[%s246 + $0xb8] sm:$0xf]
      %v366 = vunpack.c.l.b16 %v302
      %v367 = vunpack.c.l.b16 %v303
      %v368 = vunpack.c.l.b16 %v304
      %v369 = vunpack.c.l.b16 %v305
      %v370 = vunpack.c.l.b16 %v306
      %v371 = vunpack.c.l.b16 %v307
      %v372 = vunpack.c.l.b16 %v308
      %v373 = vunpack.c.l.b16 %v309
      %v374 = vunpack.c.l.b16 %v310
      %v375 = vunpack.c.l.b16 %v311
      %v376 = vunpack.c.l.b16 %v312
      %v377 = vunpack.c.l.b16 %v313
      %v378 = vunpack.c.l.b16 %v314
      %v379 = vunpack.c.l.b16 %v315
      %v380 = vunpack.c.l.b16 %v316
      %v381 = vunpack.c.l.b16 %v317
      %v382 = vunpack.c.l.b16 %v318
      %v383 = vunpack.c.l.b16 %v319
      %v384 = vunpack.c.l.b16 %v320
      %v385 = vunpack.c.l.b16 %v321
      %v386 = vunpack.c.l.b16 %v322
      %v387 = vunpack.c.l.b16 %v323
      %v388 = vunpack.c.l.b16 %v324
      %v389 = vunpack.c.l.b16 %v325
      %v390 = vunpack.c.l.b16 %v326
      %v391 = vunpack.c.l.b16 %v327
      %v392 = vunpack.c.l.b16 %v328
      %v393 = vunpack.c.l.b16 %v329
      %v394 = vunpack.c.l.b16 %v330
      %v395 = vunpack.c.l.b16 %v331
      %v396 = vunpack.c.l.b16 %v332
      %v397 = vunpack.c.l.b16 %v333
      %v398 = vpack.c.b16 %v367, %v366
      %v399 = vpack.c.b16 %v369, %v368
      %v400 = vpack.c.b16 %v371, %v370
      %v401 = vpack.c.b16 %v373, %v372
      %v402 = vpack.c.b16 %v375, %v374
      %v403 = vpack.c.b16 %v377, %v376
      %v404 = vpack.c.b16 %v379, %v378
      %v405 = vpack.c.b16 %v381, %v380
      %v406 = vpack.c.b16 %v383, %v382
      %v407 = vpack.c.b16 %v385, %v384
      %v408 = vpack.c.b16 %v387, %v386
      %v409 = vpack.c.b16 %v389, %v388
      %v410 = vpack.c.b16 %v391, %v390
      %v411 = vpack.c.b16 %v393, %v392
      %v412 = vpack.c.b16 %v395, %v394
      %v413 = vpack.c.b16 %v397, %v396
      %vm430 = vcmask 31744
      %431 = vst.msk [vmem:[#allocation3] sm:$0xff] %vm430, %v398
      %432 = vst.msk [vmem:[#allocation3 + $0x8] sm:$0xff] %vm430, %v399
      %433 = vst.msk [vmem:[#allocation3 + $0x10] sm:$0xff] %vm430, %v400
      %434 = vst.msk [vmem:[#allocation3 + $0x18] sm:$0xff] %vm430, %v401
      %435 = vst.msk [vmem:[#allocation3 + $0x20] sm:$0xff] %vm430, %v402
      %436 = vst.msk [vmem:[#allocation3 + $0x28] sm:$0xff] %vm430, %v403
      %437 = vst.msk [vmem:[#allocation3 + $0x30] sm:$0xff] %vm430, %v404
      %438 = vst.msk [vmem:[#allocation3 + $0x38] sm:$0xff] %vm430, %v405
      %439 = vst.msk [vmem:[#allocation3 + $0x40] sm:$0xff] %vm430, %v406
      %440 = vst.msk [vmem:[#allocation3 + $0x48] sm:$0xff] %vm430, %v407
      %441 = vst.msk [vmem:[#allocation3 + $0x50] sm:$0xff] %vm430, %v408
      %442 = vst.msk [vmem:[#allocation3 + $0x58] sm:$0xff] %vm430, %v409
      %443 = vst.msk [vmem:[#allocation3 + $0x60] sm:$0xff] %vm430, %v410
      %444 = vst.msk [vmem:[#allocation3 + $0x68] sm:$0xff] %vm430, %v411
      %445 = vst.msk [vmem:[#allocation3 + $0x70] sm:$0xff] %vm430, %v412
      %446 = vst.msk [vmem:[#allocation3 + $0x78] sm:$0xff] %vm430, %v413
      %v447 = vld [vmem:[%s246] sm:$0xf]
      %v448 = vld [vmem:[%s246 + $0x4] sm:$0xf]
      %v449 = vld [vmem:[%s246 + $0x8] sm:$0x1]
      %v450 = vld [vmem:[%s246 + $0xc] sm:$0xf]
      %v451 = vld [vmem:[%s246 + $0x10] sm:$0xf]
      %v452 = vld [vmem:[%s246 + $0x14] sm:$0x1]
      %v453 = vld [vmem:[%s246 + $0x18] sm:$0xf]
      %v454 = vld [vmem:[%s246 + $0x1c] sm:$0xf]
      %v455 = vld [vmem:[%s246 + $0x20] sm:$0x1]
      %v456 = vld [vmem:[%s246 + $0x24] sm:$0xf]
      %v457 = vld [vmem:[%s246 + $0x28] sm:$0xf]
      %v458 = vld [vmem:[%s246 + $0x2c] sm:$0x1]
      %v459 = vld [vmem:[%s246 + $0x30] sm:$0xf]
      %v460 = vld [vmem:[%s246 + $0x34] sm:$0xf]
      %v461 = vld [vmem:[%s246 + $0x38] sm:$0x1]
      %v462 = vld [vmem:[%s246 + $0x3c] sm:$0xf]
      %v463 = vld [vmem:[%s246 + $0x40] sm:$0xf]
      %v464 = vld [vmem:[%s246 + $0x44] sm:$0x1]
      %v465 = vld [vmem:[%s246 + $0x48] sm:$0xf]
      %v466 = vld [vmem:[%s246 + $0x4c] sm:$0xf]
      %v467 = vld [vmem:[%s246 + $0x50] sm:$0x1]
      %v468 = vld [vmem:[%s246 + $0x54] sm:$0xf]
      %v469 = vld [vmem:[%s246 + $0x58] sm:$0xf]
      %v470 = vld [vmem:[%s246 + $0x5c] sm:$0x1]
      %v471 = vld [vmem:[%s246 + $0x60] sm:$0xf]
      %v472 = vld [vmem:[%s246 + $0x64] sm:$0xf]
      %v473 = vld [vmem:[%s246 + $0x68] sm:$0x1]
      %v474 = vld [vmem:[%s246 + $0x6c] sm:$0xf]
      %v475 = vld [vmem:[%s246 + $0x70] sm:$0xf]
      %v476 = vld [vmem:[%s246 + $0x74] sm:$0x1]
      %v477 = vld [vmem:[%s246 + $0x78] sm:$0xf]
      %v478 = vld [vmem:[%s246 + $0x7c] sm:$0xf]
      %v479 = vld [vmem:[%s246 + $0x80] sm:$0x1]
      %v480 = vld [vmem:[%s246 + $0x84] sm:$0xf]
      %v481 = vld [vmem:[%s246 + $0x88] sm:$0xf]
      %v482 = vld [vmem:[%s246 + $0x8c] sm:$0x1]
      %v483 = vld [vmem:[%s246 + $0x90] sm:$0xf]
      %v484 = vld [vmem:[%s246 + $0x94] sm:$0xf]
      %v485 = vld [vmem:[%s246 + $0x98] sm:$0x1]
      %v486 = vld [vmem:[%s246 + $0x9c] sm:$0xf]
      %v487 = vld [vmem:[%s246 + $0xa0] sm:$0xf]
      %v488 = vld [vmem:[%s246 + $0xa4] sm:$0x1]
      %v489 = vld [vmem:[%s246 + $0xa8] sm:$0xf]
      %v490 = vld [vmem:[%s246 + $0xac] sm:$0xf]
      %v491 = vld [vmem:[%s246 + $0xb0] sm:$0x1]
      %v492 = vld [vmem:[%s246 + $0xb4] sm:$0xf]
      %v493 = vld [vmem:[%s246 + $0xb8] sm:$0xf]
      %v494 = vld [vmem:[%s246 + $0xbc] sm:$0x1]
      %vm495 = vsmask.f32 3328
      %vm496 = vsmask.f32 7440
      %vm497 = vmor %vm495, %vm496
      %v499 = vshrl.u32 %v447, 16
      %v501 = vrot.slane %v499, 4
      %v502 = vshll.u32 %v447, 16
      %v504 = vrot.slane %v502, 5
      %v505 = vor.u32 %v501, %v504
      %v506 = vrot.slane %v505, 4
      %v508 = vshll.u32 %v448, 16
      %v510 = vrot.slane %v508, 5
      %v511 = vsel %vm497, %v506, %v510
      %v512 = vshrl.u32 %v448, 16
      %v514 = vrot.slane %v512, 4
      %v515 = vor.u32 %v514, %v510
      %v516 = vrot.slane %v515, 4
      %v518 = vshll.u32 %v449, 16
      %v520 = vrot.slane %v518, 5
      %v521 = vsel %vm497, %v516, %v520
      %v523 = vshrl.u32 %v450, 16
      %v525 = vrot.slane %v523, 4
      %v526 = vshll.u32 %v450, 16
      %v528 = vrot.slane %v526, 5
      %v529 = vor.u32 %v525, %v528
      %v530 = vrot.slane %v529, 4
      %v532 = vshll.u32 %v451, 16
      %v534 = vrot.slane %v532, 5
      %v535 = vsel %vm497, %v530, %v534
      %v536 = vshrl.u32 %v451, 16
      %v538 = vrot.slane %v536, 4
      %v539 = vor.u32 %v538, %v534
      %v540 = vrot.slane %v539, 4
      %v542 = vshll.u32 %v452, 16
      %v544 = vrot.slane %v542, 5
      %v545 = vsel %vm497, %v540, %v544
      %v547 = vshrl.u32 %v453, 16
      %v549 = vrot.slane %v547, 4
      %v550 = vshll.u32 %v453, 16
      %v552 = vrot.slane %v550, 5
      %v553 = vor.u32 %v549, %v552
      %v554 = vrot.slane %v553, 4
      %v556 = vshll.u32 %v454, 16
      %v558 = vrot.slane %v556, 5
      %v559 = vsel %vm497, %v554, %v558
      %v560 = vshrl.u32 %v454, 16
      %v562 = vrot.slane %v560, 4
      %v563 = vor.u32 %v562, %v558
      %v564 = vrot.slane %v563, 4
      %v566 = vshll.u32 %v455, 16
      %v568 = vrot.slane %v566, 5
      %v569 = vsel %vm497, %v564, %v568
      %v571 = vshrl.u32 %v456, 16
      %v573 = vrot.slane %v571, 4
      %v574 = vshll.u32 %v456, 16
      %v576 = vrot.slane %v574, 5
      %v577 = vor.u32 %v573, %v576
      %v578 = vrot.slane %v577, 4
      %v580 = vshll.u32 %v457, 16
      %v582 = vrot.slane %v580, 5
      %v583 = vsel %vm497, %v578, %v582
      %v584 = vshrl.u32 %v457, 16
      %v586 = vrot.slane %v584, 4
      %v587 = vor.u32 %v586, %v582
      %v588 = vrot.slane %v587, 4
      %v590 = vshll.u32 %v458, 16
      %v592 = vrot.slane %v590, 5
      %v593 = vsel %vm497, %v588, %v592
      %v595 = vshrl.u32 %v459, 16
      %v597 = vrot.slane %v595, 4
      %v598 = vshll.u32 %v459, 16
      %v600 = vrot.slane %v598, 5
      %v601 = vor.u32 %v597, %v600
      %v602 = vrot.slane %v601, 4
      %v604 = vshll.u32 %v460, 16
      %v606 = vrot.slane %v604, 5
      %v607 = vsel %vm497, %v602, %v606
      %v608 = vshrl.u32 %v460, 16
      %v610 = vrot.slane %v608, 4
      %v611 = vor.u32 %v610, %v606
      %v612 = vrot.slane %v611, 4
      %v614 = vshll.u32 %v461, 16
      %v616 = vrot.slane %v614, 5
      %v617 = vsel %vm497, %v612, %v616
      %v619 = vshrl.u32 %v462, 16
      %v621 = vrot.slane %v619, 4
      %v622 = vshll.u32 %v462, 16
      %v624 = vrot.slane %v622, 5
      %v625 = vor.u32 %v621, %v624
      %v626 = vrot.slane %v625, 4
      %v628 = vshll.u32 %v463, 16
      %v630 = vrot.slane %v628, 5
      %v631 = vsel %vm497, %v626, %v630
      %v632 = vshrl.u32 %v463, 16
      %v634 = vrot.slane %v632, 4
      %v635 = vor.u32 %v634, %v630
      %v636 = vrot.slane %v635, 4
      %v638 = vshll.u32 %v464, 16
      %v640 = vrot.slane %v638, 5
      %v641 = vsel %vm497, %v636, %v640
      %v643 = vshrl.u32 %v465, 16
      %v645 = vrot.slane %v643, 4
      %v646 = vshll.u32 %v465, 16
      %v648 = vrot.slane %v646, 5
      %v649 = vor.u32 %v645, %v648
      %v650 = vrot.slane %v649, 4
      %v652 = vshll.u32 %v466, 16
      %v654 = vrot.slane %v652, 5
      %v655 = vsel %vm497, %v650, %v654
      %v656 = vshrl.u32 %v466, 16
      %v658 = vrot.slane %v656, 4
      %v659 = vor.u32 %v658, %v654
      %v660 = vrot.slane %v659, 4
      %v662 = vshll.u32 %v467, 16
      %v664 = vrot.slane %v662, 5
      %v665 = vsel %vm497, %v660, %v664
      %v667 = vshrl.u32 %v468, 16
      %v669 = vrot.slane %v667, 4
      %v670 = vshll.u32 %v468, 16
      %v672 = vrot.slane %v670, 5
      %v673 = vor.u32 %v669, %v672
      %v674 = vrot.slane %v673, 4
      %v676 = vshll.u32 %v469, 16
      %v678 = vrot.slane %v676, 5
      %v679 = vsel %vm497, %v674, %v678
      %v680 = vshrl.u32 %v469, 16
      %v682 = vrot.slane %v680, 4
      %v683 = vor.u32 %v682, %v678
      %v684 = vrot.slane %v683, 4
      %v686 = vshll.u32 %v470, 16
      %v688 = vrot.slane %v686, 5
      %v689 = vsel %vm497, %v684, %v688
      %v691 = vshrl.u32 %v471, 16
      %v693 = vrot.slane %v691, 4
      %v694 = vshll.u32 %v471, 16
      %v696 = vrot.slane %v694, 5
      %v697 = vor.u32 %v693, %v696
      %v698 = vrot.slane %v697, 4
      %v700 = vshll.u32 %v472, 16
      %v702 = vrot.slane %v700, 5
      %v703 = vsel %vm497, %v698, %v702
      %v704 = vshrl.u32 %v472, 16
      %v706 = vrot.slane %v704, 4
      %v707 = vor.u32 %v706, %v702
      %v708 = vrot.slane %v707, 4
      %v710 = vshll.u32 %v473, 16
      %v712 = vrot.slane %v710, 5
      %v713 = vsel %vm497, %v708, %v712
      %v715 = vshrl.u32 %v474, 16
      %v717 = vrot.slane %v715, 4
      %v718 = vshll.u32 %v474, 16
      %v720 = vrot.slane %v718, 5
      %v721 = vor.u32 %v717, %v720
      %v722 = vrot.slane %v721, 4
      %v724 = vshll.u32 %v475, 16
      %v726 = vrot.slane %v724, 5
      %v727 = vsel %vm497, %v722, %v726
      %v728 = vshrl.u32 %v475, 16
      %v730 = vrot.slane %v728, 4
      %v731 = vor.u32 %v730, %v726
      %v732 = vrot.slane %v731, 4
      %v734 = vshll.u32 %v476, 16
      %v736 = vrot.slane %v734, 5
      %v737 = vsel %vm497, %v732, %v736
      %v739 = vshrl.u32 %v477, 16
      %v741 = vrot.slane %v739, 4
      %v742 = vshll.u32 %v477, 16
      %v744 = vrot.slane %v742, 5
      %v745 = vor.u32 %v741, %v744
      %v746 = vrot.slane %v745, 4
      %v748 = vshll.u32 %v478, 16
      %v750 = vrot.slane %v748, 5
      %v751 = vsel %vm497, %v746, %v750
      %v752 = vshrl.u32 %v478, 16
      %v754 = vrot.slane %v752, 4
      %v755 = vor.u32 %v754, %v750
      %v756 = vrot.slane %v755, 4
      %v758 = vshll.u32 %v479, 16
      %v760 = vrot.slane %v758, 5
      %v761 = vsel %vm497, %v756, %v760
      %v763 = vshrl.u32 %v480, 16
      %v765 = vrot.slane %v763, 4
      %v766 = vshll.u32 %v480, 16
      %v768 = vrot.slane %v766, 5
      %v769 = vor.u32 %v765, %v768
      %v770 = vrot.slane %v769, 4
      %v772 = vshll.u32 %v481, 16
      %v774 = vrot.slane %v772, 5
      %v775 = vsel %vm497, %v770, %v774
      %v776 = vshrl.u32 %v481, 16
      %v778 = vrot.slane %v776, 4
      %v779 = vor.u32 %v778, %v774
      %v780 = vrot.slane %v779, 4
      %v782 = vshll.u32 %v482, 16
      %v784 = vrot.slane %v782, 5
      %v785 = vsel %vm497, %v780, %v784
      %v787 = vshrl.u32 %v483, 16
      %v789 = vrot.slane %v787, 4
      %v790 = vshll.u32 %v483, 16
      %v792 = vrot.slane %v790, 5
      %v793 = vor.u32 %v789, %v792
      %v794 = vrot.slane %v793, 4
      %v796 = vshll.u32 %v484, 16
      %v798 = vrot.slane %v796, 5
      %v799 = vsel %vm497, %v794, %v798
      %v800 = vshrl.u32 %v484, 16
      %v802 = vrot.slane %v800, 4
      %v803 = vor.u32 %v802, %v798
      %v804 = vrot.slane %v803, 4
      %v806 = vshll.u32 %v485, 16
      %v808 = vrot.slane %v806, 5
      %v809 = vsel %vm497, %v804, %v808
      %v811 = vshrl.u32 %v486, 16
      %v813 = vrot.slane %v811, 4
      %v814 = vshll.u32 %v486, 16
      %v816 = vrot.slane %v814, 5
      %v817 = vor.u32 %v813, %v816
      %v818 = vrot.slane %v817, 4
      %v820 = vshll.u32 %v487, 16
      %v822 = vrot.slane %v820, 5
      %v823 = vsel %vm497, %v818, %v822
      %v824 = vshrl.u32 %v487, 16
      %v826 = vrot.slane %v824, 4
      %v827 = vor.u32 %v826, %v822
      %v828 = vrot.slane %v827, 4
      %v830 = vshll.u32 %v488, 16
      %v832 = vrot.slane %v830, 5
      %v833 = vsel %vm497, %v828, %v832
      %v835 = vshrl.u32 %v489, 16
      %v837 = vrot.slane %v835, 4
      %v838 = vshll.u32 %v489, 16
      %v840 = vrot.slane %v838, 5
      %v841 = vor.u32 %v837, %v840
      %v842 = vrot.slane %v841, 4
      %v844 = vshll.u32 %v490, 16
      %v846 = vrot.slane %v844, 5
      %v847 = vsel %vm497, %v842, %v846
      %v848 = vshrl.u32 %v490, 16
      %v850 = vrot.slane %v848, 4
      %v851 = vor.u32 %v850, %v846
      %v852 = vrot.slane %v851, 4
      %v854 = vshll.u32 %v491, 16
      %v856 = vrot.slane %v854, 5
      %v857 = vsel %vm497, %v852, %v856
      %v859 = vshrl.u32 %v492, 16
      %v861 = vrot.slane %v859, 4
      %v862 = vshll.u32 %v492, 16
      %v864 = vrot.slane %v862, 5
      %v865 = vor.u32 %v861, %v864
      %v866 = vrot.slane %v865, 4
      %v868 = vshll.u32 %v493, 16
      %v870 = vrot.slane %v868, 5
      %v871 = vsel %vm497, %v866, %v870
      %v872 = vshrl.u32 %v493, 16
      %v874 = vrot.slane %v872, 4
      %v875 = vor.u32 %v874, %v870
      %v876 = vrot.slane %v875, 4
      %v878 = vshll.u32 %v494, 16
      %v880 = vrot.slane %v878, 5
      %v881 = vsel %vm497, %v876, %v880
      %v882 = vunpack.c.l.b16 %v511
      %v883 = vunpack.c.l.b16 %v521
      %v884 = vunpack.c.l.b16 %v535
      %v885 = vunpack.c.l.b16 %v545
      %v886 = vunpack.c.l.b16 %v559
      %v887 = vunpack.c.l.b16 %v569
      %v888 = vunpack.c.l.b16 %v583
      %v889 = vunpack.c.l.b16 %v593
      %v890 = vunpack.c.l.b16 %v607
      %v891 = vunpack.c.l.b16 %v617
      %v892 = vunpack.c.l.b16 %v631
      %v893 = vunpack.c.l.b16 %v641
      %v894 = vunpack.c.l.b16 %v655
      %v895 = vunpack.c.l.b16 %v665
      %v896 = vunpack.c.l.b16 %v679
      %v897 = vunpack.c.l.b16 %v689
      %v898 = vunpack.c.l.b16 %v703
      %v899 = vunpack.c.l.b16 %v713
      %v900 = vunpack.c.l.b16 %v727
      %v901 = vunpack.c.l.b16 %v737
      %v902 = vunpack.c.l.b16 %v751
      %v903 = vunpack.c.l.b16 %v761
      %v904 = vunpack.c.l.b16 %v775
      %v905 = vunpack.c.l.b16 %v785
      %v906 = vunpack.c.l.b16 %v799
      %v907 = vunpack.c.l.b16 %v809
      %v908 = vunpack.c.l.b16 %v823
      %v909 = vunpack.c.l.b16 %v833
      %v910 = vunpack.c.l.b16 %v847
      %v911 = vunpack.c.l.b16 %v857
      %v912 = vunpack.c.l.b16 %v871
      %v913 = vunpack.c.l.b16 %v881
      %v914 = vpack.c.b16 %v883, %v882
      %v915 = vpack.c.b16 %v885, %v884
      %v916 = vpack.c.b16 %v887, %v886
      %v917 = vpack.c.b16 %v889, %v888
      %v918 = vpack.c.b16 %v891, %v890
      %v919 = vpack.c.b16 %v893, %v892
      %v920 = vpack.c.b16 %v895, %v894
      %v921 = vpack.c.b16 %v897, %v896
      %v922 = vpack.c.b16 %v899, %v898
      %v923 = vpack.c.b16 %v901, %v900
      %v924 = vpack.c.b16 %v903, %v902
      %v925 = vpack.c.b16 %v905, %v904
      %v926 = vpack.c.b16 %v907, %v906
      %v927 = vpack.c.b16 %v909, %v908
      %v928 = vpack.c.b16 %v911, %v910
      %v929 = vpack.c.b16 %v913, %v912
      %930 = vrot.lane.b32.xlu0 %v914, 4
      %v931 = vpop.permute.xlu0 %930
      %932 = vrot.lane.b32.xlu0 %v915, 4
      %v933 = vpop.permute.xlu0 %932
      %934 = vrot.lane.b32.xlu0 %v916, 4
      %v935 = vpop.permute.xlu0 %934
      %936 = vrot.lane.b32.xlu0 %v917, 4
      %v937 = vpop.permute.xlu0 %936
      %938 = vrot.lane.b32.xlu0 %v918, 4
      %v939 = vpop.permute.xlu0 %938
      %940 = vrot.lane.b32.xlu0 %v919, 4
      %v941 = vpop.permute.xlu0 %940
      %942 = vrot.lane.b32.xlu0 %v920, 4
      %v943 = vpop.permute.xlu0 %942
      %944 = vrot.lane.b32.xlu0 %v921, 4
      %v945 = vpop.permute.xlu0 %944
      %946 = vrot.lane.b32.xlu0 %v922, 4
      %v947 = vpop.permute.xlu0 %946
      %948 = vrot.lane.b32.xlu0 %v923, 4
      %v949 = vpop.permute.xlu0 %948
      %950 = vrot.lane.b32.xlu0 %v924, 4
      %v951 = vpop.permute.xlu0 %950
      %952 = vrot.lane.b32.xlu0 %v925, 4
      %v953 = vpop.permute.xlu0 %952
      %954 = vrot.lane.b32.xlu0 %v926, 4
      %v955 = vpop.permute.xlu0 %954
      %956 = vrot.lane.b32.xlu0 %v927, 4
      %v957 = vpop.permute.xlu0 %956
      %958 = vrot.lane.b32.xlu0 %v928, 4
      %v959 = vpop.permute.xlu0 %958
      %960 = vrot.lane.b32.xlu0 %v929, 4
      %v961 = vpop.permute.xlu0 %960
      %vm978 = vcmask 64544
      %979 = vst.msk [vmem:[#allocation3] sm:$0xff] %vm978, %v931
      %980 = vst.msk [vmem:[#allocation3 + $0x8] sm:$0xff] %vm978, %v933
      %981 = vst.msk [vmem:[#allocation3 + $0x10] sm:$0xff] %vm978, %v935
      %982 = vst.msk [vmem:[#allocation3 + $0x18] sm:$0xff] %vm978, %v937
      %983 = vst.msk [vmem:[#allocation3 + $0x20] sm:$0xff] %vm978, %v939
      %984 = vst.msk [vmem:[#allocation3 + $0x28] sm:$0xff] %vm978, %v941
      %985 = vst.msk [vmem:[#allocation3 + $0x30] sm:$0xff] %vm978, %v943
      %986 = vst.msk [vmem:[#allocation3 + $0x38] sm:$0xff] %vm978, %v945
      %987 = vst.msk [vmem:[#allocation3 + $0x40] sm:$0xff] %vm978, %v947
      %988 = vst.msk [vmem:[#allocation3 + $0x48] sm:$0xff] %vm978, %v949
      %989 = vst.msk [vmem:[#allocation3 + $0x50] sm:$0xff] %vm978, %v951
      %990 = vst.msk [vmem:[#allocation3 + $0x58] sm:$0xff] %vm978, %v953
      %991 = vst.msk [vmem:[#allocation3 + $0x60] sm:$0xff] %vm978, %v955
      %992 = vst.msk [vmem:[#allocation3 + $0x68] sm:$0xff] %vm978, %v957
      %993 = vst.msk [vmem:[#allocation3 + $0x70] sm:$0xff] %vm978, %v959
      %994 = vst.msk [vmem:[#allocation3 + $0x78] sm:$0xff] %vm978, %v961
      %v995 = vld [vmem:[%s246] sm:$0xe]
      %v996 = vld [vmem:[%s246 + $0x4] sm:$0xf]
      %v997 = vld [vmem:[%s246 + $0x8] sm:$0x1]
      %v998 = vld [vmem:[%s246 + $0xc] sm:$0xe]
      %v999 = vld [vmem:[%s246 + $0x10] sm:$0xf]
      %v1000 = vld [vmem:[%s246 + $0x14] sm:$0x1]
      %v1001 = vld [vmem:[%s246 + $0x18] sm:$0xe]
      %v1002 = vld [vmem:[%s246 + $0x1c] sm:$0xf]
      %v1003 = vld [vmem:[%s246 + $0x20] sm:$0x1]
      %v1004 = vld [vmem:[%s246 + $0x24] sm:$0xe]
      %v1005 = vld [vmem:[%s246 + $0x28] sm:$0xf]
      %v1006 = vld [vmem:[%s246 + $0x2c] sm:$0x1]
      %v1007 = vld [vmem:[%s246 + $0x30] sm:$0xe]
      %v1008 = vld [vmem:[%s246 + $0x34] sm:$0xf]
      %v1009 = vld [vmem:[%s246 + $0x38] sm:$0x1]
      %v1010 = vld [vmem:[%s246 + $0x3c] sm:$0xe]
      %v1011 = vld [vmem:[%s246 + $0x40] sm:$0xf]
      %v1012 = vld [vmem:[%s246 + $0x44] sm:$0x1]
      %v1013 = vld [vmem:[%s246 + $0x48] sm:$0xe]
      %v1014 = vld [vmem:[%s246 + $0x4c] sm:$0xf]
      %v1015 = vld [vmem:[%s246 + $0x50] sm:$0x1]
      %v1016 = vld [vmem:[%s246 + $0x54] sm:$0xe]
      %v1017 = vld [vmem:[%s246 + $0x58] sm:$0xf]
      %v1018 = vld [vmem:[%s246 + $0x5c] sm:$0x1]
      %v1019 = vld [vmem:[%s246 + $0x60] sm:$0xe]
      %v1020 = vld [vmem:[%s246 + $0x64] sm:$0xf]
      %v1021 = vld [vmem:[%s246 + $0x68] sm:$0x1]
      %v1022 = vld [vmem:[%s246 + $0x6c] sm:$0xe]
      %v1023 = vld [vmem:[%s246 + $0x70] sm:$0xf]
      %v1024 = vld [vmem:[%s246 + $0x74] sm:$0x1]
      %v1025 = vld [vmem:[%s246 + $0x78] sm:$0xe]
      %v1026 = vld [vmem:[%s246 + $0x7c] sm:$0xf]
      %v1027 = vld [vmem:[%s246 + $0x80] sm:$0x1]
      %v1028 = vld [vmem:[%s246 + $0x84] sm:$0xe]
      %v1029 = vld [vmem:[%s246 + $0x88] sm:$0xf]
      %v1030 = vld [vmem:[%s246 + $0x8c] sm:$0x1]
      %v1031 = vld [vmem:[%s246 + $0x90] sm:$0xe]
      %v1032 = vld [vmem:[%s246 + $0x94] sm:$0xf]
      %v1033 = vld [vmem:[%s246 + $0x98] sm:$0x1]
      %v1034 = vld [vmem:[%s246 + $0x9c] sm:$0xe]
      %v1035 = vld [vmem:[%s246 + $0xa0] sm:$0xf]
      %v1036 = vld [vmem:[%s246 + $0xa4] sm:$0x1]
      %v1037 = vld [vmem:[%s246 + $0xa8] sm:$0xe]
      %v1038 = vld [vmem:[%s246 + $0xac] sm:$0xf]
      %v1039 = vld [vmem:[%s246 + $0xb0] sm:$0x1]
      %v1040 = vld [vmem:[%s246 + $0xb4] sm:$0xe]
      %v1041 = vld [vmem:[%s246 + $0xb8] sm:$0xf]
      %v1042 = vld [vmem:[%s246 + $0xbc] sm:$0x1]
      %vm1091 = vcmask 1042432
      %vm1092 = vcmask 1046532
      %vm1093 = vmor %vm1091, %vm1092
      %v1094 = vrot.slane %v995, 5
      %v1095 = vrot.slane %v1094, 4
      %v1096 = vrot.slane %v996, 5
      %v1097 = vsel %vm1093, %v1095, %v1096
      %v1098 = vrot.slane %v1096, 4
      %v1099 = vrot.slane %v997, 5
      %v1100 = vsel %vm1093, %v1098, %v1099
      %v1101 = vrot.slane %v998, 5
      %v1102 = vrot.slane %v1101, 4
      %v1103 = vrot.slane %v999, 5
      %v1104 = vsel %vm1093, %v1102, %v1103
      %v1105 = vrot.slane %v1103, 4
      %v1106 = vrot.slane %v1000, 5
      %v1107 = vsel %vm1093, %v1105, %v1106
      %v1108 = vrot.slane %v1001, 5
      %v1109 = vrot.slane %v1108, 4
      %v1110 = vrot.slane %v1002, 5
      %v1111 = vsel %vm1093, %v1109, %v1110
      %v1112 = vrot.slane %v1110, 4
      %v1113 = vrot.slane %v1003, 5
      %v1114 = vsel %vm1093, %v1112, %v1113
      %v1115 = vrot.slane %v1004, 5
      %v1116 = vrot.slane %v1115, 4
      %v1117 = vrot.slane %v1005, 5
      %v1118 = vsel %vm1093, %v1116, %v1117
      %v1119 = vrot.slane %v1117, 4
      %v1120 = vrot.slane %v1006, 5
      %v1121 = vsel %vm1093, %v1119, %v1120
      %v1122 = vrot.slane %v1007, 5
      %v1123 = vrot.slane %v1122, 4
      %v1124 = vrot.slane %v1008, 5
      %v1125 = vsel %vm1093, %v1123, %v1124
      %v1126 = vrot.slane %v1124, 4
      %v1127 = vrot.slane %v1009, 5
      %v1128 = vsel %vm1093, %v1126, %v1127
      %v1129 = vrot.slane %v1010, 5
      %v1130 = vrot.slane %v1129, 4
      %v1131 = vrot.slane %v1011, 5
      %v1132 = vsel %vm1093, %v1130, %v1131
      %v1133 = vrot.slane %v1131, 4
      %v1134 = vrot.slane %v1012, 5
      %v1135 = vsel %vm1093, %v1133, %v1134
      %v1136 = vrot.slane %v1013, 5
      %v1137 = vrot.slane %v1136, 4
      %v1138 = vrot.slane %v1014, 5
      %v1139 = vsel %vm1093, %v1137, %v1138
      %v1140 = vrot.slane %v1138, 4
      %v1141 = vrot.slane %v1015, 5
      %v1142 = vsel %vm1093, %v1140, %v1141
      %v1143 = vrot.slane %v1016, 5
      %v1144 = vrot.slane %v1143, 4
      %v1145 = vrot.slane %v1017, 5
      %v1146 = vsel %vm1093, %v1144, %v1145
      %v1147 = vrot.slane %v1145, 4
      %v1148 = vrot.slane %v1018, 5
      %v1149 = vsel %vm1093, %v1147, %v1148
      %v1150 = vrot.slane %v1019, 5
      %v1151 = vrot.slane %v1150, 4
      %v1152 = vrot.slane %v1020, 5
      %v1153 = vsel %vm1093, %v1151, %v1152
      %v1154 = vrot.slane %v1152, 4
      %v1155 = vrot.slane %v1021, 5
      %v1156 = vsel %vm1093, %v1154, %v1155
      %v1157 = vrot.slane %v1022, 5
      %v1158 = vrot.slane %v1157, 4
      %v1159 = vrot.slane %v1023, 5
      %v1160 = vsel %vm1093, %v1158, %v1159
      %v1161 = vrot.slane %v1159, 4
      %v1162 = vrot.slane %v1024, 5
      %v1163 = vsel %vm1093, %v1161, %v1162
      %v1164 = vrot.slane %v1025, 5
      %v1165 = vrot.slane %v1164, 4
      %v1166 = vrot.slane %v1026, 5
      %v1167 = vsel %vm1093, %v1165, %v1166
      %v1168 = vrot.slane %v1166, 4
      %v1169 = vrot.slane %v1027, 5
      %v1170 = vsel %vm1093, %v1168, %v1169
      %v1171 = vrot.slane %v1028, 5
      %v1172 = vrot.slane %v1171, 4
      %v1173 = vrot.slane %v1029, 5
      %v1174 = vsel %vm1093, %v1172, %v1173
      %v1175 = vrot.slane %v1173, 4
      %v1176 = vrot.slane %v1030, 5
      %v1177 = vsel %vm1093, %v1175, %v1176
      %v1178 = vrot.slane %v1031, 5
      %v1179 = vrot.slane %v1178, 4
      %v1180 = vrot.slane %v1032, 5
      %v1181 = vsel %vm1093, %v1179, %v1180
      %v1182 = vrot.slane %v1180, 4
      %v1183 = vrot.slane %v1033, 5
      %v1184 = vsel %vm1093, %v1182, %v1183
      %v1185 = vrot.slane %v1034, 5
      %v1186 = vrot.slane %v1185, 4
      %v1187 = vrot.slane %v1035, 5
      %v1188 = vsel %vm1093, %v1186, %v1187
      %v1189 = vrot.slane %v1187, 4
      %v1190 = vrot.slane %v1036, 5
      %v1191 = vsel %vm1093, %v1189, %v1190
      %v1192 = vrot.slane %v1037, 5
      %v1193 = vrot.slane %v1192, 4
      %v1194 = vrot.slane %v1038, 5
      %v1195 = vsel %vm1093, %v1193, %v1194
      %v1196 = vrot.slane %v1194, 4
      %v1197 = vrot.slane %v1039, 5
      %v1198 = vsel %vm1093, %v1196, %v1197
      %v1199 = vrot.slane %v1040, 5
      %v1200 = vrot.slane %v1199, 4
      %v1201 = vrot.slane %v1041, 5
      %v1202 = vsel %vm1093, %v1200, %v1201
      %v1203 = vrot.slane %v1201, 4
      %v1204 = vrot.slane %v1042, 5
      %v1205 = vsel %vm1093, %v1203, %v1204
      %v1206 = vunpack.c.l.b16 %v1097
      %v1207 = vunpack.c.l.b16 %v1100
      %v1208 = vunpack.c.l.b16 %v1104
      %v1209 = vunpack.c.l.b16 %v1107
      %v1210 = vunpack.c.l.b16 %v1111
      %v1211 = vunpack.c.l.b16 %v1114
      %v1212 = vunpack.c.l.b16 %v1118
      %v1213 = vunpack.c.l.b16 %v1121
      %v1214 = vunpack.c.l.b16 %v1125
      %v1215 = vunpack.c.l.b16 %v1128
      %v1216 = vunpack.c.l.b16 %v1132
      %v1217 = vunpack.c.l.b16 %v1135
      %v1218 = vunpack.c.l.b16 %v1139
      %v1219 = vunpack.c.l.b16 %v1142
      %v1220 = vunpack.c.l.b16 %v1146
      %v1221 = vunpack.c.l.b16 %v1149
      %v1222 = vunpack.c.l.b16 %v1153
      %v1223 = vunpack.c.l.b16 %v1156
      %v1224 = vunpack.c.l.b16 %v1160
      %v1225 = vunpack.c.l.b16 %v1163
      %v1226 = vunpack.c.l.b16 %v1167
      %v1227 = vunpack.c.l.b16 %v1170
      %v1228 = vunpack.c.l.b16 %v1174
      %v1229 = vunpack.c.l.b16 %v1177
      %v1230 = vunpack.c.l.b16 %v1181
      %v1231 = vunpack.c.l.b16 %v1184
      %v1232 = vunpack.c.l.b16 %v1188
      %v1233 = vunpack.c.l.b16 %v1191
      %v1234 = vunpack.c.l.b16 %v1195
      %v1235 = vunpack.c.l.b16 %v1198
      %v1236 = vunpack.c.l.b16 %v1202
      %v1237 = vunpack.c.l.b16 %v1205
      %v1238 = vpack.c.b16 %v1207, %v1206
      %v1239 = vpack.c.b16 %v1209, %v1208
      %v1240 = vpack.c.b16 %v1211, %v1210
      %v1241 = vpack.c.b16 %v1213, %v1212
      %v1242 = vpack.c.b16 %v1215, %v1214
      %v1243 = vpack.c.b16 %v1217, %v1216
      %v1244 = vpack.c.b16 %v1219, %v1218
      %v1245 = vpack.c.b16 %v1221, %v1220
      %v1246 = vpack.c.b16 %v1223, %v1222
      %v1247 = vpack.c.b16 %v1225, %v1224
      %v1248 = vpack.c.b16 %v1227, %v1226
      %v1249 = vpack.c.b16 %v1229, %v1228
      %v1250 = vpack.c.b16 %v1231, %v1230
      %v1251 = vpack.c.b16 %v1233, %v1232
      %v1252 = vpack.c.b16 %v1235, %v1234
      %v1253 = vpack.c.b16 %v1237, %v1236
      %1254 = vrot.lane.b32.xlu0 %v1238, 8
      %v1255 = vpop.permute.xlu0 %1254
      %1256 = vrot.lane.b32.xlu0 %v1239, 8
      %v1257 = vpop.permute.xlu0 %1256
      %1258 = vrot.lane.b32.xlu0 %v1240, 8
      %v1259 = vpop.permute.xlu0 %1258
      %1260 = vrot.lane.b32.xlu0 %v1241, 8
      %v1261 = vpop.permute.xlu0 %1260
      %1262 = vrot.lane.b32.xlu0 %v1242, 8
      %v1263 = vpop.permute.xlu0 %1262
      %1264 = vrot.lane.b32.xlu0 %v1243, 8
      %v1265 = vpop.permute.xlu0 %1264
      %1266 = vrot.lane.b32.xlu0 %v1244, 8
      %v1267 = vpop.permute.xlu0 %1266
      %1268 = vrot.lane.b32.xlu0 %v1245, 8
      %v1269 = vpop.permute.xlu0 %1268
      %1270 = vrot.lane.b32.xlu0 %v1246, 8
      %v1271 = vpop.permute.xlu0 %1270
      %1272 = vrot.lane.b32.xlu0 %v1247, 8
      %v1273 = vpop.permute.xlu0 %1272
      %1274 = vrot.lane.b32.xlu0 %v1248, 8
      %v1275 = vpop.permute.xlu0 %1274
      %1276 = vrot.lane.b32.xlu0 %v1249, 8
      %v1277 = vpop.permute.xlu0 %1276
      %1278 = vrot.lane.b32.xlu0 %v1250, 8
      %v1279 = vpop.permute.xlu0 %1278
      %1280 = vrot.lane.b32.xlu0 %v1251, 8
      %v1281 = vpop.permute.xlu0 %1280
      %1282 = vrot.lane.b32.xlu0 %v1252, 8
      %v1283 = vpop.permute.xlu0 %1282
      %1284 = vrot.lane.b32.xlu0 %v1253, 8
      %v1285 = vpop.permute.xlu0 %1284
      %vm1302 = vcmask 97344
      %1303 = vst.msk [vmem:[#allocation3] sm:$0xff] %vm1302, %v1255
      %1304 = vst.msk [vmem:[#allocation3 + $0x8] sm:$0xff] %vm1302, %v1257
      %1305 = vst.msk [vmem:[#allocation3 + $0x10] sm:$0xff] %vm1302, %v1259
      %1306 = vst.msk [vmem:[#allocation3 + $0x18] sm:$0xff] %vm1302, %v1261
      %1307 = vst.msk [vmem:[#allocation3 + $0x20] sm:$0xff] %vm1302, %v1263
      %1308 = vst.msk [vmem:[#allocation3 + $0x28] sm:$0xff] %vm1302, %v1265
      %1309 = vst.msk [vmem:[#allocation3 + $0x30] sm:$0xff] %vm1302, %v1267
      %1310 = vst.msk [vmem:[#allocation3 + $0x38] sm:$0xff] %vm1302, %v1269
      %1311 = vst.msk [vmem:[#allocation3 + $0x40] sm:$0xff] %vm1302, %v1271
      %1312 = vst.msk [vmem:[#allocation3 + $0x48] sm:$0xff] %vm1302, %v1273
      %1313 = vst.msk [vmem:[#allocation3 + $0x50] sm:$0xff] %vm1302, %v1275
      %1314 = vst.msk [vmem:[#allocation3 + $0x58] sm:$0xff] %vm1302, %v1277
      %1315 = vst.msk [vmem:[#allocation3 + $0x60] sm:$0xff] %vm1302, %v1279
      %1316 = vst.msk [vmem:[#allocation3 + $0x68] sm:$0xff] %vm1302, %v1281
      %1317 = vst.msk [vmem:[#allocation3 + $0x70] sm:$0xff] %vm1302, %v1283
      %1318 = vst.msk [vmem:[#allocation3 + $0x78] sm:$0xff] %vm1302, %v1285
      %v1319 = vld [vmem:[%s253] sm:$0xf]
      %v1320 = vld [vmem:[%s253 + $0x4] sm:$0xf]
      %v1321 = vld [vmem:[%s253 + $0xc] sm:$0xf]
      %v1322 = vld [vmem:[%s253 + $0x10] sm:$0xf]
      %v1323 = vld [vmem:[%s253 + $0x18] sm:$0xf]
      %v1324 = vld [vmem:[%s253 + $0x1c] sm:$0xf]
      %v1325 = vld [vmem:[%s253 + $0x24] sm:$0xf]
      %v1326 = vld [vmem:[%s253 + $0x28] sm:$0xf]
      %v1327 = vld [vmem:[%s253 + $0x30] sm:$0xf]
      %v1328 = vld [vmem:[%s253 + $0x34] sm:$0xf]
      %v1329 = vld [vmem:[%s253 + $0x3c] sm:$0xf]
      %v1330 = vld [vmem:[%s253 + $0x40] sm:$0xf]
      %v1331 = vld [vmem:[%s253 + $0x48] sm:$0xf]
      %v1332 = vld [vmem:[%s253 + $0x4c] sm:$0xf]
      %v1333 = vld [vmem:[%s253 + $0x54] sm:$0xf]
      %v1334 = vld [vmem:[%s253 + $0x58] sm:$0xf]
      %v1335 = vld [vmem:[%s253 + $0x60] sm:$0xf]
      %v1336 = vld [vmem:[%s253 + $0x64] sm:$0xf]
      %v1337 = vld [vmem:[%s253 + $0x6c] sm:$0xf]
      %v1338 = vld [vmem:[%s253 + $0x70] sm:$0xf]
      %v1339 = vld [vmem:[%s253 + $0x78] sm:$0xf]
      %v1340 = vld [vmem:[%s253 + $0x7c] sm:$0xf]
      %v1341 = vld [vmem:[%s253 + $0x84] sm:$0xf]
      %v1342 = vld [vmem:[%s253 + $0x88] sm:$0xf]
      %v1343 = vld [vmem:[%s253 + $0x90] sm:$0xf]
      %v1344 = vld [vmem:[%s253 + $0x94] sm:$0xf]
      %v1345 = vld [vmem:[%s253 + $0x9c] sm:$0xf]
      %v1346 = vld [vmem:[%s253 + $0xa0] sm:$0xf]
      %v1347 = vld [vmem:[%s253 + $0xa8] sm:$0xf]
      %v1348 = vld [vmem:[%s253 + $0xac] sm:$0xf]
      %v1349 = vld [vmem:[%s253 + $0xb4] sm:$0xf]
      %v1350 = vld [vmem:[%s253 + $0xb8] sm:$0xf]
      %v1383 = vunpack.c.l.b16 %v1319
      %v1384 = vunpack.c.l.b16 %v1320
      %v1385 = vunpack.c.l.b16 %v1321
      %v1386 = vunpack.c.l.b16 %v1322
      %v1387 = vunpack.c.l.b16 %v1323
      %v1388 = vunpack.c.l.b16 %v1324
      %v1389 = vunpack.c.l.b16 %v1325
      %v1390 = vunpack.c.l.b16 %v1326
      %v1391 = vunpack.c.l.b16 %v1327
      %v1392 = vunpack.c.l.b16 %v1328
      %v1393 = vunpack.c.l.b16 %v1329
      %v1394 = vunpack.c.l.b16 %v1330
      %v1395 = vunpack.c.l.b16 %v1331
      %v1396 = vunpack.c.l.b16 %v1332
      %v1397 = vunpack.c.l.b16 %v1333
      %v1398 = vunpack.c.l.b16 %v1334
      %v1399 = vunpack.c.l.b16 %v1335
      %v1400 = vunpack.c.l.b16 %v1336
      %v1401 = vunpack.c.l.b16 %v1337
      %v1402 = vunpack.c.l.b16 %v1338
      %v1403 = vunpack.c.l.b16 %v1339
      %v1404 = vunpack.c.l.b16 %v1340
      %v1405 = vunpack.c.l.b16 %v1341
      %v1406 = vunpack.c.l.b16 %v1342
      %v1407 = vunpack.c.l.b16 %v1343
      %v1408 = vunpack.c.l.b16 %v1344
      %v1409 = vunpack.c.l.b16 %v1345
      %v1410 = vunpack.c.l.b16 %v1346
      %v1411 = vunpack.c.l.b16 %v1347
      %v1412 = vunpack.c.l.b16 %v1348
      %v1413 = vunpack.c.l.b16 %v1349
      %v1414 = vunpack.c.l.b16 %v1350
      %v1415 = vpack.c.b16 %v1384, %v1383
      %v1416 = vpack.c.b16 %v1386, %v1385
      %v1417 = vpack.c.b16 %v1388, %v1387
      %v1418 = vpack.c.b16 %v1390, %v1389
      %v1419 = vpack.c.b16 %v1392, %v1391
      %v1420 = vpack.c.b16 %v1394, %v1393
      %v1421 = vpack.c.b16 %v1396, %v1395
      %v1422 = vpack.c.b16 %v1398, %v1397
      %v1423 = vpack.c.b16 %v1400, %v1399
      %v1424 = vpack.c.b16 %v1402, %v1401
      %v1425 = vpack.c.b16 %v1404, %v1403
      %v1426 = vpack.c.b16 %v1406, %v1405
      %v1427 = vpack.c.b16 %v1408, %v1407
      %v1428 = vpack.c.b16 %v1410, %v1409
      %v1429 = vpack.c.b16 %v1412, %v1411
      %v1430 = vpack.c.b16 %v1414, %v1413
      %1431 = vrot.lane.b32.xlu0 %v1415, 12
      %v1432 = vpop.permute.xlu0 %1431
      %1433 = vrot.lane.b32.xlu0 %v1416, 12
      %v1434 = vpop.permute.xlu0 %1433
      %1435 = vrot.lane.b32.xlu0 %v1417, 12
      %v1436 = vpop.permute.xlu0 %1435
      %1437 = vrot.lane.b32.xlu0 %v1418, 12
      %v1438 = vpop.permute.xlu0 %1437
      %1439 = vrot.lane.b32.xlu0 %v1419, 12
      %v1440 = vpop.permute.xlu0 %1439
      %1441 = vrot.lane.b32.xlu0 %v1420, 12
      %v1442 = vpop.permute.xlu0 %1441
      %1443 = vrot.lane.b32.xlu0 %v1421, 12
      %v1444 = vpop.permute.xlu0 %1443
      %1445 = vrot.lane.b32.xlu0 %v1422, 12
      %v1446 = vpop.permute.xlu0 %1445
      %1447 = vrot.lane.b32.xlu0 %v1423, 12
      %v1448 = vpop.permute.xlu0 %1447
      %1449 = vrot.lane.b32.xlu0 %v1424, 12
      %v1450 = vpop.permute.xlu0 %1449
      %1451 = vrot.lane.b32.xlu0 %v1425, 12
      %v1452 = vpop.permute.xlu0 %1451
      %1453 = vrot.lane.b32.xlu0 %v1426, 12
      %v1454 = vpop.permute.xlu0 %1453
      %1455 = vrot.lane.b32.xlu0 %v1427, 12
      %v1456 = vpop.permute.xlu0 %1455
      %1457 = vrot.lane.b32.xlu0 %v1428, 12
      %v1458 = vpop.permute.xlu0 %1457
      %1459 = vrot.lane.b32.xlu0 %v1429, 12
      %v1460 = vpop.permute.xlu0 %1459
      %1461 = vrot.lane.b32.xlu0 %v1430, 12
      %v1462 = vpop.permute.xlu0 %1461
      %vm1479 = vcmask 130144
      %1480 = vst.msk [vmem:[#allocation3] sm:$0xff] %vm1479, %v1432
      %1481 = vst.msk [vmem:[#allocation3 + $0x8] sm:$0xff] %vm1479, %v1434
      %1482 = vst.msk [vmem:[#allocation3 + $0x10] sm:$0xff] %vm1479, %v1436
      %1483 = vst.msk [vmem:[#allocation3 + $0x18] sm:$0xff] %vm1479, %v1438
      %1484 = vst.msk [vmem:[#allocation3 + $0x20] sm:$0xff] %vm1479, %v1440
      %1485 = vst.msk [vmem:[#allocation3 + $0x28] sm:$0xff] %vm1479, %v1442
      %1486 = vst.msk [vmem:[#allocation3 + $0x30] sm:$0xff] %vm1479, %v1444
      %1487 = vst.msk [vmem:[#allocation3 + $0x38] sm:$0xff] %vm1479, %v1446
      %1488 = vst.msk [vmem:[#allocation3 + $0x40] sm:$0xff] %vm1479, %v1448
      %1489 = vst.msk [vmem:[#allocation3 + $0x48] sm:$0xff] %vm1479, %v1450
      %1490 = vst.msk [vmem:[#allocation3 + $0x50] sm:$0xff] %vm1479, %v1452
      %1491 = vst.msk [vmem:[#allocation3 + $0x58] sm:$0xff] %vm1479, %v1454
      %1492 = vst.msk [vmem:[#allocation3 + $0x60] sm:$0xff] %vm1479, %v1456
      %1493 = vst.msk [vmem:[#allocation3 + $0x68] sm:$0xff] %vm1479, %v1458
      %1494 = vst.msk [vmem:[#allocation3 + $0x70] sm:$0xff] %vm1479, %v1460
      %1495 = vst.msk [vmem:[#allocation3 + $0x78] sm:$0xff] %vm1479, %v1462
      %v1496 = vld [vmem:[%s253] sm:$0xf]
      %v1497 = vld [vmem:[%s253 + $0x4] sm:$0xf]
      %v1498 = vld [vmem:[%s253 + $0x8] sm:$0x1]
      %v1499 = vld [vmem:[%s253 + $0xc] sm:$0xf]
      %v1500 = vld [vmem:[%s253 + $0x10] sm:$0xf]
      %v1501 = vld [vmem:[%s253 + $0x14] sm:$0x1]
      %v1502 = vld [vmem:[%s253 + $0x18] sm:$0xf]
      %v1503 = vld [vmem:[%s253 + $0x1c] sm:$0xf]
      %v1504 = vld [vmem:[%s253 + $0x20] sm:$0x1]
      %v1505 = vld [vmem:[%s253 + $0x24] sm:$0xf]
      %v1506 = vld [vmem:[%s253 + $0x28] sm:$0xf]
      %v1507 = vld [vmem:[%s253 + $0x2c] sm:$0x1]
      %v1508 = vld [vmem:[%s253 + $0x30] sm:$0xf]
      %v1509 = vld [vmem:[%s253 + $0x34] sm:$0xf]
      %v1510 = vld [vmem:[%s253 + $0x38] sm:$0x1]
      %v1511 = vld [vmem:[%s253 + $0x3c] sm:$0xf]
      %v1512 = vld [vmem:[%s253 + $0x40] sm:$0xf]
      %v1513 = vld [vmem:[%s253 + $0x44] sm:$0x1]
      %v1514 = vld [vmem:[%s253 + $0x48] sm:$0xf]
      %v1515 = vld [vmem:[%s253 + $0x4c] sm:$0xf]
      %v1516 = vld [vmem:[%s253 + $0x50] sm:$0x1]
      %v1517 = vld [vmem:[%s253 + $0x54] sm:$0xf]
      %v1518 = vld [vmem:[%s253 + $0x58] sm:$0xf]
      %v1519 = vld [vmem:[%s253 + $0x5c] sm:$0x1]
      %v1520 = vld [vmem:[%s253 + $0x60] sm:$0xf]
      %v1521 = vld [vmem:[%s253 + $0x64] sm:$0xf]
      %v1522 = vld [vmem:[%s253 + $0x68] sm:$0x1]
      %v1523 = vld [vmem:[%s253 + $0x6c] sm:$0xf]
      %v1524 = vld [vmem:[%s253 + $0x70] sm:$0xf]
      %v1525 = vld [vmem:[%s253 + $0x74] sm:$0x1]
      %v1526 = vld [vmem:[%s253 + $0x78] sm:$0xf]
      %v1527 = vld [vmem:[%s253 + $0x7c] sm:$0xf]
      %v1528 = vld [vmem:[%s253 + $0x80] sm:$0x1]
      %v1529 = vld [vmem:[%s253 + $0x84] sm:$0xf]
      %v1530 = vld [vmem:[%s253 + $0x88] sm:$0xf]
      %v1531 = vld [vmem:[%s253 + $0x8c] sm:$0x1]
      %v1532 = vld [vmem:[%s253 + $0x90] sm:$0xf]
      %v1533 = vld [vmem:[%s253 + $0x94] sm:$0xf]
      %v1534 = vld [vmem:[%s253 + $0x98] sm:$0x1]
      %v1535 = vld [vmem:[%s253 + $0x9c] sm:$0xf]
      %v1536 = vld [vmem:[%s253 + $0xa0] sm:$0xf]
      %v1537 = vld [vmem:[%s253 + $0xa4] sm:$0x1]
      %v1538 = vld [vmem:[%s253 + $0xa8] sm:$0xf]
      %v1539 = vld [vmem:[%s253 + $0xac] sm:$0xf]
      %v1540 = vld [vmem:[%s253 + $0xb0] sm:$0x1]
      %v1541 = vld [vmem:[%s253 + $0xb4] sm:$0xf]
      %v1542 = vld [vmem:[%s253 + $0xb8] sm:$0xf]
      %v1543 = vld [vmem:[%s253 + $0xbc] sm:$0x1]
      %v1545 = vshrl.u32 %v1496, 16
      %v1547 = vrot.slane %v1545, 4
      %v1548 = vshll.u32 %v1496, 16
      %v1550 = vrot.slane %v1548, 5
      %v1551 = vor.u32 %v1547, %v1550
      %v1552 = vrot.slane %v1551, 4
      %v1554 = vshll.u32 %v1497, 16
      %v1556 = vrot.slane %v1554, 5
      %v1557 = vsel %vm497, %v1552, %v1556
      %v1558 = vshrl.u32 %v1497, 16
      %v1560 = vrot.slane %v1558, 4
      %v1561 = vor.u32 %v1560, %v1556
      %v1562 = vrot.slane %v1561, 4
      %v1564 = vshll.u32 %v1498, 16
      %v1566 = vrot.slane %v1564, 5
      %v1567 = vsel %vm497, %v1562, %v1566
      %v1569 = vshrl.u32 %v1499, 16
      %v1571 = vrot.slane %v1569, 4
      %v1572 = vshll.u32 %v1499, 16
      %v1574 = vrot.slane %v1572, 5
      %v1575 = vor.u32 %v1571, %v1574
      %v1576 = vrot.slane %v1575, 4
      %v1578 = vshll.u32 %v1500, 16
      %v1580 = vrot.slane %v1578, 5
      %v1581 = vsel %vm497, %v1576, %v1580
      %v1582 = vshrl.u32 %v1500, 16
      %v1584 = vrot.slane %v1582, 4
      %v1585 = vor.u32 %v1584, %v1580
      %v1586 = vrot.slane %v1585, 4
      %v1588 = vshll.u32 %v1501, 16
      %v1590 = vrot.slane %v1588, 5
      %v1591 = vsel %vm497, %v1586, %v1590
      %v1593 = vshrl.u32 %v1502, 16
      %v1595 = vrot.slane %v1593, 4
      %v1596 = vshll.u32 %v1502, 16
      %v1598 = vrot.slane %v1596, 5
      %v1599 = vor.u32 %v1595, %v1598
      %v1600 = vrot.slane %v1599, 4
      %v1602 = vshll.u32 %v1503, 16
      %v1604 = vrot.slane %v1602, 5
      %v1605 = vsel %vm497, %v1600, %v1604
      %v1606 = vshrl.u32 %v1503, 16
      %v1608 = vrot.slane %v1606, 4
      %v1609 = vor.u32 %v1608, %v1604
      %v1610 = vrot.slane %v1609, 4
      %v1612 = vshll.u32 %v1504, 16
      %v1614 = vrot.slane %v1612, 5
      %v1615 = vsel %vm497, %v1610, %v1614
      %v1617 = vshrl.u32 %v1505, 16
      %v1619 = vrot.slane %v1617, 4
      %v1620 = vshll.u32 %v1505, 16
      %v1622 = vrot.slane %v1620, 5
      %v1623 = vor.u32 %v1619, %v1622
      %v1624 = vrot.slane %v1623, 4
      %v1626 = vshll.u32 %v1506, 16
      %v1628 = vrot.slane %v1626, 5
      %v1629 = vsel %vm497, %v1624, %v1628
      %v1630 = vshrl.u32 %v1506, 16
      %v1632 = vrot.slane %v1630, 4
      %v1633 = vor.u32 %v1632, %v1628
      %v1634 = vrot.slane %v1633, 4
      %v1636 = vshll.u32 %v1507, 16
      %v1638 = vrot.slane %v1636, 5
      %v1639 = vsel %vm497, %v1634, %v1638
      %v1641 = vshrl.u32 %v1508, 16
      %v1643 = vrot.slane %v1641, 4
      %v1644 = vshll.u32 %v1508, 16
      %v1646 = vrot.slane %v1644, 5
      %v1647 = vor.u32 %v1643, %v1646
      %v1648 = vrot.slane %v1647, 4
      %v1650 = vshll.u32 %v1509, 16
      %v1652 = vrot.slane %v1650, 5
      %v1653 = vsel %vm497, %v1648, %v1652
      %v1654 = vshrl.u32 %v1509, 16
      %v1656 = vrot.slane %v1654, 4
      %v1657 = vor.u32 %v1656, %v1652
      %v1658 = vrot.slane %v1657, 4
      %v1660 = vshll.u32 %v1510, 16
      %v1662 = vrot.slane %v1660, 5
      %v1663 = vsel %vm497, %v1658, %v1662
      %v1665 = vshrl.u32 %v1511, 16
      %v1667 = vrot.slane %v1665, 4
      %v1668 = vshll.u32 %v1511, 16
      %v1670 = vrot.slane %v1668, 5
      %v1671 = vor.u32 %v1667, %v1670
      %v1672 = vrot.slane %v1671, 4
      %v1674 = vshll.u32 %v1512, 16
      %v1676 = vrot.slane %v1674, 5
      %v1677 = vsel %vm497, %v1672, %v1676
      %v1678 = vshrl.u32 %v1512, 16
      %v1680 = vrot.slane %v1678, 4
      %v1681 = vor.u32 %v1680, %v1676
      %v1682 = vrot.slane %v1681, 4
      %v1684 = vshll.u32 %v1513, 16
      %v1686 = vrot.slane %v1684, 5
      %v1687 = vsel %vm497, %v1682, %v1686
      %v1689 = vshrl.u32 %v1514, 16
      %v1691 = vrot.slane %v1689, 4
      %v1692 = vshll.u32 %v1514, 16
      %v1694 = vrot.slane %v1692, 5
      %v1695 = vor.u32 %v1691, %v1694
      %v1696 = vrot.slane %v1695, 4
      %v1698 = vshll.u32 %v1515, 16
      %v1700 = vrot.slane %v1698, 5
      %v1701 = vsel %vm497, %v1696, %v1700
      %v1702 = vshrl.u32 %v1515, 16
      %v1704 = vrot.slane %v1702, 4
      %v1705 = vor.u32 %v1704, %v1700
      %v1706 = vrot.slane %v1705, 4
      %v1708 = vshll.u32 %v1516, 16
      %v1710 = vrot.slane %v1708, 5
      %v1711 = vsel %vm497, %v1706, %v1710
      %v1713 = vshrl.u32 %v1517, 16
      %v1715 = vrot.slane %v1713, 4
      %v1716 = vshll.u32 %v1517, 16
      %v1718 = vrot.slane %v1716, 5
      %v1719 = vor.u32 %v1715, %v1718
      %v1720 = vrot.slane %v1719, 4
      %v1722 = vshll.u32 %v1518, 16
      %v1724 = vrot.slane %v1722, 5
      %v1725 = vsel %vm497, %v1720, %v1724
      %v1726 = vshrl.u32 %v1518, 16
      %v1728 = vrot.slane %v1726, 4
      %v1729 = vor.u32 %v1728, %v1724
      %v1730 = vrot.slane %v1729, 4
      %v1732 = vshll.u32 %v1519, 16
      %v1734 = vrot.slane %v1732, 5
      %v1735 = vsel %vm497, %v1730, %v1734
      %v1737 = vshrl.u32 %v1520, 16
      %v1739 = vrot.slane %v1737, 4
      %v1740 = vshll.u32 %v1520, 16
      %v1742 = vrot.slane %v1740, 5
      %v1743 = vor.u32 %v1739, %v1742
      %v1744 = vrot.slane %v1743, 4
      %v1746 = vshll.u32 %v1521, 16
      %v1748 = vrot.slane %v1746, 5
      %v1749 = vsel %vm497, %v1744, %v1748
      %v1750 = vshrl.u32 %v1521, 16
      %v1752 = vrot.slane %v1750, 4
      %v1753 = vor.u32 %v1752, %v1748
      %v1754 = vrot.slane %v1753, 4
      %v1756 = vshll.u32 %v1522, 16
      %v1758 = vrot.slane %v1756, 5
      %v1759 = vsel %vm497, %v1754, %v1758
      %v1761 = vshrl.u32 %v1523, 16
      %v1763 = vrot.slane %v1761, 4
      %v1764 = vshll.u32 %v1523, 16
      %v1766 = vrot.slane %v1764, 5
      %v1767 = vor.u32 %v1763, %v1766
      %v1768 = vrot.slane %v1767, 4
      %v1770 = vshll.u32 %v1524, 16
      %v1772 = vrot.slane %v1770, 5
      %v1773 = vsel %vm497, %v1768, %v1772
      %v1774 = vshrl.u32 %v1524, 16
      %v1776 = vrot.slane %v1774, 4
      %v1777 = vor.u32 %v1776, %v1772
      %v1778 = vrot.slane %v1777, 4
      %v1780 = vshll.u32 %v1525, 16
      %v1782 = vrot.slane %v1780, 5
      %v1783 = vsel %vm497, %v1778, %v1782
      %v1785 = vshrl.u32 %v1526, 16
      %v1787 = vrot.slane %v1785, 4
      %v1788 = vshll.u32 %v1526, 16
      %v1790 = vrot.slane %v1788, 5
      %v1791 = vor.u32 %v1787, %v1790
      %v1792 = vrot.slane %v1791, 4
      %v1794 = vshll.u32 %v1527, 16
      %v1796 = vrot.slane %v1794, 5
      %v1797 = vsel %vm497, %v1792, %v1796
      %v1798 = vshrl.u32 %v1527, 16
      %v1800 = vrot.slane %v1798, 4
      %v1801 = vor.u32 %v1800, %v1796
      %v1802 = vrot.slane %v1801, 4
      %v1804 = vshll.u32 %v1528, 16
      %v1806 = vrot.slane %v1804, 5
      %v1807 = vsel %vm497, %v1802, %v1806
      %v1809 = vshrl.u32 %v1529, 16
      %v1811 = vrot.slane %v1809, 4
      %v1812 = vshll.u32 %v1529, 16
      %v1814 = vrot.slane %v1812, 5
      %v1815 = vor.u32 %v1811, %v1814
      %v1816 = vrot.slane %v1815, 4
      %v1818 = vshll.u32 %v1530, 16
      %v1820 = vrot.slane %v1818, 5
      %v1821 = vsel %vm497, %v1816, %v1820
      %v1822 = vshrl.u32 %v1530, 16
      %v1824 = vrot.slane %v1822, 4
      %v1825 = vor.u32 %v1824, %v1820
      %v1826 = vrot.slane %v1825, 4
      %v1828 = vshll.u32 %v1531, 16
      %v1830 = vrot.slane %v1828, 5
      %v1831 = vsel %vm497, %v1826, %v1830
      %v1833 = vshrl.u32 %v1532, 16
      %v1835 = vrot.slane %v1833, 4
      %v1836 = vshll.u32 %v1532, 16
      %v1838 = vrot.slane %v1836, 5
      %v1839 = vor.u32 %v1835, %v1838
      %v1840 = vrot.slane %v1839, 4
      %v1842 = vshll.u32 %v1533, 16
      %v1844 = vrot.slane %v1842, 5
      %v1845 = vsel %vm497, %v1840, %v1844
      %v1846 = vshrl.u32 %v1533, 16
      %v1848 = vrot.slane %v1846, 4
      %v1849 = vor.u32 %v1848, %v1844
      %v1850 = vrot.slane %v1849, 4
      %v1852 = vshll.u32 %v1534, 16
      %v1854 = vrot.slane %v1852, 5
      %v1855 = vsel %vm497, %v1850, %v1854
      %v1857 = vshrl.u32 %v1535, 16
      %v1859 = vrot.slane %v1857, 4
      %v1860 = vshll.u32 %v1535, 16
      %v1862 = vrot.slane %v1860, 5
      %v1863 = vor.u32 %v1859, %v1862
      %v1864 = vrot.slane %v1863, 4
      %v1866 = vshll.u32 %v1536, 16
      %v1868 = vrot.slane %v1866, 5
      %v1869 = vsel %vm497, %v1864, %v1868
      %v1870 = vshrl.u32 %v1536, 16
      %v1872 = vrot.slane %v1870, 4
      %v1873 = vor.u32 %v1872, %v1868
      %v1874 = vrot.slane %v1873, 4
      %v1876 = vshll.u32 %v1537, 16
      %v1878 = vrot.slane %v1876, 5
      %v1879 = vsel %vm497, %v1874, %v1878
      %v1881 = vshrl.u32 %v1538, 16
      %v1883 = vrot.slane %v1881, 4
      %v1884 = vshll.u32 %v1538, 16
      %v1886 = vrot.slane %v1884, 5
      %v1887 = vor.u32 %v1883, %v1886
      %v1888 = vrot.slane %v1887, 4
      %v1890 = vshll.u32 %v1539, 16
      %v1892 = vrot.slane %v1890, 5
      %v1893 = vsel %vm497, %v1888, %v1892
      %v1894 = vshrl.u32 %v1539, 16
      %v1896 = vrot.slane %v1894, 4
      %v1897 = vor.u32 %v1896, %v1892
      %v1898 = vrot.slane %v1897, 4
      %v1900 = vshll.u32 %v1540, 16
      %v1902 = vrot.slane %v1900, 5
      %v1903 = vsel %vm497, %v1898, %v1902
      %v1905 = vshrl.u32 %v1541, 16
      %v1907 = vrot.slane %v1905, 4
      %v1908 = vshll.u32 %v1541, 16
      %v1910 = vrot.slane %v1908, 5
      %v1911 = vor.u32 %v1907, %v1910
      %v1912 = vrot.slane %v1911, 4
      %v1914 = vshll.u32 %v1542, 16
      %v1916 = vrot.slane %v1914, 5
      %v1917 = vsel %vm497, %v1912, %v1916
      %v1918 = vshrl.u32 %v1542, 16
      %v1920 = vrot.slane %v1918, 4
      %v1921 = vor.u32 %v1920, %v1916
      %v1922 = vrot.slane %v1921, 4
      %v1924 = vshll.u32 %v1543, 16
      %v1926 = vrot.slane %v1924, 5
      %v1927 = vsel %vm497, %v1922, %v1926
      %v1928 = vunpack.c.l.b16 %v1557
      %v1929 = vunpack.c.l.b16 %v1567
      %v1930 = vunpack.c.l.b16 %v1581
      %v1931 = vunpack.c.l.b16 %v1591
      %v1932 = vunpack.c.l.b16 %v1605
      %v1933 = vunpack.c.l.b16 %v1615
      %v1934 = vunpack.c.l.b16 %v1629
      %v1935 = vunpack.c.l.b16 %v1639
      %v1936 = vunpack.c.l.b16 %v1653
      %v1937 = vunpack.c.l.b16 %v1663
      %v1938 = vunpack.c.l.b16 %v1677
      %v1939 = vunpack.c.l.b16 %v1687
      %v1940 = vunpack.c.l.b16 %v1701
      %v1941 = vunpack.c.l.b16 %v1711
      %v1942 = vunpack.c.l.b16 %v1725
      %v1943 = vunpack.c.l.b16 %v1735
      %v1944 = vunpack.c.l.b16 %v1749
      %v1945 = vunpack.c.l.b16 %v1759
      %v1946 = vunpack.c.l.b16 %v1773
      %v1947 = vunpack.c.l.b16 %v1783
      %v1948 = vunpack.c.l.b16 %v1797
      %v1949 = vunpack.c.l.b16 %v1807
      %v1950 = vunpack.c.l.b16 %v1821
      %v1951 = vunpack.c.l.b16 %v1831
      %v1952 = vunpack.c.l.b16 %v1845
      %v1953 = vunpack.c.l.b16 %v1855
      %v1954 = vunpack.c.l.b16 %v1869
      %v1955 = vunpack.c.l.b16 %v1879
      %v1956 = vunpack.c.l.b16 %v1893
      %v1957 = vunpack.c.l.b16 %v1903
      %v1958 = vunpack.c.l.b16 %v1917
      %v1959 = vunpack.c.l.b16 %v1927
      %v1960 = vpack.c.b16 %v1929, %v1928
      %v1961 = vpack.c.b16 %v1931, %v1930
      %v1962 = vpack.c.b16 %v1933, %v1932
      %v1963 = vpack.c.b16 %v1935, %v1934
      %v1964 = vpack.c.b16 %v1937, %v1936
      %v1965 = vpack.c.b16 %v1939, %v1938
      %v1966 = vpack.c.b16 %v1941, %v1940
      %v1967 = vpack.c.b16 %v1943, %v1942
      %v1968 = vpack.c.b16 %v1945, %v1944
      %v1969 = vpack.c.b16 %v1947, %v1946
      %v1970 = vpack.c.b16 %v1949, %v1948
      %v1971 = vpack.c.b16 %v1951, %v1950
      %v1972 = vpack.c.b16 %v1953, %v1952
      %v1973 = vpack.c.b16 %v1955, %v1954
      %v1974 = vpack.c.b16 %v1957, %v1956
      %v1975 = vpack.c.b16 %v1959, %v1958
      %1976 = vrot.lane.b32.xlu0 %v1960, 16
      %v1977 = vpop.permute.xlu0 %1976
      %1978 = vrot.lane.b32.xlu0 %v1961, 16
      %v1979 = vpop.permute.xlu0 %1978
      %1980 = vrot.lane.b32.xlu0 %v1962, 16
      %v1981 = vpop.permute.xlu0 %1980
      %1982 = vrot.lane.b32.xlu0 %v1963, 16
      %v1983 = vpop.permute.xlu0 %1982
      %1984 = vrot.lane.b32.xlu0 %v1964, 16
      %v1985 = vpop.permute.xlu0 %1984
      %1986 = vrot.lane.b32.xlu0 %v1965, 16
      %v1987 = vpop.permute.xlu0 %1986
      %1988 = vrot.lane.b32.xlu0 %v1966, 16
      %v1989 = vpop.permute.xlu0 %1988
      %1990 = vrot.lane.b32.xlu0 %v1967, 16
      %v1991 = vpop.permute.xlu0 %1990
      %1992 = vrot.lane.b32.xlu0 %v1968, 16
      %v1993 = vpop.permute.xlu0 %1992
      %1994 = vrot.lane.b32.xlu0 %v1969, 16
      %v1995 = vpop.permute.xlu0 %1994
      %1996 = vrot.lane.b32.xlu0 %v1970, 16
      %v1997 = vpop.permute.xlu0 %1996
      %1998 = vrot.lane.b32.xlu0 %v1971, 16
      %v1999 = vpop.permute.xlu0 %1998
      %2000 = vrot.lane.b32.xlu0 %v1972, 16
      %v2001 = vpop.permute.xlu0 %2000
      %2002 = vrot.lane.b32.xlu0 %v1973, 16
      %v2003 = vpop.permute.xlu0 %2002
      %2004 = vrot.lane.b32.xlu0 %v1974, 16
      %v2005 = vpop.permute.xlu0 %2004
      %2006 = vrot.lane.b32.xlu0 %v1975, 16
      %v2007 = vpop.permute.xlu0 %2006
      %vm2024 = vcmask 162944
      %2025 = vst.msk [vmem:[#allocation3] sm:$0xff] %vm2024, %v1977
      %2026 = vst.msk [vmem:[#allocation3 + $0x8] sm:$0xff] %vm2024, %v1979
      %2027 = vst.msk [vmem:[#allocation3 + $0x10] sm:$0xff] %vm2024, %v1981
      %2028 = vst.msk [vmem:[#allocation3 + $0x18] sm:$0xff] %vm2024, %v1983
      %2029 = vst.msk [vmem:[#allocation3 + $0x20] sm:$0xff] %vm2024, %v1985
      %2030 = vst.msk [vmem:[#allocation3 + $0x28] sm:$0xff] %vm2024, %v1987
      %2031 = vst.msk [vmem:[#allocation3 + $0x30] sm:$0xff] %vm2024, %v1989
      %2032 = vst.msk [vmem:[#allocation3 + $0x38] sm:$0xff] %vm2024, %v1991
      %2033 = vst.msk [vmem:[#allocation3 + $0x40] sm:$0xff] %vm2024, %v1993
      %2034 = vst.msk [vmem:[#allocation3 + $0x48] sm:$0xff] %vm2024, %v1995
      %2035 = vst.msk [vmem:[#allocation3 + $0x50] sm:$0xff] %vm2024, %v1997
      %2036 = vst.msk [vmem:[#allocation3 + $0x58] sm:$0xff] %vm2024, %v1999
      %2037 = vst.msk [vmem:[#allocation3 + $0x60] sm:$0xff] %vm2024, %v2001
      %2038 = vst.msk [vmem:[#allocation3 + $0x68] sm:$0xff] %vm2024, %v2003
      %2039 = vst.msk [vmem:[#allocation3 + $0x70] sm:$0xff] %vm2024, %v2005
      %2040 = vst.msk [vmem:[#allocation3 + $0x78] sm:$0xff] %vm2024, %v2007
      %v2041 = vld [vmem:[%s253] sm:$0xe]
      %v2042 = vld [vmem:[%s253 + $0x4] sm:$0xf]
      %v2043 = vld [vmem:[%s253 + $0x8] sm:$0x1]
      %v2044 = vld [vmem:[%s253 + $0xc] sm:$0xe]
      %v2045 = vld [vmem:[%s253 + $0x10] sm:$0xf]
      %v2046 = vld [vmem:[%s253 + $0x14] sm:$0x1]
      %v2047 = vld [vmem:[%s253 + $0x18] sm:$0xe]
      %v2048 = vld [vmem:[%s253 + $0x1c] sm:$0xf]
      %v2049 = vld [vmem:[%s253 + $0x20] sm:$0x1]
      %v2050 = vld [vmem:[%s253 + $0x24] sm:$0xe]
      %v2051 = vld [vmem:[%s253 + $0x28] sm:$0xf]
      %v2052 = vld [vmem:[%s253 + $0x2c] sm:$0x1]
      %v2053 = vld [vmem:[%s253 + $0x30] sm:$0xe]
      %v2054 = vld [vmem:[%s253 + $0x34] sm:$0xf]
      %v2055 = vld [vmem:[%s253 + $0x38] sm:$0x1]
      %v2056 = vld [vmem:[%s253 + $0x3c] sm:$0xe]
      %v2057 = vld [vmem:[%s253 + $0x40] sm:$0xf]
      %v2058 = vld [vmem:[%s253 + $0x44] sm:$0x1]
      %v2059 = vld [vmem:[%s253 + $0x48] sm:$0xe]
      %v2060 = vld [vmem:[%s253 + $0x4c] sm:$0xf]
      %v2061 = vld [vmem:[%s253 + $0x50] sm:$0x1]
      %v2062 = vld [vmem:[%s253 + $0x54] sm:$0xe]
      %v2063 = vld [vmem:[%s253 + $0x58] sm:$0xf]
      %v2064 = vld [vmem:[%s253 + $0x5c] sm:$0x1]
      %v2065 = vld [vmem:[%s253 + $0x60] sm:$0xe]
      %v2066 = vld [vmem:[%s253 + $0x64] sm:$0xf]
      %v2067 = vld [vmem:[%s253 + $0x68] sm:$0x1]
      %v2068 = vld [vmem:[%s253 + $0x6c] sm:$0xe]
      %v2069 = vld [vmem:[%s253 + $0x70] sm:$0xf]
      %v2070 = vld [vmem:[%s253 + $0x74] sm:$0x1]
      %v2071 = vld [vmem:[%s253 + $0x78] sm:$0xe]
      %v2072 = vld [vmem:[%s253 + $0x7c] sm:$0xf]
      %v2073 = vld [vmem:[%s253 + $0x80] sm:$0x1]
      %v2074 = vld [vmem:[%s253 + $0x84] sm:$0xe]
      %v2075 = vld [vmem:[%s253 + $0x88] sm:$0xf]
      %v2076 = vld [vmem:[%s253 + $0x8c] sm:$0x1]
      %v2077 = vld [vmem:[%s253 + $0x90] sm:$0xe]
      %v2078 = vld [vmem:[%s253 + $0x94] sm:$0xf]
      %v2079 = vld [vmem:[%s253 + $0x98] sm:$0x1]
      %v2080 = vld [vmem:[%s253 + $0x9c] sm:$0xe]
      %v2081 = vld [vmem:[%s253 + $0xa0] sm:$0xf]
      %v2082 = vld [vmem:[%s253 + $0xa4] sm:$0x1]
      %v2083 = vld [vmem:[%s253 + $0xa8] sm:$0xe]
      %v2084 = vld [vmem:[%s253 + $0xac] sm:$0xf]
      %v2085 = vld [vmem:[%s253 + $0xb0] sm:$0x1]
      %v2086 = vld [vmem:[%s253 + $0xb4] sm:$0xe]
      %v2087 = vld [vmem:[%s253 + $0xb8] sm:$0xf]
      %v2088 = vld [vmem:[%s253 + $0xbc] sm:$0x1]
      %v2137 = vrot.slane %v2041, 5
      %v2138 = vrot.slane %v2137, 4
      %v2139 = vrot.slane %v2042, 5
      %v2140 = vsel %vm1093, %v2138, %v2139
      %v2141 = vrot.slane %v2139, 4
      %v2142 = vrot.slane %v2043, 5
      %v2143 = vsel %vm1093, %v2141, %v2142
      %v2144 = vrot.slane %v2044, 5
      %v2145 = vrot.slane %v2144, 4
      %v2146 = vrot.slane %v2045, 5
      %v2147 = vsel %vm1093, %v2145, %v2146
      %v2148 = vrot.slane %v2146, 4
      %v2149 = vrot.slane %v2046, 5
      %v2150 = vsel %vm1093, %v2148, %v2149
      %v2151 = vrot.slane %v2047, 5
      %v2152 = vrot.slane %v2151, 4
      %v2153 = vrot.slane %v2048, 5
      %v2154 = vsel %vm1093, %v2152, %v2153
      %v2155 = vrot.slane %v2153, 4
      %v2156 = vrot.slane %v2049, 5
      %v2157 = vsel %vm1093, %v2155, %v2156
      %v2158 = vrot.slane %v2050, 5
      %v2159 = vrot.slane %v2158, 4
      %v2160 = vrot.slane %v2051, 5
      %v2161 = vsel %vm1093, %v2159, %v2160
      %v2162 = vrot.slane %v2160, 4
      %v2163 = vrot.slane %v2052, 5
      %v2164 = vsel %vm1093, %v2162, %v2163
      %v2165 = vrot.slane %v2053, 5
      %v2166 = vrot.slane %v2165, 4
      %v2167 = vrot.slane %v2054, 5
      %v2168 = vsel %vm1093, %v2166, %v2167
      %v2169 = vrot.slane %v2167, 4
      %v2170 = vrot.slane %v2055, 5
      %v2171 = vsel %vm1093, %v2169, %v2170
      %v2172 = vrot.slane %v2056, 5
      %v2173 = vrot.slane %v2172, 4
      %v2174 = vrot.slane %v2057, 5
      %v2175 = vsel %vm1093, %v2173, %v2174
      %v2176 = vrot.slane %v2174, 4
      %v2177 = vrot.slane %v2058, 5
      %v2178 = vsel %vm1093, %v2176, %v2177
      %v2179 = vrot.slane %v2059, 5
      %v2180 = vrot.slane %v2179, 4
      %v2181 = vrot.slane %v2060, 5
      %v2182 = vsel %vm1093, %v2180, %v2181
      %v2183 = vrot.slane %v2181, 4
      %v2184 = vrot.slane %v2061, 5
      %v2185 = vsel %vm1093, %v2183, %v2184
      %v2186 = vrot.slane %v2062, 5
      %v2187 = vrot.slane %v2186, 4
      %v2188 = vrot.slane %v2063, 5
      %v2189 = vsel %vm1093, %v2187, %v2188
      %v2190 = vrot.slane %v2188, 4
      %v2191 = vrot.slane %v2064, 5
      %v2192 = vsel %vm1093, %v2190, %v2191
      %v2193 = vrot.slane %v2065, 5
      %v2194 = vrot.slane %v2193, 4
      %v2195 = vrot.slane %v2066, 5
      %v2196 = vsel %vm1093, %v2194, %v2195
      %v2197 = vrot.slane %v2195, 4
      %v2198 = vrot.slane %v2067, 5
      %v2199 = vsel %vm1093, %v2197, %v2198
      %v2200 = vrot.slane %v2068, 5
      %v2201 = vrot.slane %v2200, 4
      %v2202 = vrot.slane %v2069, 5
      %v2203 = vsel %vm1093, %v2201, %v2202
      %v2204 = vrot.slane %v2202, 4
      %v2205 = vrot.slane %v2070, 5
      %v2206 = vsel %vm1093, %v2204, %v2205
      %v2207 = vrot.slane %v2071, 5
      %v2208 = vrot.slane %v2207, 4
      %v2209 = vrot.slane %v2072, 5
      %v2210 = vsel %vm1093, %v2208, %v2209
      %v2211 = vrot.slane %v2209, 4
      %v2212 = vrot.slane %v2073, 5
      %v2213 = vsel %vm1093, %v2211, %v2212
      %v2214 = vrot.slane %v2074, 5
      %v2215 = vrot.slane %v2214, 4
      %v2216 = vrot.slane %v2075, 5
      %v2217 = vsel %vm1093, %v2215, %v2216
      %v2218 = vrot.slane %v2216, 4
      %v2219 = vrot.slane %v2076, 5
      %v2220 = vsel %vm1093, %v2218, %v2219
      %v2221 = vrot.slane %v2077, 5
      %v2222 = vrot.slane %v2221, 4
      %v2223 = vrot.slane %v2078, 5
      %v2224 = vsel %vm1093, %v2222, %v2223
      %v2225 = vrot.slane %v2223, 4
      %v2226 = vrot.slane %v2079, 5
      %v2227 = vsel %vm1093, %v2225, %v2226
      %v2228 = vrot.slane %v2080, 5
      %v2229 = vrot.slane %v2228, 4
      %v2230 = vrot.slane %v2081, 5
      %v2231 = vsel %vm1093, %v2229, %v2230
      %v2232 = vrot.slane %v2230, 4
      %v2233 = vrot.slane %v2082, 5
      %v2234 = vsel %vm1093, %v2232, %v2233
      %v2235 = vrot.slane %v2083, 5
      %v2236 = vrot.slane %v2235, 4
      %v2237 = vrot.slane %v2084, 5
      %v2238 = vsel %vm1093, %v2236, %v2237
      %v2239 = vrot.slane %v2237, 4
      %v2240 = vrot.slane %v2085, 5
      %v2241 = vsel %vm1093, %v2239, %v2240
      %v2242 = vrot.slane %v2086, 5
      %v2243 = vrot.slane %v2242, 4
      %v2244 = vrot.slane %v2087, 5
      %v2245 = vsel %vm1093, %v2243, %v2244
      %v2246 = vrot.slane %v2244, 4
      %v2247 = vrot.slane %v2088, 5
      %v2248 = vsel %vm1093, %v2246, %v2247
      %v2249 = vunpack.c.l.b16 %v2140
      %v2250 = vunpack.c.l.b16 %v2143
      %v2251 = vunpack.c.l.b16 %v2147
      %v2252 = vunpack.c.l.b16 %v2150
      %v2253 = vunpack.c.l.b16 %v2154
      %v2254 = vunpack.c.l.b16 %v2157
      %v2255 = vunpack.c.l.b16 %v2161
      %v2256 = vunpack.c.l.b16 %v2164
      %v2257 = vunpack.c.l.b16 %v2168
      %v2258 = vunpack.c.l.b16 %v2171
      %v2259 = vunpack.c.l.b16 %v2175
      %v2260 = vunpack.c.l.b16 %v2178
      %v2261 = vunpack.c.l.b16 %v2182
      %v2262 = vunpack.c.l.b16 %v2185
      %v2263 = vunpack.c.l.b16 %v2189
      %v2264 = vunpack.c.l.b16 %v2192
      %v2265 = vunpack.c.l.b16 %v2196
      %v2266 = vunpack.c.l.b16 %v2199
      %v2267 = vunpack.c.l.b16 %v2203
      %v2268 = vunpack.c.l.b16 %v2206
      %v2269 = vunpack.c.l.b16 %v2210
      %v2270 = vunpack.c.l.b16 %v2213
      %v2271 = vunpack.c.l.b16 %v2217
      %v2272 = vunpack.c.l.b16 %v2220
      %v2273 = vunpack.c.l.b16 %v2224
      %v2274 = vunpack.c.l.b16 %v2227
      %v2275 = vunpack.c.l.b16 %v2231
      %v2276 = vunpack.c.l.b16 %v2234
      %v2277 = vunpack.c.l.b16 %v2238
      %v2278 = vunpack.c.l.b16 %v2241
      %v2279 = vunpack.c.l.b16 %v2245
      %v2280 = vunpack.c.l.b16 %v2248
      %v2281 = vpack.c.b16 %v2250, %v2249
      %v2282 = vpack.c.b16 %v2252, %v2251
      %v2283 = vpack.c.b16 %v2254, %v2253
      %v2284 = vpack.c.b16 %v2256, %v2255
      %v2285 = vpack.c.b16 %v2258, %v2257
      %v2286 = vpack.c.b16 %v2260, %v2259
      %v2287 = vpack.c.b16 %v2262, %v2261
      %v2288 = vpack.c.b16 %v2264, %v2263
      %v2289 = vpack.c.b16 %v2266, %v2265
      %v2290 = vpack.c.b16 %v2268, %v2267
      %v2291 = vpack.c.b16 %v2270, %v2269
      %v2292 = vpack.c.b16 %v2272, %v2271
      %v2293 = vpack.c.b16 %v2274, %v2273
      %v2294 = vpack.c.b16 %v2276, %v2275
      %v2295 = vpack.c.b16 %v2278, %v2277
      %v2296 = vpack.c.b16 %v2280, %v2279
      %2297 = vrot.lane.b32.xlu0 %v2281, 20
      %v2298 = vpop.permute.xlu0 %2297
      %2299 = vrot.lane.b32.xlu0 %v2282, 20
      %v2300 = vpop.permute.xlu0 %2299
      %2301 = vrot.lane.b32.xlu0 %v2283, 20
      %v2302 = vpop.permute.xlu0 %2301
      %2303 = vrot.lane.b32.xlu0 %v2284, 20
      %v2304 = vpop.permute.xlu0 %2303
      %2305 = vrot.lane.b32.xlu0 %v2285, 20
      %v2306 = vpop.permute.xlu0 %2305
      %2307 = vrot.lane.b32.xlu0 %v2286, 20
      %v2308 = vpop.permute.xlu0 %2307
      %2309 = vrot.lane.b32.xlu0 %v2287, 20
      %v2310 = vpop.permute.xlu0 %2309
      %2311 = vrot.lane.b32.xlu0 %v2288, 20
      %v2312 = vpop.permute.xlu0 %2311
      %2313 = vrot.lane.b32.xlu0 %v2289, 20
      %v2314 = vpop.permute.xlu0 %2313
      %2315 = vrot.lane.b32.xlu0 %v2290, 20
      %v2316 = vpop.permute.xlu0 %2315
      %2317 = vrot.lane.b32.xlu0 %v2291, 20
      %v2318 = vpop.permute.xlu0 %2317
      %2319 = vrot.lane.b32.xlu0 %v2292, 20
      %v2320 = vpop.permute.xlu0 %2319
      %2321 = vrot.lane.b32.xlu0 %v2293, 20
      %v2322 = vpop.permute.xlu0 %2321
      %2323 = vrot.lane.b32.xlu0 %v2294, 20
      %v2324 = vpop.permute.xlu0 %2323
      %2325 = vrot.lane.b32.xlu0 %v2295, 20
      %v2326 = vpop.permute.xlu0 %2325
      %2327 = vrot.lane.b32.xlu0 %v2296, 20
      %v2328 = vpop.permute.xlu0 %2327
      %vm2345 = vcmask 195744
      %2346 = vst.msk [vmem:[#allocation3] sm:$0xff] %vm2345, %v2298
      %2347 = vst.msk [vmem:[#allocation3 + $0x8] sm:$0xff] %vm2345, %v2300
      %2348 = vst.msk [vmem:[#allocation3 + $0x10] sm:$0xff] %vm2345, %v2302
      %2349 = vst.msk [vmem:[#allocation3 + $0x18] sm:$0xff] %vm2345, %v2304
      %2350 = vst.msk [vmem:[#allocation3 + $0x20] sm:$0xff] %vm2345, %v2306
      %2351 = vst.msk [vmem:[#allocation3 + $0x28] sm:$0xff] %vm2345, %v2308
      %2352 = vst.msk [vmem:[#allocation3 + $0x30] sm:$0xff] %vm2345, %v2310
      %2353 = vst.msk [vmem:[#allocation3 + $0x38] sm:$0xff] %vm2345, %v2312
      %2354 = vst.msk [vmem:[#allocation3 + $0x40] sm:$0xff] %vm2345, %v2314
      %2355 = vst.msk [vmem:[#allocation3 + $0x48] sm:$0xff] %vm2345, %v2316
      %2356 = vst.msk [vmem:[#allocation3 + $0x50] sm:$0xff] %vm2345, %v2318
      %2357 = vst.msk [vmem:[#allocation3 + $0x58] sm:$0xff] %vm2345, %v2320
      %2358 = vst.msk [vmem:[#allocation3 + $0x60] sm:$0xff] %vm2345, %v2322
      %2359 = vst.msk [vmem:[#allocation3 + $0x68] sm:$0xff] %vm2345, %v2324
      %2360 = vst.msk [vmem:[#allocation3 + $0x70] sm:$0xff] %vm2345, %v2326
      %2361 = vst.msk [vmem:[#allocation3 + $0x78] sm:$0xff] %vm2345, %v2328
      %s2362 = scalar_lea.vmem %s246, 24
      %v2363 = vld [vmem:[%s2362] sm:$0xf]
      %v2364 = vld [vmem:[%s2362 + $0x4] sm:$0xf]
      %v2365 = vld [vmem:[%s2362 + $0xc] sm:$0xf]
      %v2366 = vld [vmem:[%s2362 + $0x10] sm:$0xf]
      %v2367 = vld [vmem:[%s2362 + $0x18] sm:$0xf]
      %v2368 = vld [vmem:[%s2362 + $0x1c] sm:$0xf]
      %v2369 = vld [vmem:[%s2362 + $0x24] sm:$0xf]
      %v2370 = vld [vmem:[%s2362 + $0x28] sm:$0xf]
      %v2371 = vld [vmem:[%s2362 + $0x30] sm:$0xf]
      %v2372 = vld [vmem:[%s2362 + $0x34] sm:$0xf]
      %v2373 = vld [vmem:[%s2362 + $0x3c] sm:$0xf]
      %v2374 = vld [vmem:[%s2362 + $0x40] sm:$0xf]
      %v2375 = vld [vmem:[%s2362 + $0x48] sm:$0xf]
      %v2376 = vld [vmem:[%s2362 + $0x4c] sm:$0xf]
      %v2377 = vld [vmem:[%s2362 + $0x54] sm:$0xf]
      %v2378 = vld [vmem:[%s2362 + $0x58] sm:$0xf]
      %v2379 = vld [vmem:[%s2362 + $0x60] sm:$0xf]
      %v2380 = vld [vmem:[%s2362 + $0x64] sm:$0xf]
      %v2381 = vld [vmem:[%s2362 + $0x6c] sm:$0xf]
      %v2382 = vld [vmem:[%s2362 + $0x70] sm:$0xf]
      %v2383 = vld [vmem:[%s2362 + $0x78] sm:$0xf]
      %v2384 = vld [vmem:[%s2362 + $0x7c] sm:$0xf]
      %v2385 = vld [vmem:[%s2362 + $0x84] sm:$0xf]
      %v2386 = vld [vmem:[%s2362 + $0x88] sm:$0xf]
      %v2387 = vld [vmem:[%s2362 + $0x90] sm:$0xf]
      %v2388 = vld [vmem:[%s2362 + $0x94] sm:$0xf]
      %v2389 = vld [vmem:[%s2362 + $0x9c] sm:$0xf]
      %v2390 = vld [vmem:[%s2362 + $0xa0] sm:$0xf]
      %v2391 = vld [vmem:[%s2362 + $0xa8] sm:$0xf]
      %v2392 = vld [vmem:[%s2362 + $0xac] sm:$0xf]
      %v2393 = vld [vmem:[%s2362 + $0xb4] sm:$0xf]
      %v2394 = vld [vmem:[%s2362 + $0xb8] sm:$0xf]
      %v2427 = vunpack.c.l.b16 %v2363
      %v2428 = vunpack.c.l.b16 %v2364
      %v2429 = vunpack.c.l.b16 %v2365
      %v2430 = vunpack.c.l.b16 %v2366
      %v2431 = vunpack.c.l.b16 %v2367
      %v2432 = vunpack.c.l.b16 %v2368
      %v2433 = vunpack.c.l.b16 %v2369
      %v2434 = vunpack.c.l.b16 %v2370
      %v2435 = vunpack.c.l.b16 %v2371
      %v2436 = vunpack.c.l.b16 %v2372
      %v2437 = vunpack.c.l.b16 %v2373
      %v2438 = vunpack.c.l.b16 %v2374
      %v2439 = vunpack.c.l.b16 %v2375
      %v2440 = vunpack.c.l.b16 %v2376
      %v2441 = vunpack.c.l.b16 %v2377
      %v2442 = vunpack.c.l.b16 %v2378
      %v2443 = vunpack.c.l.b16 %v2379
      %v2444 = vunpack.c.l.b16 %v2380
      %v2445 = vunpack.c.l.b16 %v2381
      %v2446 = vunpack.c.l.b16 %v2382
      %v2447 = vunpack.c.l.b16 %v2383
      %v2448 = vunpack.c.l.b16 %v2384
      %v2449 = vunpack.c.l.b16 %v2385
      %v2450 = vunpack.c.l.b16 %v2386
      %v2451 = vunpack.c.l.b16 %v2387
      %v2452 = vunpack.c.l.b16 %v2388
      %v2453 = vunpack.c.l.b16 %v2389
      %v2454 = vunpack.c.l.b16 %v2390
      %v2455 = vunpack.c.l.b16 %v2391
      %v2456 = vunpack.c.l.b16 %v2392
      %v2457 = vunpack.c.l.b16 %v2393
      %v2458 = vunpack.c.l.b16 %v2394
      %v2459 = vpack.c.b16 %v2428, %v2427
      %v2460 = vpack.c.b16 %v2430, %v2429
      %v2461 = vpack.c.b16 %v2432, %v2431
      %v2462 = vpack.c.b16 %v2434, %v2433
      %v2463 = vpack.c.b16 %v2436, %v2435
      %v2464 = vpack.c.b16 %v2438, %v2437
      %v2465 = vpack.c.b16 %v2440, %v2439
      %v2466 = vpack.c.b16 %v2442, %v2441
      %v2467 = vpack.c.b16 %v2444, %v2443
      %v2468 = vpack.c.b16 %v2446, %v2445
      %v2469 = vpack.c.b16 %v2448, %v2447
      %v2470 = vpack.c.b16 %v2450, %v2449
      %v2471 = vpack.c.b16 %v2452, %v2451
      %v2472 = vpack.c.b16 %v2454, %v2453
      %v2473 = vpack.c.b16 %v2456, %v2455
      %v2474 = vpack.c.b16 %v2458, %v2457
      %2475 = vrot.lane.b32.xlu0 %v2459, 24
      %v2476 = vpop.permute.xlu0 %2475
      %2477 = vrot.lane.b32.xlu0 %v2460, 24
      %v2478 = vpop.permute.xlu0 %2477
      %2479 = vrot.lane.b32.xlu0 %v2461, 24
      %v2480 = vpop.permute.xlu0 %2479
      %2481 = vrot.lane.b32.xlu0 %v2462, 24
      %v2482 = vpop.permute.xlu0 %2481
      %2483 = vrot.lane.b32.xlu0 %v2463, 24
      %v2484 = vpop.permute.xlu0 %2483
      %2485 = vrot.lane.b32.xlu0 %v2464, 24
      %v2486 = vpop.permute.xlu0 %2485
      %2487 = vrot.lane.b32.xlu0 %v2465, 24
      %v2488 = vpop.permute.xlu0 %2487
      %2489 = vrot.lane.b32.xlu0 %v2466, 24
      %v2490 = vpop.permute.xlu0 %2489
      %2491 = vrot.lane.b32.xlu0 %v2467, 24
      %v2492 = vpop.permute.xlu0 %2491
      %2493 = vrot.lane.b32.xlu0 %v2468, 24
      %v2494 = vpop.permute.xlu0 %2493
      %2495 = vrot.lane.b32.xlu0 %v2469, 24
      %v2496 = vpop.permute.xlu0 %2495
      %2497 = vrot.lane.b32.xlu0 %v2470, 24
      %v2498 = vpop.permute.xlu0 %2497
      %2499 = vrot.lane.b32.xlu0 %v2471, 24
      %v2500 = vpop.permute.xlu0 %2499
      %2501 = vrot.lane.b32.xlu0 %v2472, 24
      %v2502 = vpop.permute.xlu0 %2501
      %2503 = vrot.lane.b32.xlu0 %v2473, 24
      %v2504 = vpop.permute.xlu0 %2503
      %2505 = vrot.lane.b32.xlu0 %v2474, 24
      %v2506 = vpop.permute.xlu0 %2505
      %vm2523 = vcmask 228544
      %2524 = vst.msk [vmem:[#allocation3] sm:$0xff] %vm2523, %v2476
      %2525 = vst.msk [vmem:[#allocation3 + $0x8] sm:$0xff] %vm2523, %v2478
      %2526 = vst.msk [vmem:[#allocation3 + $0x10] sm:$0xff] %vm2523, %v2480
      %2527 = vst.msk [vmem:[#allocation3 + $0x18] sm:$0xff] %vm2523, %v2482
      %2528 = vst.msk [vmem:[#allocation3 + $0x20] sm:$0xff] %vm2523, %v2484
      %2529 = vst.msk [vmem:[#allocation3 + $0x28] sm:$0xff] %vm2523, %v2486
      %2530 = vst.msk [vmem:[#allocation3 + $0x30] sm:$0xff] %vm2523, %v2488
      %2531 = vst.msk [vmem:[#allocation3 + $0x38] sm:$0xff] %vm2523, %v2490
      %2532 = vst.msk [vmem:[#allocation3 + $0x40] sm:$0xff] %vm2523, %v2492
      %2533 = vst.msk [vmem:[#allocation3 + $0x48] sm:$0xff] %vm2523, %v2494
      %2534 = vst.msk [vmem:[#allocation3 + $0x50] sm:$0xff] %vm2523, %v2496
      %2535 = vst.msk [vmem:[#allocation3 + $0x58] sm:$0xff] %vm2523, %v2498
      %2536 = vst.msk [vmem:[#allocation3 + $0x60] sm:$0xff] %vm2523, %v2500
      %2537 = vst.msk [vmem:[#allocation3 + $0x68] sm:$0xff] %vm2523, %v2502
      %2538 = vst.msk [vmem:[#allocation3 + $0x70] sm:$0xff] %vm2523, %v2504
      %2539 = vst.msk [vmem:[#allocation3 + $0x78] sm:$0xff] %vm2523, %v2506
      %v2540 = vld [vmem:[%s2362] sm:$0xf]
      %v2541 = vld [vmem:[%s2362 + $0x4] sm:$0xf]
      %v2542 = vld [vmem:[%s2362 + $0x8] sm:$0x1]
      %v2543 = vld [vmem:[%s2362 + $0xc] sm:$0xf]
      %v2544 = vld [vmem:[%s2362 + $0x10] sm:$0xf]
      %v2545 = vld [vmem:[%s2362 + $0x14] sm:$0x1]
      %v2546 = vld [vmem:[%s2362 + $0x18] sm:$0xf]
      %v2547 = vld [vmem:[%s2362 + $0x1c] sm:$0xf]
      %v2548 = vld [vmem:[%s2362 + $0x20] sm:$0x1]
      %v2549 = vld [vmem:[%s2362 + $0x24] sm:$0xf]
      %v2550 = vld [vmem:[%s2362 + $0x28] sm:$0xf]
      %v2551 = vld [vmem:[%s2362 + $0x2c] sm:$0x1]
      %v2552 = vld [vmem:[%s2362 + $0x30] sm:$0xf]
      %v2553 = vld [vmem:[%s2362 + $0x34] sm:$0xf]
      %v2554 = vld [vmem:[%s2362 + $0x38] sm:$0x1]
      %v2555 = vld [vmem:[%s2362 + $0x3c] sm:$0xf]
      %v2556 = vld [vmem:[%s2362 + $0x40] sm:$0xf]
      %v2557 = vld [vmem:[%s2362 + $0x44] sm:$0x1]
      %v2558 = vld [vmem:[%s2362 + $0x48] sm:$0xf]
      %v2559 = vld [vmem:[%s2362 + $0x4c] sm:$0xf]
      %v2560 = vld [vmem:[%s2362 + $0x50] sm:$0x1]
      %v2561 = vld [vmem:[%s2362 + $0x54] sm:$0xf]
      %v2562 = vld [vmem:[%s2362 + $0x58] sm:$0xf]
      %v2563 = vld [vmem:[%s2362 + $0x5c] sm:$0x1]
      %v2564 = vld [vmem:[%s2362 + $0x60] sm:$0xf]
      %v2565 = vld [vmem:[%s2362 + $0x64] sm:$0xf]
      %v2566 = vld [vmem:[%s2362 + $0x68] sm:$0x1]
      %v2567 = vld [vmem:[%s2362 + $0x6c] sm:$0xf]
      %v2568 = vld [vmem:[%s2362 + $0x70] sm:$0xf]
      %v2569 = vld [vmem:[%s2362 + $0x74] sm:$0x1]
      %v2570 = vld [vmem:[%s2362 + $0x78] sm:$0xf]
      %v2571 = vld [vmem:[%s2362 + $0x7c] sm:$0xf]
      %v2572 = vld [vmem:[%s2362 + $0x80] sm:$0x1]
      %v2573 = vld [vmem:[%s2362 + $0x84] sm:$0xf]
      %v2574 = vld [vmem:[%s2362 + $0x88] sm:$0xf]
      %v2575 = vld [vmem:[%s2362 + $0x8c] sm:$0x1]
      %v2576 = vld [vmem:[%s2362 + $0x90] sm:$0xf]
      %v2577 = vld [vmem:[%s2362 + $0x94] sm:$0xf]
      %v2578 = vld [vmem:[%s2362 + $0x98] sm:$0x1]
      %v2579 = vld [vmem:[%s2362 + $0x9c] sm:$0xf]
      %v2580 = vld [vmem:[%s2362 + $0xa0] sm:$0xf]
      %v2581 = vld [vmem:[%s2362 + $0xa4] sm:$0x1]
      %v2582 = vld [vmem:[%s2362 + $0xa8] sm:$0xf]
      %v2583 = vld [vmem:[%s2362 + $0xac] sm:$0xf]
      %v2584 = vld [vmem:[%s2362 + $0xb0] sm:$0x1]
      %v2585 = vld [vmem:[%s2362 + $0xb4] sm:$0xf]
      %v2586 = vld [vmem:[%s2362 + $0xb8] sm:$0xf]
      %v2587 = vld [vmem:[%s2362 + $0xbc] sm:$0x1]
      %v2589 = vshrl.u32 %v2540, 16
      %v2591 = vrot.slane %v2589, 4
      %v2592 = vshll.u32 %v2540, 16
      %v2594 = vrot.slane %v2592, 5
      %v2595 = vor.u32 %v2591, %v2594
      %v2596 = vrot.slane %v2595, 4
      %v2598 = vshll.u32 %v2541, 16
      %v2600 = vrot.slane %v2598, 5
      %v2601 = vsel %vm497, %v2596, %v2600
      %v2602 = vshrl.u32 %v2541, 16
      %v2604 = vrot.slane %v2602, 4
      %v2605 = vor.u32 %v2604, %v2600
      %v2606 = vrot.slane %v2605, 4
      %v2608 = vshll.u32 %v2542, 16
      %v2610 = vrot.slane %v2608, 5
      %v2611 = vsel %vm497, %v2606, %v2610
      %v2613 = vshrl.u32 %v2543, 16
      %v2615 = vrot.slane %v2613, 4
      %v2616 = vshll.u32 %v2543, 16
      %v2618 = vrot.slane %v2616, 5
      %v2619 = vor.u32 %v2615, %v2618
      %v2620 = vrot.slane %v2619, 4
      %v2622 = vshll.u32 %v2544, 16
      %v2624 = vrot.slane %v2622, 5
      %v2625 = vsel %vm497, %v2620, %v2624
      %v2626 = vshrl.u32 %v2544, 16
      %v2628 = vrot.slane %v2626, 4
      %v2629 = vor.u32 %v2628, %v2624
      %v2630 = vrot.slane %v2629, 4
      %v2632 = vshll.u32 %v2545, 16
      %v2634 = vrot.slane %v2632, 5
      %v2635 = vsel %vm497, %v2630, %v2634
      %v2637 = vshrl.u32 %v2546, 16
      %v2639 = vrot.slane %v2637, 4
      %v2640 = vshll.u32 %v2546, 16
      %v2642 = vrot.slane %v2640, 5
      %v2643 = vor.u32 %v2639, %v2642
      %v2644 = vrot.slane %v2643, 4
      %v2646 = vshll.u32 %v2547, 16
      %v2648 = vrot.slane %v2646, 5
      %v2649 = vsel %vm497, %v2644, %v2648
      %v2650 = vshrl.u32 %v2547, 16
      %v2652 = vrot.slane %v2650, 4
      %v2653 = vor.u32 %v2652, %v2648
      %v2654 = vrot.slane %v2653, 4
      %v2656 = vshll.u32 %v2548, 16
      %v2658 = vrot.slane %v2656, 5
      %v2659 = vsel %vm497, %v2654, %v2658
      %v2661 = vshrl.u32 %v2549, 16
      %v2663 = vrot.slane %v2661, 4
      %v2664 = vshll.u32 %v2549, 16
      %v2666 = vrot.slane %v2664, 5
      %v2667 = vor.u32 %v2663, %v2666
      %v2668 = vrot.slane %v2667, 4
      %v2670 = vshll.u32 %v2550, 16
      %v2672 = vrot.slane %v2670, 5
      %v2673 = vsel %vm497, %v2668, %v2672
      %v2674 = vshrl.u32 %v2550, 16
      %v2676 = vrot.slane %v2674, 4
      %v2677 = vor.u32 %v2676, %v2672
      %v2678 = vrot.slane %v2677, 4
      %v2680 = vshll.u32 %v2551, 16
      %v2682 = vrot.slane %v2680, 5
      %v2683 = vsel %vm497, %v2678, %v2682
      %v2685 = vshrl.u32 %v2552, 16
      %v2687 = vrot.slane %v2685, 4
      %v2688 = vshll.u32 %v2552, 16
      %v2690 = vrot.slane %v2688, 5
      %v2691 = vor.u32 %v2687, %v2690
      %v2692 = vrot.slane %v2691, 4
      %v2694 = vshll.u32 %v2553, 16
      %v2696 = vrot.slane %v2694, 5
      %v2697 = vsel %vm497, %v2692, %v2696
      %v2698 = vshrl.u32 %v2553, 16
      %v2700 = vrot.slane %v2698, 4
      %v2701 = vor.u32 %v2700, %v2696
      %v2702 = vrot.slane %v2701, 4
      %v2704 = vshll.u32 %v2554, 16
      %v2706 = vrot.slane %v2704, 5
      %v2707 = vsel %vm497, %v2702, %v2706
      %v2709 = vshrl.u32 %v2555, 16
      %v2711 = vrot.slane %v2709, 4
      %v2712 = vshll.u32 %v2555, 16
      %v2714 = vrot.slane %v2712, 5
      %v2715 = vor.u32 %v2711, %v2714
      %v2716 = vrot.slane %v2715, 4
      %v2718 = vshll.u32 %v2556, 16
      %v2720 = vrot.slane %v2718, 5
      %v2721 = vsel %vm497, %v2716, %v2720
      %v2722 = vshrl.u32 %v2556, 16
      %v2724 = vrot.slane %v2722, 4
      %v2725 = vor.u32 %v2724, %v2720
      %v2726 = vrot.slane %v2725, 4
      %v2728 = vshll.u32 %v2557, 16
      %v2730 = vrot.slane %v2728, 5
      %v2731 = vsel %vm497, %v2726, %v2730
      %v2733 = vshrl.u32 %v2558, 16
      %v2735 = vrot.slane %v2733, 4
      %v2736 = vshll.u32 %v2558, 16
      %v2738 = vrot.slane %v2736, 5
      %v2739 = vor.u32 %v2735, %v2738
      %v2740 = vrot.slane %v2739, 4
      %v2742 = vshll.u32 %v2559, 16
      %v2744 = vrot.slane %v2742, 5
      %v2745 = vsel %vm497, %v2740, %v2744
      %v2746 = vshrl.u32 %v2559, 16
      %v2748 = vrot.slane %v2746, 4
      %v2749 = vor.u32 %v2748, %v2744
      %v2750 = vrot.slane %v2749, 4
      %v2752 = vshll.u32 %v2560, 16
      %v2754 = vrot.slane %v2752, 5
      %v2755 = vsel %vm497, %v2750, %v2754
      %v2757 = vshrl.u32 %v2561, 16
      %v2759 = vrot.slane %v2757, 4
      %v2760 = vshll.u32 %v2561, 16
      %v2762 = vrot.slane %v2760, 5
      %v2763 = vor.u32 %v2759, %v2762
      %v2764 = vrot.slane %v2763, 4
      %v2766 = vshll.u32 %v2562, 16
      %v2768 = vrot.slane %v2766, 5
      %v2769 = vsel %vm497, %v2764, %v2768
      %v2770 = vshrl.u32 %v2562, 16
      %v2772 = vrot.slane %v2770, 4
      %v2773 = vor.u32 %v2772, %v2768
      %v2774 = vrot.slane %v2773, 4
      %v2776 = vshll.u32 %v2563, 16
      %v2778 = vrot.slane %v2776, 5
      %v2779 = vsel %vm497, %v2774, %v2778
      %v2781 = vshrl.u32 %v2564, 16
      %v2783 = vrot.slane %v2781, 4
      %v2784 = vshll.u32 %v2564, 16
      %v2786 = vrot.slane %v2784, 5
      %v2787 = vor.u32 %v2783, %v2786
      %v2788 = vrot.slane %v2787, 4
      %v2790 = vshll.u32 %v2565, 16
      %v2792 = vrot.slane %v2790, 5
      %v2793 = vsel %vm497, %v2788, %v2792
      %v2794 = vshrl.u32 %v2565, 16
      %v2796 = vrot.slane %v2794, 4
      %v2797 = vor.u32 %v2796, %v2792
      %v2798 = vrot.slane %v2797, 4
      %v2800 = vshll.u32 %v2566, 16
      %v2802 = vrot.slane %v2800, 5
      %v2803 = vsel %vm497, %v2798, %v2802
      %v2805 = vshrl.u32 %v2567, 16
      %v2807 = vrot.slane %v2805, 4
      %v2808 = vshll.u32 %v2567, 16
      %v2810 = vrot.slane %v2808, 5
      %v2811 = vor.u32 %v2807, %v2810
      %v2812 = vrot.slane %v2811, 4
      %v2814 = vshll.u32 %v2568, 16
      %v2816 = vrot.slane %v2814, 5
      %v2817 = vsel %vm497, %v2812, %v2816
      %v2818 = vshrl.u32 %v2568, 16
      %v2820 = vrot.slane %v2818, 4
      %v2821 = vor.u32 %v2820, %v2816
      %v2822 = vrot.slane %v2821, 4
      %v2824 = vshll.u32 %v2569, 16
      %v2826 = vrot.slane %v2824, 5
      %v2827 = vsel %vm497, %v2822, %v2826
      %v2829 = vshrl.u32 %v2570, 16
      %v2831 = vrot.slane %v2829, 4
      %v2832 = vshll.u32 %v2570, 16
      %v2834 = vrot.slane %v2832, 5
      %v2835 = vor.u32 %v2831, %v2834
      %v2836 = vrot.slane %v2835, 4
      %v2838 = vshll.u32 %v2571, 16
      %v2840 = vrot.slane %v2838, 5
      %v2841 = vsel %vm497, %v2836, %v2840
      %v2842 = vshrl.u32 %v2571, 16
      %v2844 = vrot.slane %v2842, 4
      %v2845 = vor.u32 %v2844, %v2840
      %v2846 = vrot.slane %v2845, 4
      %v2848 = vshll.u32 %v2572, 16
      %v2850 = vrot.slane %v2848, 5
      %v2851 = vsel %vm497, %v2846, %v2850
      %v2853 = vshrl.u32 %v2573, 16
      %v2855 = vrot.slane %v2853, 4
      %v2856 = vshll.u32 %v2573, 16
      %v2858 = vrot.slane %v2856, 5
      %v2859 = vor.u32 %v2855, %v2858
      %v2860 = vrot.slane %v2859, 4
      %v2862 = vshll.u32 %v2574, 16
      %v2864 = vrot.slane %v2862, 5
      %v2865 = vsel %vm497, %v2860, %v2864
      %v2866 = vshrl.u32 %v2574, 16
      %v2868 = vrot.slane %v2866, 4
      %v2869 = vor.u32 %v2868, %v2864
      %v2870 = vrot.slane %v2869, 4
      %v2872 = vshll.u32 %v2575, 16
      %v2874 = vrot.slane %v2872, 5
      %v2875 = vsel %vm497, %v2870, %v2874
      %v2877 = vshrl.u32 %v2576, 16
      %v2879 = vrot.slane %v2877, 4
      %v2880 = vshll.u32 %v2576, 16
      %v2882 = vrot.slane %v2880, 5
      %v2883 = vor.u32 %v2879, %v2882
      %v2884 = vrot.slane %v2883, 4
      %v2886 = vshll.u32 %v2577, 16
      %v2888 = vrot.slane %v2886, 5
      %v2889 = vsel %vm497, %v2884, %v2888
      %v2890 = vshrl.u32 %v2577, 16
      %v2892 = vrot.slane %v2890, 4
      %v2893 = vor.u32 %v2892, %v2888
      %v2894 = vrot.slane %v2893, 4
      %v2896 = vshll.u32 %v2578, 16
      %v2898 = vrot.slane %v2896, 5
      %v2899 = vsel %vm497, %v2894, %v2898
      %v2901 = vshrl.u32 %v2579, 16
      %v2903 = vrot.slane %v2901, 4
      %v2904 = vshll.u32 %v2579, 16
      %v2906 = vrot.slane %v2904, 5
      %v2907 = vor.u32 %v2903, %v2906
      %v2908 = vrot.slane %v2907, 4
      %v2910 = vshll.u32 %v2580, 16
      %v2912 = vrot.slane %v2910, 5
      %v2913 = vsel %vm497, %v2908, %v2912
      %v2914 = vshrl.u32 %v2580, 16
      %v2916 = vrot.slane %v2914, 4
      %v2917 = vor.u32 %v2916, %v2912
      %v2918 = vrot.slane %v2917, 4
      %v2920 = vshll.u32 %v2581, 16
      %v2922 = vrot.slane %v2920, 5
      %v2923 = vsel %vm497, %v2918, %v2922
      %v2925 = vshrl.u32 %v2582, 16
      %v2927 = vrot.slane %v2925, 4
      %v2928 = vshll.u32 %v2582, 16
      %v2930 = vrot.slane %v2928, 5
      %v2931 = vor.u32 %v2927, %v2930
      %v2932 = vrot.slane %v2931, 4
      %v2934 = vshll.u32 %v2583, 16
      %v2936 = vrot.slane %v2934, 5
      %v2937 = vsel %vm497, %v2932, %v2936
      %v2938 = vshrl.u32 %v2583, 16
      %v2940 = vrot.slane %v2938, 4
      %v2941 = vor.u32 %v2940, %v2936
      %v2942 = vrot.slane %v2941, 4
      %v2944 = vshll.u32 %v2584, 16
      %v2946 = vrot.slane %v2944, 5
      %v2947 = vsel %vm497, %v2942, %v2946
      %v2949 = vshrl.u32 %v2585, 16
      %v2951 = vrot.slane %v2949, 4
      %v2952 = vshll.u32 %v2585, 16
      %v2954 = vrot.slane %v2952, 5
      %v2955 = vor.u32 %v2951, %v2954
      %v2956 = vrot.slane %v2955, 4
      %v2958 = vshll.u32 %v2586, 16
      %v2960 = vrot.slane %v2958, 5
      %v2961 = vsel %vm497, %v2956, %v2960
      %v2962 = vshrl.u32 %v2586, 16
      %v2964 = vrot.slane %v2962, 4
      %v2965 = vor.u32 %v2964, %v2960
      %v2966 = vrot.slane %v2965, 4
      %v2968 = vshll.u32 %v2587, 16
      %v2970 = vrot.slane %v2968, 5
      %v2971 = vsel %vm497, %v2966, %v2970
      %v2972 = vunpack.c.l.b16 %v2601
      %v2973 = vunpack.c.l.b16 %v2611
      %v2974 = vunpack.c.l.b16 %v2625
      %v2975 = vunpack.c.l.b16 %v2635
      %v2976 = vunpack.c.l.b16 %v2649
      %v2977 = vunpack.c.l.b16 %v2659
      %v2978 = vunpack.c.l.b16 %v2673
      %v2979 = vunpack.c.l.b16 %v2683
      %v2980 = vunpack.c.l.b16 %v2697
      %v2981 = vunpack.c.l.b16 %v2707
      %v2982 = vunpack.c.l.b16 %v2721
      %v2983 = vunpack.c.l.b16 %v2731
      %v2984 = vunpack.c.l.b16 %v2745
      %v2985 = vunpack.c.l.b16 %v2755
      %v2986 = vunpack.c.l.b16 %v2769
      %v2987 = vunpack.c.l.b16 %v2779
      %v2988 = vunpack.c.l.b16 %v2793
      %v2989 = vunpack.c.l.b16 %v2803
      %v2990 = vunpack.c.l.b16 %v2817
      %v2991 = vunpack.c.l.b16 %v2827
      %v2992 = vunpack.c.l.b16 %v2841
      %v2993 = vunpack.c.l.b16 %v2851
      %v2994 = vunpack.c.l.b16 %v2865
      %v2995 = vunpack.c.l.b16 %v2875
      %v2996 = vunpack.c.l.b16 %v2889
      %v2997 = vunpack.c.l.b16 %v2899
      %v2998 = vunpack.c.l.b16 %v2913
      %v2999 = vunpack.c.l.b16 %v2923
      %v3000 = vunpack.c.l.b16 %v2937
      %v3001 = vunpack.c.l.b16 %v2947
      %v3002 = vunpack.c.l.b16 %v2961
      %v3003 = vunpack.c.l.b16 %v2971
      %v3004 = vpack.c.b16 %v2973, %v2972
      %v3005 = vpack.c.b16 %v2975, %v2974
      %v3006 = vpack.c.b16 %v2977, %v2976
      %v3007 = vpack.c.b16 %v2979, %v2978
      %v3008 = vpack.c.b16 %v2981, %v2980
      %v3009 = vpack.c.b16 %v2983, %v2982
      %v3010 = vpack.c.b16 %v2985, %v2984
      %v3011 = vpack.c.b16 %v2987, %v2986
      %v3012 = vpack.c.b16 %v2989, %v2988
      %v3013 = vpack.c.b16 %v2991, %v2990
      %v3014 = vpack.c.b16 %v2993, %v2992
      %v3015 = vpack.c.b16 %v2995, %v2994
      %v3016 = vpack.c.b16 %v2997, %v2996
      %v3017 = vpack.c.b16 %v2999, %v2998
      %v3018 = vpack.c.b16 %v3001, %v3000
      %v3019 = vpack.c.b16 %v3003, %v3002
      %3020 = vrot.lane.b32.xlu0 %v3004, 28
      %v3021 = vpop.permute.xlu0 %3020
      %3022 = vrot.lane.b32.xlu0 %v3005, 28
      %v3023 = vpop.permute.xlu0 %3022
      %3024 = vrot.lane.b32.xlu0 %v3006, 28
      %v3025 = vpop.permute.xlu0 %3024
      %3026 = vrot.lane.b32.xlu0 %v3007, 28
      %v3027 = vpop.permute.xlu0 %3026
      %3028 = vrot.lane.b32.xlu0 %v3008, 28
      %v3029 = vpop.permute.xlu0 %3028
      %3030 = vrot.lane.b32.xlu0 %v3009, 28
      %v3031 = vpop.permute.xlu0 %3030
      %3032 = vrot.lane.b32.xlu0 %v3010, 28
      %v3033 = vpop.permute.xlu0 %3032
      %3034 = vrot.lane.b32.xlu0 %v3011, 28
      %v3035 = vpop.permute.xlu0 %3034
      %3036 = vrot.lane.b32.xlu0 %v3012, 28
      %v3037 = vpop.permute.xlu0 %3036
      %3038 = vrot.lane.b32.xlu0 %v3013, 28
      %v3039 = vpop.permute.xlu0 %3038
      %3040 = vrot.lane.b32.xlu0 %v3014, 28
      %v3041 = vpop.permute.xlu0 %3040
      %3042 = vrot.lane.b32.xlu0 %v3015, 28
      %v3043 = vpop.permute.xlu0 %3042
      %3044 = vrot.lane.b32.xlu0 %v3016, 28
      %v3045 = vpop.permute.xlu0 %3044
      %3046 = vrot.lane.b32.xlu0 %v3017, 28
      %v3047 = vpop.permute.xlu0 %3046
      %3048 = vrot.lane.b32.xlu0 %v3018, 28
      %v3049 = vpop.permute.xlu0 %3048
      %3050 = vrot.lane.b32.xlu0 %v3019, 28
      %v3051 = vpop.permute.xlu0 %3050
      %vm3068 = vcmask 261344
      %3069 = vst.msk [vmem:[#allocation3] sm:$0xff] %vm3068, %v3021
      %3070 = vst.msk [vmem:[#allocation3 + $0x8] sm:$0xff] %vm3068, %v3023
      %3071 = vst.msk [vmem:[#allocation3 + $0x10] sm:$0xff] %vm3068, %v3025
      %3072 = vst.msk [vmem:[#allocation3 + $0x18] sm:$0xff] %vm3068, %v3027
      %3073 = vst.msk [vmem:[#allocation3 + $0x20] sm:$0xff] %vm3068, %v3029
      %3074 = vst.msk [vmem:[#allocation3 + $0x28] sm:$0xff] %vm3068, %v3031
      %3075 = vst.msk [vmem:[#allocation3 + $0x30] sm:$0xff] %vm3068, %v3033
      %3076 = vst.msk [vmem:[#allocation3 + $0x38] sm:$0xff] %vm3068, %v3035
      %3077 = vst.msk [vmem:[#allocation3 + $0x40] sm:$0xff] %vm3068, %v3037
      %3078 = vst.msk [vmem:[#allocation3 + $0x48] sm:$0xff] %vm3068, %v3039
      %3079 = vst.msk [vmem:[#allocation3 + $0x50] sm:$0xff] %vm3068, %v3041
      %3080 = vst.msk [vmem:[#allocation3 + $0x58] sm:$0xff] %vm3068, %v3043
      %3081 = vst.msk [vmem:[#allocation3 + $0x60] sm:$0xff] %vm3068, %v3045
      %3082 = vst.msk [vmem:[#allocation3 + $0x68] sm:$0xff] %vm3068, %v3047
      %3083 = vst.msk [vmem:[#allocation3 + $0x70] sm:$0xff] %vm3068, %v3049
      %3084 = vst.msk [vmem:[#allocation3 + $0x78] sm:$0xff] %vm3068, %v3051
      %v3085 = vld [vmem:[%s2362] sm:$0xe]
      %v3086 = vld [vmem:[%s2362 + $0x4] sm:$0xf]
      %v3087 = vld [vmem:[%s2362 + $0x8] sm:$0x1]
      %v3088 = vld [vmem:[%s2362 + $0xc] sm:$0xe]
      %v3089 = vld [vmem:[%s2362 + $0x10] sm:$0xf]
      %v3090 = vld [vmem:[%s2362 + $0x14] sm:$0x1]
      %v3091 = vld [vmem:[%s2362 + $0x18] sm:$0xe]
      %v3092 = vld [vmem:[%s2362 + $0x1c] sm:$0xf]
      %v3093 = vld [vmem:[%s2362 + $0x20] sm:$0x1]
      %v3094 = vld [vmem:[%s2362 + $0x24] sm:$0xe]
      %v3095 = vld [vmem:[%s2362 + $0x28] sm:$0xf]
      %v3096 = vld [vmem:[%s2362 + $0x2c] sm:$0x1]
      %v3097 = vld [vmem:[%s2362 + $0x30] sm:$0xe]
      %v3098 = vld [vmem:[%s2362 + $0x34] sm:$0xf]
      %v3099 = vld [vmem:[%s2362 + $0x38] sm:$0x1]
      %v3100 = vld [vmem:[%s2362 + $0x3c] sm:$0xe]
      %v3101 = vld [vmem:[%s2362 + $0x40] sm:$0xf]
      %v3102 = vld [vmem:[%s2362 + $0x44] sm:$0x1]
      %v3103 = vld [vmem:[%s2362 + $0x48] sm:$0xe]
      %v3104 = vld [vmem:[%s2362 + $0x4c] sm:$0xf]
      %v3105 = vld [vmem:[%s2362 + $0x50] sm:$0x1]
      %v3106 = vld [vmem:[%s2362 + $0x54] sm:$0xe]
      %v3107 = vld [vmem:[%s2362 + $0x58] sm:$0xf]
      %v3108 = vld [vmem:[%s2362 + $0x5c] sm:$0x1]
      %v3109 = vld [vmem:[%s2362 + $0x60] sm:$0xe]
      %v3110 = vld [vmem:[%s2362 + $0x64] sm:$0xf]
      %v3111 = vld [vmem:[%s2362 + $0x68] sm:$0x1]
      %v3112 = vld [vmem:[%s2362 + $0x6c] sm:$0xe]
      %v3113 = vld [vmem:[%s2362 + $0x70] sm:$0xf]
      %v3114 = vld [vmem:[%s2362 + $0x74] sm:$0x1]
      %v3115 = vld [vmem:[%s2362 + $0x78] sm:$0xe]
      %v3116 = vld [vmem:[%s2362 + $0x7c] sm:$0xf]
      %v3117 = vld [vmem:[%s2362 + $0x80] sm:$0x1]
      %v3118 = vld [vmem:[%s2362 + $0x84] sm:$0xe]
      %v3119 = vld [vmem:[%s2362 + $0x88] sm:$0xf]
      %v3120 = vld [vmem:[%s2362 + $0x8c] sm:$0x1]
      %v3121 = vld [vmem:[%s2362 + $0x90] sm:$0xe]
      %v3122 = vld [vmem:[%s2362 + $0x94] sm:$0xf]
      %v3123 = vld [vmem:[%s2362 + $0x98] sm:$0x1]
      %v3124 = vld [vmem:[%s2362 + $0x9c] sm:$0xe]
      %v3125 = vld [vmem:[%s2362 + $0xa0] sm:$0xf]
      %v3126 = vld [vmem:[%s2362 + $0xa4] sm:$0x1]
      %v3127 = vld [vmem:[%s2362 + $0xa8] sm:$0xe]
      %v3128 = vld [vmem:[%s2362 + $0xac] sm:$0xf]
      %v3129 = vld [vmem:[%s2362 + $0xb0] sm:$0x1]
      %v3130 = vld [vmem:[%s2362 + $0xb4] sm:$0xe]
      %v3131 = vld [vmem:[%s2362 + $0xb8] sm:$0xf]
      %v3132 = vld [vmem:[%s2362 + $0xbc] sm:$0x1]
      %v3181 = vrot.slane %v3085, 5
      %v3182 = vrot.slane %v3181, 4
      %v3183 = vrot.slane %v3086, 5
      %v3184 = vsel %vm1093, %v3182, %v3183
      %v3185 = vrot.slane %v3183, 4
      %v3186 = vrot.slane %v3087, 5
      %v3187 = vsel %vm1093, %v3185, %v3186
      %v3188 = vrot.slane %v3088, 5
      %v3189 = vrot.slane %v3188, 4
      %v3190 = vrot.slane %v3089, 5
      %v3191 = vsel %vm1093, %v3189, %v3190
      %v3192 = vrot.slane %v3190, 4
      %v3193 = vrot.slane %v3090, 5
      %v3194 = vsel %vm1093, %v3192, %v3193
      %v3195 = vrot.slane %v3091, 5
      %v3196 = vrot.slane %v3195, 4
      %v3197 = vrot.slane %v3092, 5
      %v3198 = vsel %vm1093, %v3196, %v3197
      %v3199 = vrot.slane %v3197, 4
      %v3200 = vrot.slane %v3093, 5
      %v3201 = vsel %vm1093, %v3199, %v3200
      %v3202 = vrot.slane %v3094, 5
      %v3203 = vrot.slane %v3202, 4
      %v3204 = vrot.slane %v3095, 5
      %v3205 = vsel %vm1093, %v3203, %v3204
      %v3206 = vrot.slane %v3204, 4
      %v3207 = vrot.slane %v3096, 5
      %v3208 = vsel %vm1093, %v3206, %v3207
      %v3209 = vrot.slane %v3097, 5
      %v3210 = vrot.slane %v3209, 4
      %v3211 = vrot.slane %v3098, 5
      %v3212 = vsel %vm1093, %v3210, %v3211
      %v3213 = vrot.slane %v3211, 4
      %v3214 = vrot.slane %v3099, 5
      %v3215 = vsel %vm1093, %v3213, %v3214
      %v3216 = vrot.slane %v3100, 5
      %v3217 = vrot.slane %v3216, 4
      %v3218 = vrot.slane %v3101, 5
      %v3219 = vsel %vm1093, %v3217, %v3218
      %v3220 = vrot.slane %v3218, 4
      %v3221 = vrot.slane %v3102, 5
      %v3222 = vsel %vm1093, %v3220, %v3221
      %v3223 = vrot.slane %v3103, 5
      %v3224 = vrot.slane %v3223, 4
      %v3225 = vrot.slane %v3104, 5
      %v3226 = vsel %vm1093, %v3224, %v3225
      %v3227 = vrot.slane %v3225, 4
      %v3228 = vrot.slane %v3105, 5
      %v3229 = vsel %vm1093, %v3227, %v3228
      %v3230 = vrot.slane %v3106, 5
      %v3231 = vrot.slane %v3230, 4
      %v3232 = vrot.slane %v3107, 5
      %v3233 = vsel %vm1093, %v3231, %v3232
      %v3234 = vrot.slane %v3232, 4
      %v3235 = vrot.slane %v3108, 5
      %v3236 = vsel %vm1093, %v3234, %v3235
      %v3237 = vrot.slane %v3109, 5
      %v3238 = vrot.slane %v3237, 4
      %v3239 = vrot.slane %v3110, 5
      %v3240 = vsel %vm1093, %v3238, %v3239
      %v3241 = vrot.slane %v3239, 4
      %v3242 = vrot.slane %v3111, 5
      %v3243 = vsel %vm1093, %v3241, %v3242
      %v3244 = vrot.slane %v3112, 5
      %v3245 = vrot.slane %v3244, 4
      %v3246 = vrot.slane %v3113, 5
      %v3247 = vsel %vm1093, %v3245, %v3246
      %v3248 = vrot.slane %v3246, 4
      %v3249 = vrot.slane %v3114, 5
      %v3250 = vsel %vm1093, %v3248, %v3249
      %v3251 = vrot.slane %v3115, 5
      %v3252 = vrot.slane %v3251, 4
      %v3253 = vrot.slane %v3116, 5
      %v3254 = vsel %vm1093, %v3252, %v3253
      %v3255 = vrot.slane %v3253, 4
      %v3256 = vrot.slane %v3117, 5
      %v3257 = vsel %vm1093, %v3255, %v3256
      %v3258 = vrot.slane %v3118, 5
      %v3259 = vrot.slane %v3258, 4
      %v3260 = vrot.slane %v3119, 5
      %v3261 = vsel %vm1093, %v3259, %v3260
      %v3262 = vrot.slane %v3260, 4
      %v3263 = vrot.slane %v3120, 5
      %v3264 = vsel %vm1093, %v3262, %v3263
      %v3265 = vrot.slane %v3121, 5
      %v3266 = vrot.slane %v3265, 4
      %v3267 = vrot.slane %v3122, 5
      %v3268 = vsel %vm1093, %v3266, %v3267
      %v3269 = vrot.slane %v3267, 4
      %v3270 = vrot.slane %v3123, 5
      %v3271 = vsel %vm1093, %v3269, %v3270
      %v3272 = vrot.slane %v3124, 5
      %v3273 = vrot.slane %v3272, 4
      %v3274 = vrot.slane %v3125, 5
      %v3275 = vsel %vm1093, %v3273, %v3274
      %v3276 = vrot.slane %v3274, 4
      %v3277 = vrot.slane %v3126, 5
      %v3278 = vsel %vm1093, %v3276, %v3277
      %v3279 = vrot.slane %v3127, 5
      %v3280 = vrot.slane %v3279, 4
      %v3281 = vrot.slane %v3128, 5
      %v3282 = vsel %vm1093, %v3280, %v3281
      %v3283 = vrot.slane %v3281, 4
      %v3284 = vrot.slane %v3129, 5
      %v3285 = vsel %vm1093, %v3283, %v3284
      %v3286 = vrot.slane %v3130, 5
      %v3287 = vrot.slane %v3286, 4
      %v3288 = vrot.slane %v3131, 5
      %v3289 = vsel %vm1093, %v3287, %v3288
      %v3290 = vrot.slane %v3288, 4
      %v3291 = vrot.slane %v3132, 5
      %v3292 = vsel %vm1093, %v3290, %v3291
      %v3293 = vunpack.c.l.b16 %v3184
      %v3294 = vunpack.c.l.b16 %v3187
      %v3295 = vunpack.c.l.b16 %v3191
      %v3296 = vunpack.c.l.b16 %v3194
      %v3297 = vunpack.c.l.b16 %v3198
      %v3298 = vunpack.c.l.b16 %v3201
      %v3299 = vunpack.c.l.b16 %v3205
      %v3300 = vunpack.c.l.b16 %v3208
      %v3301 = vunpack.c.l.b16 %v3212
      %v3302 = vunpack.c.l.b16 %v3215
      %v3303 = vunpack.c.l.b16 %v3219
      %v3304 = vunpack.c.l.b16 %v3222
      %v3305 = vunpack.c.l.b16 %v3226
      %v3306 = vunpack.c.l.b16 %v3229
      %v3307 = vunpack.c.l.b16 %v3233
      %v3308 = vunpack.c.l.b16 %v3236
      %v3309 = vunpack.c.l.b16 %v3240
      %v3310 = vunpack.c.l.b16 %v3243
      %v3311 = vunpack.c.l.b16 %v3247
      %v3312 = vunpack.c.l.b16 %v3250
      %v3313 = vunpack.c.l.b16 %v3254
      %v3314 = vunpack.c.l.b16 %v3257
      %v3315 = vunpack.c.l.b16 %v3261
      %v3316 = vunpack.c.l.b16 %v3264
      %v3317 = vunpack.c.l.b16 %v3268
      %v3318 = vunpack.c.l.b16 %v3271
      %v3319 = vunpack.c.l.b16 %v3275
      %v3320 = vunpack.c.l.b16 %v3278
      %v3321 = vunpack.c.l.b16 %v3282
      %v3322 = vunpack.c.l.b16 %v3285
      %v3323 = vunpack.c.l.b16 %v3289
      %v3324 = vunpack.c.l.b16 %v3292
      %v3325 = vpack.c.b16 %v3294, %v3293
      %v3326 = vpack.c.b16 %v3296, %v3295
      %v3327 = vpack.c.b16 %v3298, %v3297
      %v3328 = vpack.c.b16 %v3300, %v3299
      %v3329 = vpack.c.b16 %v3302, %v3301
      %v3330 = vpack.c.b16 %v3304, %v3303
      %v3331 = vpack.c.b16 %v3306, %v3305
      %v3332 = vpack.c.b16 %v3308, %v3307
      %v3333 = vpack.c.b16 %v3310, %v3309
      %v3334 = vpack.c.b16 %v3312, %v3311
      %v3335 = vpack.c.b16 %v3314, %v3313
      %v3336 = vpack.c.b16 %v3316, %v3315
      %v3337 = vpack.c.b16 %v3318, %v3317
      %v3338 = vpack.c.b16 %v3320, %v3319
      %v3339 = vpack.c.b16 %v3322, %v3321
      %v3340 = vpack.c.b16 %v3324, %v3323
      %3341 = vrot.lane.b32.xlu0 %v3325, 32
      %v3342 = vpop.permute.xlu0 %3341
      %3343 = vrot.lane.b32.xlu0 %v3326, 32
      %v3344 = vpop.permute.xlu0 %3343
      %3345 = vrot.lane.b32.xlu0 %v3327, 32
      %v3346 = vpop.permute.xlu0 %3345
      %3347 = vrot.lane.b32.xlu0 %v3328, 32
      %v3348 = vpop.permute.xlu0 %3347
      %3349 = vrot.lane.b32.xlu0 %v3329, 32
      %v3350 = vpop.permute.xlu0 %3349
      %3351 = vrot.lane.b32.xlu0 %v3330, 32
      %v3352 = vpop.permute.xlu0 %3351
      %3353 = vrot.lane.b32.xlu0 %v3331, 32
      %v3354 = vpop.permute.xlu0 %3353
      %3355 = vrot.lane.b32.xlu0 %v3332, 32
      %v3356 = vpop.permute.xlu0 %3355
      %3357 = vrot.lane.b32.xlu0 %v3333, 32
      %v3358 = vpop.permute.xlu0 %3357
      %3359 = vrot.lane.b32.xlu0 %v3334, 32
      %v3360 = vpop.permute.xlu0 %3359
      %3361 = vrot.lane.b32.xlu0 %v3335, 32
      %v3362 = vpop.permute.xlu0 %3361
      %3363 = vrot.lane.b32.xlu0 %v3336, 32
      %v3364 = vpop.permute.xlu0 %3363
      %3365 = vrot.lane.b32.xlu0 %v3337, 32
      %v3366 = vpop.permute.xlu0 %3365
      %3367 = vrot.lane.b32.xlu0 %v3338, 32
      %v3368 = vpop.permute.xlu0 %3367
      %3369 = vrot.lane.b32.xlu0 %v3339, 32
      %v3370 = vpop.permute.xlu0 %3369
      %3371 = vrot.lane.b32.xlu0 %v3340, 32
      %v3372 = vpop.permute.xlu0 %3371
      %vm3389 = vcmask 294144
      %3390 = vst.msk [vmem:[#allocation3] sm:$0xff] %vm3389, %v3342
      %3391 = vst.msk [vmem:[#allocation3 + $0x8] sm:$0xff] %vm3389, %v3344
      %3392 = vst.msk [vmem:[#allocation3 + $0x10] sm:$0xff] %vm3389, %v3346
      %3393 = vst.msk [vmem:[#allocation3 + $0x18] sm:$0xff] %vm3389, %v3348
      %3394 = vst.msk [vmem:[#allocation3 + $0x20] sm:$0xff] %vm3389, %v3350
      %3395 = vst.msk [vmem:[#allocation3 + $0x28] sm:$0xff] %vm3389, %v3352
      %3396 = vst.msk [vmem:[#allocation3 + $0x30] sm:$0xff] %vm3389, %v3354
      %3397 = vst.msk [vmem:[#allocation3 + $0x38] sm:$0xff] %vm3389, %v3356
      %3398 = vst.msk [vmem:[#allocation3 + $0x40] sm:$0xff] %vm3389, %v3358
      %3399 = vst.msk [vmem:[#allocation3 + $0x48] sm:$0xff] %vm3389, %v3360
      %3400 = vst.msk [vmem:[#allocation3 + $0x50] sm:$0xff] %vm3389, %v3362
      %3401 = vst.msk [vmem:[#allocation3 + $0x58] sm:$0xff] %vm3389, %v3364
      %3402 = vst.msk [vmem:[#allocation3 + $0x60] sm:$0xff] %vm3389, %v3366
      %3403 = vst.msk [vmem:[#allocation3 + $0x68] sm:$0xff] %vm3389, %v3368
      %3404 = vst.msk [vmem:[#allocation3 + $0x70] sm:$0xff] %vm3389, %v3370
      %3405 = vst.msk [vmem:[#allocation3 + $0x78] sm:$0xff] %vm3389, %v3372
      %v3406 = vld [vmem:[#allocation3] sm:$0xff]
      %v3407 = vld [vmem:[#allocation3 + $0x8] sm:$0xff]
      %v3408 = vld [vmem:[#allocation3 + $0x10] sm:$0xff]
      %v3409 = vld [vmem:[#allocation3 + $0x18] sm:$0xff]
      %v3410 = vld [vmem:[#allocation3 + $0x20] sm:$0xff]
      %v3411 = vld [vmem:[#allocation3 + $0x28] sm:$0xff]
      %v3412 = vld [vmem:[#allocation3 + $0x30] sm:$0xff]
      %v3413 = vld [vmem:[#allocation3 + $0x38] sm:$0xff]
      %v3414 = vld [vmem:[#allocation3 + $0x40] sm:$0xff]
      %v3415 = vld [vmem:[#allocation3 + $0x48] sm:$0xff]
      %v3416 = vld [vmem:[#allocation3 + $0x50] sm:$0xff]
      %v3417 = vld [vmem:[#allocation3 + $0x58] sm:$0xff]
      %v3418 = vld [vmem:[#allocation3 + $0x60] sm:$0xff]
      %v3419 = vld [vmem:[#allocation3 + $0x68] sm:$0xff]
      %v3420 = vld [vmem:[#allocation3 + $0x70] sm:$0xff]
      %v3421 = vld [vmem:[#allocation3 + $0x78] sm:$0xff]
      %v3422 = vld [vmem:[%s1] sm:$0xf]
      %v3423 = vld [vmem:[%s1 + $0x4] sm:$0xf]
      %v3424 = vld [vmem:[%s1 + $0x8] sm:$0xf]
      %v3425 = vld [vmem:[%s1 + $0xc] sm:$0xf]
      %v3426 = vld [vmem:[%s1 + $0x10] sm:$0x3]
      %v3427 = vld [vmem:[%s4] sm:$0x1]
      %v3429 = vlaneseq
      %v3430 = vshrl.u32 %v3429, 7
      %v3431 = vsub.s32 0, %v3430
      %v3432 = vrot.slane %v3427, %v3431
      %v3439 = vunpack.c.l.b16 %v3422
      %v3440 = vunpack.c.l.b16 %v3423
      %v3441 = vunpack.c.l.b16 %v3424
      %v3442 = vunpack.c.l.b16 %v3425
      %v3443 = vunpack.c.l.b16 %v3426
      %v3444 = vpack.c.b16 %v3440, %v3439
      %v3445 = vpack.c.b16 %v3442, %v3441
      %v3446 = vpack.c.b16 %v3443, %v3443
      %vm3449 = vcmask 293888
      %v3451 = vsel %vm3449, %v3406, 0
      %v3454 = vsel %vm3449, %v3407, 0
      %v3457 = vsel %vm3449, %v3408, 0
      %v3460 = vsel %vm3449, %v3409, 0
      %v3463 = vsel %vm3449, %v3410, 0
      %v3466 = vsel %vm3449, %v3411, 0
      %v3469 = vsel %vm3449, %v3412, 0
      %v3472 = vsel %vm3449, %v3413, 0
      %v3475 = vsel %vm3449, %v3414, 0
      %v3478 = vsel %vm3449, %v3415, 0
      %v3481 = vsel %vm3449, %v3416, 0
      %v3484 = vsel %vm3449, %v3417, 0
      %v3487 = vsel %vm3449, %v3418, 0
      %v3490 = vsel %vm3449, %v3419, 0
      %v3493 = vsel %vm3449, %v3420, 0
      %v3496 = vsel %vm3449, %v3421, 0
      %vm3498 = vcmask 1041408
      %v3500 = vsel %vm3498, %v3446, 0
      %3502 = vmatprep.subr.bf16.mxu0 0
      %3503 = vmatpush1.bf16.msra.mxu0 %v3444
      %3504 = vmatprep.subr.bf16.mxu0 0
      %3505 = vmatpush1.bf16.msra.mxu0 %v3445
      %3506 = vmatprep.subr.bf16.mxu0 0
      %3507 = vmatpush1.bf16.msra.mxu0 %v3500
      %3508 = vmatprep.subr.bf16.mxu0 0
      %3509 = vmatpush1.bf16.msra.mxu0 0
      %3510 = vmatprep.subr.bf16.mxu0 0
      %3511 = vmatpush1.bf16.msra.mxu0 0
      %3512 = vmatprep.subr.bf16.mxu0 0
      %3513 = vmatpush1.bf16.msra.mxu0 0
      %3514 = vmatprep.subr.bf16.mxu0 0
      %3515 = vmatpush1.bf16.msra.mxu0 0
      %3516 = vmatprep.subr.bf16.mxu0 0
      %3517 = vmatpush1.bf16.msra.mxu0 0
      %3518 = vmatprep.subr.bf16.mxu0 0
      %3519 = vmatpush1.bf16.msra.mxu0 0
      %3520 = vmatprep.subr.bf16.mxu0 0
      %3521 = vmatpush1.bf16.msra.mxu0 0
      %3522 = vmatprep.subr.bf16.mxu0 0
      %3523 = vmatpush1.bf16.msra.mxu0 0
      %3524 = vmatprep.subr.bf16.mxu0 0
      %3525 = vmatpush1.bf16.msra.mxu0 0
      %3526 = vmatprep.subr.bf16.mxu0 0
      %3527 = vmatpush1.bf16.msra.mxu0 0
      %3528 = vmatprep.subr.bf16.mxu0 0
      %3529 = vmatpush1.bf16.msra.mxu0 0
      %3530 = vmatprep.subr.bf16.mxu0 0
      %3531 = vmatpush1.bf16.msra.mxu0 0
      %3532 = vmatprep.subr.bf16.mxu0 0
      %3533 = vmatpush1.bf16.msra.mxu0 0
      %3534 = vmatprep.mubr.bf16.mxu0 0
      %3535 = vmatmul.mubr.bf16.gmra.mrb[0].mxu0 %v3451
      %v3536 = vpop.f32.mrb[0].mxu0
      %v3537 = vadd.f32 %v3432, %v3536
      %v3538 = vpop.f32.mrb[0].mxu0
      %v3539 = vpop.f32.mrb[0].mxu0
      %v3540 = vadd.f32 %v3432, %v3539
      %v3541 = vpop.f32.mrb[0].mxu0
      %3542 = vmatprep.mubr.bf16.mxu0 0
      %3543 = vmatmul.mubr.bf16.gmra.mrb[0].mxu0 %v3454
      %v3544 = vpop.f32.mrb[0].mxu0
      %v3545 = vadd.f32 %v3432, %v3544
      %v3546 = vpop.f32.mrb[0].mxu0
      %v3547 = vpop.f32.mrb[0].mxu0
      %v3548 = vadd.f32 %v3432, %v3547
      %v3549 = vpop.f32.mrb[0].mxu0
      %3550 = vmatprep.mubr.bf16.mxu0 0
      %3551 = vmatmul.mubr.bf16.gmra.mrb[0].mxu0 %v3457
      %v3552 = vpop.f32.mrb[0].mxu0
      %v3553 = vadd.f32 %v3432, %v3552
      %v3554 = vpop.f32.mrb[0].mxu0
      %v3555 = vpop.f32.mrb[0].mxu0
      %v3556 = vadd.f32 %v3432, %v3555
      %v3557 = vpop.f32.mrb[0].mxu0
      %3558 = vmatprep.mubr.bf16.mxu0 0
      %3559 = vmatmul.mubr.bf16.gmra.mrb[0].mxu0 %v3460
      %v3560 = vpop.f32.mrb[0].mxu0
      %v3561 = vadd.f32 %v3432, %v3560
      %v3562 = vpop.f32.mrb[0].mxu0
      %v3563 = vpop.f32.mrb[0].mxu0
      %v3564 = vadd.f32 %v3432, %v3563
      %v3565 = vpop.f32.mrb[0].mxu0
      %3566 = vmatprep.mubr.bf16.mxu0 0
      %3567 = vmatmul.mubr.bf16.gmra.mrb[0].mxu0 %v3463
      %v3568 = vpop.f32.mrb[0].mxu0
      %v3569 = vadd.f32 %v3432, %v3568
      %v3570 = vpop.f32.mrb[0].mxu0
      %v3571 = vpop.f32.mrb[0].mxu0
      %v3572 = vadd.f32 %v3432, %v3571
      %v3573 = vpop.f32.mrb[0].mxu0
      %3574 = vmatprep.mubr.bf16.mxu0 0
      %3575 = vmatmul.mubr.bf16.gmra.mrb[0].mxu0 %v3466
      %v3576 = vpop.f32.mrb[0].mxu0
      %v3577 = vadd.f32 %v3432, %v3576
      %v3578 = vpop.f32.mrb[0].mxu0
      %v3579 = vpop.f32.mrb[0].mxu0
      %v3580 = vadd.f32 %v3432, %v3579
      %v3581 = vpop.f32.mrb[0].mxu0
      %3582 = vmatprep.mubr.bf16.mxu0 0
      %3583 = vmatmul.mubr.bf16.gmra.mrb[0].mxu0 %v3469
      %v3584 = vpop.f32.mrb[0].mxu0
      %v3585 = vadd.f32 %v3432, %v3584
      %v3586 = vpop.f32.mrb[0].mxu0
      %v3587 = vpop.f32.mrb[0].mxu0
      %v3588 = vadd.f32 %v3432, %v3587
      %v3589 = vpop.f32.mrb[0].mxu0
      %3590 = vmatprep.mubr.bf16.mxu0 0
      %3591 = vmatmul.mubr.bf16.gmra.mrb[0].mxu0 %v3472
      %v3592 = vpop.f32.mrb[0].mxu0
      %v3593 = vadd.f32 %v3432, %v3592
      %v3594 = vpop.f32.mrb[0].mxu0
      %v3595 = vpop.f32.mrb[0].mxu0
      %v3596 = vadd.f32 %v3432, %v3595
      %v3597 = vpop.f32.mrb[0].mxu0
      %3598 = vmatprep.mubr.bf16.mxu0 0
      %3599 = vmatmul.mubr.bf16.gmra.mrb[0].mxu0 %v3475
      %v3600 = vpop.f32.mrb[0].mxu0
      %v3601 = vadd.f32 %v3432, %v3600
      %v3602 = vpop.f32.mrb[0].mxu0
      %v3603 = vpop.f32.mrb[0].mxu0
      %v3604 = vadd.f32 %v3432, %v3603
      %v3605 = vpop.f32.mrb[0].mxu0
      %3606 = vmatprep.mubr.bf16.mxu0 0
      %3607 = vmatmul.mubr.bf16.gmra.mrb[0].mxu0 %v3478
      %v3608 = vpop.f32.mrb[0].mxu0
      %v3609 = vadd.f32 %v3432, %v3608
      %v3610 = vpop.f32.mrb[0].mxu0
      %v3611 = vpop.f32.mrb[0].mxu0
      %v3612 = vadd.f32 %v3432, %v3611
      %v3613 = vpop.f32.mrb[0].mxu0
      %3614 = vmatprep.mubr.bf16.mxu0 0
      %3615 = vmatmul.mubr.bf16.gmra.mrb[0].mxu0 %v3481
      %v3616 = vpop.f32.mrb[0].mxu0
      %v3617 = vadd.f32 %v3432, %v3616
      %v3618 = vpop.f32.mrb[0].mxu0
      %v3619 = vpop.f32.mrb[0].mxu0
      %v3620 = vadd.f32 %v3432, %v3619
      %v3621 = vpop.f32.mrb[0].mxu0
      %3622 = vmatprep.mubr.bf16.mxu0 0
      %3623 = vmatmul.mubr.bf16.gmra.mrb[0].mxu0 %v3484
      %v3624 = vpop.f32.mrb[0].mxu0
      %v3625 = vadd.f32 %v3432, %v3624
      %v3626 = vpop.f32.mrb[0].mxu0
      %v3627 = vpop.f32.mrb[0].mxu0
      %v3628 = vadd.f32 %v3432, %v3627
      %v3629 = vpop.f32.mrb[0].mxu0
      %3630 = vmatprep.mubr.bf16.mxu0 0
      %3631 = vmatmul.mubr.bf16.gmra.mrb[0].mxu0 %v3487
      %v3632 = vpop.f32.mrb[0].mxu0
      %v3633 = vadd.f32 %v3432, %v3632
      %v3634 = vpop.f32.mrb[0].mxu0
      %v3635 = vpop.f32.mrb[0].mxu0
      %v3636 = vadd.f32 %v3432, %v3635
      %v3637 = vpop.f32.mrb[0].mxu0
      %3638 = vmatprep.mubr.bf16.mxu0 0
      %3639 = vmatmul.mubr.bf16.gmra.mrb[0].mxu0 %v3490
      %v3640 = vpop.f32.mrb[0].mxu0
      %v3641 = vadd.f32 %v3432, %v3640
      %v3642 = vpop.f32.mrb[0].mxu0
      %v3643 = vpop.f32.mrb[0].mxu0
      %v3644 = vadd.f32 %v3432, %v3643
      %v3645 = vpop.f32.mrb[0].mxu0
      %3646 = vmatprep.mubr.bf16.mxu0 0
      %3647 = vmatmul.mubr.bf16.gmra.mrb[0].mxu0 %v3493
      %v3648 = vpop.f32.mrb[0].mxu0
      %v3649 = vadd.f32 %v3432, %v3648
      %v3650 = vpop.f32.mrb[0].mxu0
      %v3651 = vpop.f32.mrb[0].mxu0
      %v3652 = vadd.f32 %v3432, %v3651
      %v3653 = vpop.f32.mrb[0].mxu0
      %3654 = vmatprep.mubr.bf16.mxu0 0
      %3655 = vmatmul.mubr.bf16.gmra.mrb[0].mxu0 %v3496
      %v3656 = vpop.f32.mrb[0].mxu0
      %v3657 = vadd.f32 %v3432, %v3656
      %v3658 = vpop.f32.mrb[0].mxu0
      %v3659 = vpop.f32.mrb[0].mxu0
      %v3660 = vadd.f32 %v3432, %v3659
      %v3661 = vpop.f32.mrb[0].mxu0
      %3662 = vdwg.mxu0
      %v3663 = vmax.f32 %v3537, 0.0
      %v3664 = vmax.f32 %v3540, 0.0
      %v3665 = vmax.f32 %v3545, 0.0
      %v3666 = vmax.f32 %v3548, 0.0
      %v3667 = vmax.f32 %v3553, 0.0
      %v3668 = vmax.f32 %v3556, 0.0
      %v3669 = vmax.f32 %v3561, 0.0
      %v3670 = vmax.f32 %v3564, 0.0
      %v3671 = vmax.f32 %v3569, 0.0
      %v3672 = vmax.f32 %v3572, 0.0
      %v3673 = vmax.f32 %v3577, 0.0
      %v3674 = vmax.f32 %v3580, 0.0
      %v3675 = vmax.f32 %v3585, 0.0
      %v3676 = vmax.f32 %v3588, 0.0
      %v3677 = vmax.f32 %v3593, 0.0
      %v3678 = vmax.f32 %v3596, 0.0
      %v3679 = vmax.f32 %v3601, 0.0
      %v3680 = vmax.f32 %v3604, 0.0
      %v3681 = vmax.f32 %v3609, 0.0
      %v3682 = vmax.f32 %v3612, 0.0
      %v3683 = vmax.f32 %v3617, 0.0
      %v3684 = vmax.f32 %v3620, 0.0
      %v3685 = vmax.f32 %v3625, 0.0
      %v3686 = vmax.f32 %v3628, 0.0
      %v3687 = vmax.f32 %v3633, 0.0
      %v3688 = vmax.f32 %v3636, 0.0
      %v3689 = vmax.f32 %v3641, 0.0
      %v3690 = vmax.f32 %v3644, 0.0
      %v3691 = vmax.f32 %v3649, 0.0
      %v3692 = vmax.f32 %v3652, 0.0
      %v3693 = vmax.f32 %v3657, 0.0
      %v3694 = vmax.f32 %v3660, 0.0
      %vm3695 = vcmask 64512
      %3696 = vst.msk [vmem:[#allocation2] sm:$0xff] %vm3695, 0
      %3697 = vst.msk [vmem:[#allocation2 + $0x8] sm:$0xff] %vm3695, 0
      %3698 = vst.msk [vmem:[#allocation2 + $0x10] sm:$0xff] %vm3695, 0
      %s3699 = scalar_lea.vmem [#allocation2], 408
      %3700 = vst.msk [vmem:[%s3699] sm:$0xff] %vm3695, 0
      %3701 = vst.msk [vmem:[%s3699 + $0x8] sm:$0xff] %vm3695, 0
      %3702 = vst.msk [vmem:[%s3699 + $0x10] sm:$0xff] %vm3695, 0
      %3703 = vst.msk [vmem:[#allocation2] sm:$0xff] %vm3695, 0
      %3704 = vst.msk [vmem:[#allocation2 + $0x18] sm:$0xff] %vm3695, 0
      %3705 = vst.msk [vmem:[#allocation2 + $0x30] sm:$0xff] %vm3695, 0
      %3706 = vst.msk [vmem:[#allocation2 + $0x48] sm:$0xff] %vm3695, 0
      %3707 = vst.msk [vmem:[#allocation2 + $0x60] sm:$0xff] %vm3695, 0
      %3708 = vst.msk [vmem:[#allocation2 + $0x78] sm:$0xff] %vm3695, 0
      %3709 = vst.msk [vmem:[#allocation2 + $0x90] sm:$0xff] %vm3695, 0
      %3710 = vst.msk [vmem:[#allocation2 + $0xa8] sm:$0xff] %vm3695, 0
      %3711 = vst.msk [vmem:[#allocation2 + $0xc0] sm:$0xff] %vm3695, 0
      %3712 = vst.msk [vmem:[#allocation2 + $0xd8] sm:$0xff] %vm3695, 0
      %3713 = vst.msk [vmem:[#allocation2 + $0xf0] sm:$0xff] %vm3695, 0
      %3714 = vst.msk [vmem:[#allocation2 + $0x108] sm:$0xff] %vm3695, 0
      %3715 = vst.msk [vmem:[#allocation2 + $0x120] sm:$0xff] %vm3695, 0
      %3716 = vst.msk [vmem:[#allocation2 + $0x138] sm:$0xff] %vm3695, 0
      %3717 = vst.msk [vmem:[#allocation2 + $0x150] sm:$0xff] %vm3695, 0
      %3718 = vst.msk [vmem:[#allocation2 + $0x168] sm:$0xff] %vm3695, 0
      %3719 = vst.msk [vmem:[#allocation2 + $0x180] sm:$0xff] %vm3695, 0
      %3720 = vst.msk [vmem:[#allocation2 + $0x198] sm:$0xff] %vm3695, 0
      %3721 = vst.msk [vmem:[#allocation2 + $0x10] sm:$0xff] %vm3695, 0
      %3722 = vst.msk [vmem:[#allocation2 + $0x28] sm:$0xff] %vm3695, 0
      %3723 = vst.msk [vmem:[#allocation2 + $0x40] sm:$0xff] %vm3695, 0
      %3724 = vst.msk [vmem:[#allocation2 + $0x58] sm:$0xff] %vm3695, 0
      %3725 = vst.msk [vmem:[#allocation2 + $0x70] sm:$0xff] %vm3695, 0
      %3726 = vst.msk [vmem:[#allocation2 + $0x88] sm:$0xff] %vm3695, 0
      %3727 = vst.msk [vmem:[#allocation2 + $0xa0] sm:$0xff] %vm3695, 0
      %3728 = vst.msk [vmem:[#allocation2 + $0xb8] sm:$0xff] %vm3695, 0
      %3729 = vst.msk [vmem:[#allocation2 + $0xd0] sm:$0xff] %vm3695, 0
      %3730 = vst.msk [vmem:[#allocation2 + $0xe8] sm:$0xff] %vm3695, 0
      %3731 = vst.msk [vmem:[#allocation2 + $0x100] sm:$0xff] %vm3695, 0
      %3732 = vst.msk [vmem:[#allocation2 + $0x118] sm:$0xff] %vm3695, 0
      %3733 = vst.msk [vmem:[#allocation2 + $0x130] sm:$0xff] %vm3695, 0
      %3734 = vst.msk [vmem:[#allocation2 + $0x148] sm:$0xff] %vm3695, 0
      %3735 = vst.msk [vmem:[#allocation2 + $0x160] sm:$0xff] %vm3695, 0
      %3736 = vst.msk [vmem:[#allocation2 + $0x178] sm:$0xff] %vm3695, 0
      %3737 = vst.msk [vmem:[#allocation2 + $0x190] sm:$0xff] %vm3695, 0
      %3738 = vst.msk [vmem:[#allocation2 + $0x1a8] sm:$0xff] %vm3695, 0
      %v3739 = vpack.c.bf16 %v3664, %v3663
      %v3740 = vpack.c.bf16 %v3666, %v3665
      %v3741 = vpack.c.bf16 %v3668, %v3667
      %v3742 = vpack.c.bf16 %v3670, %v3669
      %v3743 = vpack.c.bf16 %v3672, %v3671
      %v3744 = vpack.c.bf16 %v3674, %v3673
      %v3745 = vpack.c.bf16 %v3676, %v3675
      %v3746 = vpack.c.bf16 %v3678, %v3677
      %v3747 = vpack.c.bf16 %v3680, %v3679
      %v3748 = vpack.c.bf16 %v3682, %v3681
      %v3749 = vpack.c.bf16 %v3684, %v3683
      %v3750 = vpack.c.bf16 %v3686, %v3685
      %v3751 = vpack.c.bf16 %v3688, %v3687
      %v3752 = vpack.c.bf16 %v3690, %v3689
      %v3753 = vpack.c.bf16 %v3692, %v3691
      %v3754 = vpack.c.bf16 %v3694, %v3693
      %s3755 = scalar_lea.vmem [#allocation2], 24
      %3756 = vst.msk [vmem:[%s3755 + $0x8] sm:$0xff] %vm3695, %v3739
      %3757 = vst.msk [vmem:[%s3755 + $0x20] sm:$0xff] %vm3695, %v3740
      %3758 = vst.msk [vmem:[%s3755 + $0x38] sm:$0xff] %vm3695, %v3741
      %3759 = vst.msk [vmem:[%s3755 + $0x50] sm:$0xff] %vm3695, %v3742
      %3760 = vst.msk [vmem:[%s3755 + $0x68] sm:$0xff] %vm3695, %v3743
      %3761 = vst.msk [vmem:[%s3755 + $0x80] sm:$0xff] %vm3695, %v3744
      %3762 = vst.msk [vmem:[%s3755 + $0x98] sm:$0xff] %vm3695, %v3745
      %3763 = vst.msk [vmem:[%s3755 + $0xb0] sm:$0xff] %vm3695, %v3746
      %3764 = vst.msk [vmem:[%s3755 + $0xc8] sm:$0xff] %vm3695, %v3747
      %3765 = vst.msk [vmem:[%s3755 + $0xe0] sm:$0xff] %vm3695, %v3748
      %3766 = vst.msk [vmem:[%s3755 + $0xf8] sm:$0xff] %vm3695, %v3749
      %3767 = vst.msk [vmem:[%s3755 + $0x110] sm:$0xff] %vm3695, %v3750
      %3768 = vst.msk [vmem:[%s3755 + $0x128] sm:$0xff] %vm3695, %v3751
      %3769 = vst.msk [vmem:[%s3755 + $0x140] sm:$0xff] %vm3695, %v3752
      %3770 = vst.msk [vmem:[%s3755 + $0x158] sm:$0xff] %vm3695, %v3753
      %3771 = vst.msk [vmem:[%s3755 + $0x170] sm:$0xff] %vm3695, %v3754
      %v3772 = vld [vmem:[#allocation2] sm:$0x80]
      %v3773 = vld [vmem:[#allocation2 + $0x8] sm:$0xff]
      %v3774 = vld [vmem:[#allocation2 + $0x18] sm:$0x80]
      %v3775 = vld [vmem:[#allocation2 + $0x20] sm:$0xff]
      %v3776 = vld [vmem:[#allocation2 + $0x30] sm:$0x80]
      %v3777 = vld [vmem:[#allocation2 + $0x38] sm:$0xff]
      %v3778 = vld [vmem:[#allocation2 + $0x48] sm:$0x80]
      %v3779 = vld [vmem:[#allocation2 + $0x50] sm:$0xff]
      %v3780 = vld [vmem:[#allocation2 + $0x60] sm:$0x80]
      %v3781 = vld [vmem:[#allocation2 + $0x68] sm:$0xff]
      %v3782 = vld [vmem:[#allocation2 + $0x78] sm:$0x80]
      %v3783 = vld [vmem:[#allocation2 + $0x80] sm:$0xff]
      %v3784 = vld [vmem:[#allocation2 + $0x90] sm:$0x80]
      %v3785 = vld [vmem:[#allocation2 + $0x98] sm:$0xff]
      %v3786 = vld [vmem:[#allocation2 + $0xa8] sm:$0x80]
      %v3787 = vld [vmem:[#allocation2 + $0xb0] sm:$0xff]
      %v3788 = vld [vmem:[#allocation2 + $0xc0] sm:$0x80]
      %v3789 = vld [vmem:[#allocation2 + $0xc8] sm:$0xff]
      %v3790 = vld [vmem:[#allocation2 + $0xd8] sm:$0x80]
      %v3791 = vld [vmem:[#allocation2 + $0xe0] sm:$0xff]
      %v3792 = vld [vmem:[#allocation2 + $0xf0] sm:$0x80]
      %v3793 = vld [vmem:[#allocation2 + $0xf8] sm:$0xff]
      %v3794 = vld [vmem:[#allocation2 + $0x108] sm:$0x80]
      %v3795 = vld [vmem:[#allocation2 + $0x110] sm:$0xff]
      %v3796 = vld [vmem:[#allocation2 + $0x120] sm:$0x80]
      %v3797 = vld [vmem:[#allocation2 + $0x128] sm:$0xff]
      %v3798 = vld [vmem:[#allocation2 + $0x138] sm:$0x80]
      %v3799 = vld [vmem:[#allocation2 + $0x140] sm:$0xff]
      %v3800 = vld [vmem:[#allocation2 + $0x150] sm:$0x80]
      %v3801 = vld [vmem:[#allocation2 + $0x158] sm:$0xff]
      %v3802 = vld [vmem:[#allocation2 + $0x168] sm:$0x80]
      %v3803 = vld [vmem:[#allocation2 + $0x170] sm:$0xff]
      %vm3804 = vsmask.f32 256
      %v3806 = vshrl.u32 %v3772, 16
      %v3808 = vrot.slane %v3806, 7
      %v3810 = vshrl.u32 %v3773, 16
      %v3812 = vrot.slane %v3810, 7
      %v3813 = vshll.u32 %v3773, 16
      %v3815 = vor.u32 %v3812, %v3813
      %v3816 = vsel %vm3804, %v3808, %v3815
      %v3818 = vshrl.u32 %v3774, 16
      %v3820 = vrot.slane %v3818, 7
      %v3822 = vshrl.u32 %v3775, 16
      %v3824 = vrot.slane %v3822, 7
      %v3825 = vshll.u32 %v3775, 16
      %v3827 = vor.u32 %v3824, %v3825
      %v3828 = vsel %vm3804, %v3820, %v3827
      %v3830 = vshrl.u32 %v3776, 16
      %v3832 = vrot.slane %v3830, 7
      %v3834 = vshrl.u32 %v3777, 16
      %v3836 = vrot.slane %v3834, 7
      %v3837 = vshll.u32 %v3777, 16
      %v3839 = vor.u32 %v3836, %v3837
      %v3840 = vsel %vm3804, %v3832, %v3839
      %v3842 = vshrl.u32 %v3778, 16
      %v3844 = vrot.slane %v3842, 7
      %v3846 = vshrl.u32 %v3779, 16
      %v3848 = vrot.slane %v3846, 7
      %v3849 = vshll.u32 %v3779, 16
      %v3851 = vor.u32 %v3848, %v3849
      %v3852 = vsel %vm3804, %v3844, %v3851
      %v3854 = vshrl.u32 %v3780, 16
      %v3856 = vrot.slane %v3854, 7
      %v3858 = vshrl.u32 %v3781, 16
      %v3860 = vrot.slane %v3858, 7
      %v3861 = vshll.u32 %v3781, 16
      %v3863 = vor.u32 %v3860, %v3861
      %v3864 = vsel %vm3804, %v3856, %v3863
      %v3866 = vshrl.u32 %v3782, 16
      %v3868 = vrot.slane %v3866, 7
      %v3870 = vshrl.u32 %v3783, 16
      %v3872 = vrot.slane %v3870, 7
      %v3873 = vshll.u32 %v3783, 16
      %v3875 = vor.u32 %v3872, %v3873
      %v3876 = vsel %vm3804, %v3868, %v3875
      %v3878 = vshrl.u32 %v3784, 16
      %v3880 = vrot.slane %v3878, 7
      %v3882 = vshrl.u32 %v3785, 16
      %v3884 = vrot.slane %v3882, 7
      %v3885 = vshll.u32 %v3785, 16
      %v3887 = vor.u32 %v3884, %v3885
      %v3888 = vsel %vm3804, %v3880, %v3887
      %v3890 = vshrl.u32 %v3786, 16
      %v3892 = vrot.slane %v3890, 7
      %v3894 = vshrl.u32 %v3787, 16
      %v3896 = vrot.slane %v3894, 7
      %v3897 = vshll.u32 %v3787, 16
      %v3899 = vor.u32 %v3896, %v3897
      %v3900 = vsel %vm3804, %v3892, %v3899
      %v3902 = vshrl.u32 %v3788, 16
      %v3904 = vrot.slane %v3902, 7
      %v3906 = vshrl.u32 %v3789, 16
      %v3908 = vrot.slane %v3906, 7
      %v3909 = vshll.u32 %v3789, 16
      %v3911 = vor.u32 %v3908, %v3909
      %v3912 = vsel %vm3804, %v3904, %v3911
      %v3914 = vshrl.u32 %v3790, 16
      %v3916 = vrot.slane %v3914, 7
      %v3918 = vshrl.u32 %v3791, 16
      %v3920 = vrot.slane %v3918, 7
      %v3921 = vshll.u32 %v3791, 16
      %v3923 = vor.u32 %v3920, %v3921
      %v3924 = vsel %vm3804, %v3916, %v3923
      %v3926 = vshrl.u32 %v3792, 16
      %v3928 = vrot.slane %v3926, 7
      %v3930 = vshrl.u32 %v3793, 16
      %v3932 = vrot.slane %v3930, 7
      %v3933 = vshll.u32 %v3793, 16
      %v3935 = vor.u32 %v3932, %v3933
      %v3936 = vsel %vm3804, %v3928, %v3935
      %v3938 = vshrl.u32 %v3794, 16
      %v3940 = vrot.slane %v3938, 7
      %v3942 = vshrl.u32 %v3795, 16
      %v3944 = vrot.slane %v3942, 7
      %v3945 = vshll.u32 %v3795, 16
      %v3947 = vor.u32 %v3944, %v3945
      %v3948 = vsel %vm3804, %v3940, %v3947
      %v3950 = vshrl.u32 %v3796, 16
      %v3952 = vrot.slane %v3950, 7
      %v3954 = vshrl.u32 %v3797, 16
      %v3956 = vrot.slane %v3954, 7
      %v3957 = vshll.u32 %v3797, 16
      %v3959 = vor.u32 %v3956, %v3957
      %v3960 = vsel %vm3804, %v3952, %v3959
      %v3962 = vshrl.u32 %v3798, 16
      %v3964 = vrot.slane %v3962, 7
      %v3966 = vshrl.u32 %v3799, 16
      %v3968 = vrot.slane %v3966, 7
      %v3969 = vshll.u32 %v3799, 16
      %v3971 = vor.u32 %v3968, %v3969
      %v3972 = vsel %vm3804, %v3964, %v3971
      %v3974 = vshrl.u32 %v3800, 16
      %v3976 = vrot.slane %v3974, 7
      %v3978 = vshrl.u32 %v3801, 16
      %v3980 = vrot.slane %v3978, 7
      %v3981 = vshll.u32 %v3801, 16
      %v3983 = vor.u32 %v3980, %v3981
      %v3984 = vsel %vm3804, %v3976, %v3983
      %v3986 = vshrl.u32 %v3802, 16
      %v3988 = vrot.slane %v3986, 7
      %v3990 = vshrl.u32 %v3803, 16
      %v3992 = vrot.slane %v3990, 7
      %v3993 = vshll.u32 %v3803, 16
      %v3995 = vor.u32 %v3992, %v3993
      %v3996 = vsel %vm3804, %v3988, %v3995
      %4013 = vst.msk [vmem:[#allocation4] sm:$0xff] %vm3695, %v3816
      %4014 = vst.msk [vmem:[#allocation4 + $0x8] sm:$0xff] %vm3695, %v3828
      %4015 = vst.msk [vmem:[#allocation4 + $0x10] sm:$0xff] %vm3695, %v3840
      %4016 = vst.msk [vmem:[#allocation4 + $0x18] sm:$0xff] %vm3695, %v3852
      %4017 = vst.msk [vmem:[#allocation4 + $0x20] sm:$0xff] %vm3695, %v3864
      %4018 = vst.msk [vmem:[#allocation4 + $0x28] sm:$0xff] %vm3695, %v3876
      %4019 = vst.msk [vmem:[#allocation4 + $0x30] sm:$0xff] %vm3695, %v3888
      %4020 = vst.msk [vmem:[#allocation4 + $0x38] sm:$0xff] %vm3695, %v3900
      %4021 = vst.msk [vmem:[#allocation4 + $0x40] sm:$0xff] %vm3695, %v3912
      %4022 = vst.msk [vmem:[#allocation4 + $0x48] sm:$0xff] %vm3695, %v3924
      %4023 = vst.msk [vmem:[#allocation4 + $0x50] sm:$0xff] %vm3695, %v3936
      %4024 = vst.msk [vmem:[#allocation4 + $0x58] sm:$0xff] %vm3695, %v3948
      %4025 = vst.msk [vmem:[#allocation4 + $0x60] sm:$0xff] %vm3695, %v3960
      %4026 = vst.msk [vmem:[#allocation4 + $0x68] sm:$0xff] %vm3695, %v3972
      %4027 = vst.msk [vmem:[#allocation4 + $0x70] sm:$0xff] %vm3695, %v3984
      %4028 = vst.msk [vmem:[#allocation4 + $0x78] sm:$0xff] %vm3695, %v3996
      %v4029 = vld [vmem:[#allocation2 + $0x8] sm:$0xff]
      %v4030 = vld [vmem:[#allocation2 + $0x20] sm:$0xff]
      %v4031 = vld [vmem:[#allocation2 + $0x38] sm:$0xff]
      %v4032 = vld [vmem:[#allocation2 + $0x50] sm:$0xff]
      %v4033 = vld [vmem:[#allocation2 + $0x68] sm:$0xff]
      %v4034 = vld [vmem:[#allocation2 + $0x80] sm:$0xff]
      %v4035 = vld [vmem:[#allocation2 + $0x98] sm:$0xff]
      %v4036 = vld [vmem:[#allocation2 + $0xb0] sm:$0xff]
      %v4037 = vld [vmem:[#allocation2 + $0xc8] sm:$0xff]
      %v4038 = vld [vmem:[#allocation2 + $0xe0] sm:$0xff]
      %v4039 = vld [vmem:[#allocation2 + $0xf8] sm:$0xff]
      %v4040 = vld [vmem:[#allocation2 + $0x110] sm:$0xff]
      %v4041 = vld [vmem:[#allocation2 + $0x128] sm:$0xff]
      %v4042 = vld [vmem:[#allocation2 + $0x140] sm:$0xff]
      %v4043 = vld [vmem:[#allocation2 + $0x158] sm:$0xff]
      %v4044 = vld [vmem:[#allocation2 + $0x170] sm:$0xff]
      %4061 = vrot.lane.b32.xlu0 %v4029, 8
      %v4062 = vpop.permute.xlu0 %4061
      %4063 = vrot.lane.b32.xlu0 %v4030, 8
      %v4064 = vpop.permute.xlu0 %4063
      %4065 = vrot.lane.b32.xlu0 %v4031, 8
      %v4066 = vpop.permute.xlu0 %4065
      %4067 = vrot.lane.b32.xlu0 %v4032, 8
      %v4068 = vpop.permute.xlu0 %4067
      %4069 = vrot.lane.b32.xlu0 %v4033, 8
      %v4070 = vpop.permute.xlu0 %4069
      %4071 = vrot.lane.b32.xlu0 %v4034, 8
      %v4072 = vpop.permute.xlu0 %4071
      %4073 = vrot.lane.b32.xlu0 %v4035, 8
      %v4074 = vpop.permute.xlu0 %4073
      %4075 = vrot.lane.b32.xlu0 %v4036, 8
      %v4076 = vpop.permute.xlu0 %4075
      %4077 = vrot.lane.b32.xlu0 %v4037, 8
      %v4078 = vpop.permute.xlu0 %4077
      %4079 = vrot.lane.b32.xlu0 %v4038, 8
      %v4080 = vpop.permute.xlu0 %4079
      %4081 = vrot.lane.b32.xlu0 %v4039, 8
      %v4082 = vpop.permute.xlu0 %4081
      %4083 = vrot.lane.b32.xlu0 %v4040, 8
      %v4084 = vpop.permute.xlu0 %4083
      %4085 = vrot.lane.b32.xlu0 %v4041, 8
      %v4086 = vpop.permute.xlu0 %4085
      %4087 = vrot.lane.b32.xlu0 %v4042, 8
      %v4088 = vpop.permute.xlu0 %4087
      %4089 = vrot.lane.b32.xlu0 %v4043, 8
      %v4090 = vpop.permute.xlu0 %4089
      %4091 = vrot.lane.b32.xlu0 %v4044, 8
      %v4092 = vpop.permute.xlu0 %4091
      %vm4109 = vcmask 130112
      %4110 = vst.msk [vmem:[#allocation4] sm:$0xff] %vm4109, %v4062
      %4111 = vst.msk [vmem:[#allocation4 + $0x8] sm:$0xff] %vm4109, %v4064
      %4112 = vst.msk [vmem:[#allocation4 + $0x10] sm:$0xff] %vm4109, %v4066
      %4113 = vst.msk [vmem:[#allocation4 + $0x18] sm:$0xff] %vm4109, %v4068
      %4114 = vst.msk [vmem:[#allocation4 + $0x20] sm:$0xff] %vm4109, %v4070
      %4115 = vst.msk [vmem:[#allocation4 + $0x28] sm:$0xff] %vm4109, %v4072
      %4116 = vst.msk [vmem:[#allocation4 + $0x30] sm:$0xff] %vm4109, %v4074
      %4117 = vst.msk [vmem:[#allocation4 + $0x38] sm:$0xff] %vm4109, %v4076
      %4118 = vst.msk [vmem:[#allocation4 + $0x40] sm:$0xff] %vm4109, %v4078
      %4119 = vst.msk [vmem:[#allocation4 + $0x48] sm:$0xff] %vm4109, %v4080
      %4120 = vst.msk [vmem:[#allocation4 + $0x50] sm:$0xff] %vm4109, %v4082
      %4121 = vst.msk [vmem:[#allocation4 + $0x58] sm:$0xff] %vm4109, %v4084
      %4122 = vst.msk [vmem:[#allocation4 + $0x60] sm:$0xff] %vm4109, %v4086
      %4123 = vst.msk [vmem:[#allocation4 + $0x68] sm:$0xff] %vm4109, %v4088
      %4124 = vst.msk [vmem:[#allocation4 + $0x70] sm:$0xff] %vm4109, %v4090
      %4125 = vst.msk [vmem:[#allocation4 + $0x78] sm:$0xff] %vm4109, %v4092
      %v4126 = vld [vmem:[#allocation2 + $0x8] sm:$0xff]
      %v4127 = vld [vmem:[#allocation2 + $0x10] sm:$0x1]
      %v4128 = vld [vmem:[#allocation2 + $0x20] sm:$0xff]
      %v4129 = vld [vmem:[#allocation2 + $0x28] sm:$0x1]
      %v4130 = vld [vmem:[#allocation2 + $0x38] sm:$0xff]
      %v4131 = vld [vmem:[#allocation2 + $0x40] sm:$0x1]
      %v4132 = vld [vmem:[#allocation2 + $0x50] sm:$0xff]
      %v4133 = vld [vmem:[#allocation2 + $0x58] sm:$0x1]
      %v4134 = vld [vmem:[#allocation2 + $0x68] sm:$0xff]
      %v4135 = vld [vmem:[#allocation2 + $0x70] sm:$0x1]
      %v4136 = vld [vmem:[#allocation2 + $0x80] sm:$0xff]
      %v4137 = vld [vmem:[#allocation2 + $0x88] sm:$0x1]
      %v4138 = vld [vmem:[#allocation2 + $0x98] sm:$0xff]
      %v4139 = vld [vmem:[#allocation2 + $0xa0] sm:$0x1]
      %v4140 = vld [vmem:[#allocation2 + $0xb0] sm:$0xff]
      %v4141 = vld [vmem:[#allocation2 + $0xb8] sm:$0x1]
      %v4142 = vld [vmem:[#allocation2 + $0xc8] sm:$0xff]
      %v4143 = vld [vmem:[#allocation2 + $0xd0] sm:$0x1]
      %v4144 = vld [vmem:[#allocation2 + $0xe0] sm:$0xff]
      %v4145 = vld [vmem:[#allocation2 + $0xe8] sm:$0x1]
      %v4146 = vld [vmem:[#allocation2 + $0xf8] sm:$0xff]
      %v4147 = vld [vmem:[#allocation2 + $0x100] sm:$0x1]
      %v4148 = vld [vmem:[#allocation2 + $0x110] sm:$0xff]
      %v4149 = vld [vmem:[#allocation2 + $0x118] sm:$0x1]
      %v4150 = vld [vmem:[#allocation2 + $0x128] sm:$0xff]
      %v4151 = vld [vmem:[#allocation2 + $0x130] sm:$0x1]
      %v4152 = vld [vmem:[#allocation2 + $0x140] sm:$0xff]
      %v4153 = vld [vmem:[#allocation2 + $0x148] sm:$0x1]
      %v4154 = vld [vmem:[#allocation2 + $0x158] sm:$0xff]
      %v4155 = vld [vmem:[#allocation2 + $0x160] sm:$0x1]
      %v4156 = vld [vmem:[#allocation2 + $0x170] sm:$0xff]
      %v4157 = vld [vmem:[#allocation2 + $0x178] sm:$0x1]
      %vm4158 = vsmask.f32 7424
      %v4160 = vshrl.u32 %v4126, 16
      %v4162 = vshll.u32 %v4126, 16
      %v4164 = vrot.slane %v4162, 1
      %v4165 = vor.u32 %v4160, %v4164
      %v4167 = vshll.u32 %v4127, 16
      %v4169 = vrot.slane %v4167, 1
      %v4170 = vsel %vm4158, %v4165, %v4169
      %v4172 = vshrl.u32 %v4128, 16
      %v4174 = vshll.u32 %v4128, 16
      %v4176 = vrot.slane %v4174, 1
      %v4177 = vor.u32 %v4172, %v4176
      %v4179 = vshll.u32 %v4129, 16
      %v4181 = vrot.slane %v4179, 1
      %v4182 = vsel %vm4158, %v4177, %v4181
      %v4184 = vshrl.u32 %v4130, 16
      %v4186 = vshll.u32 %v4130, 16
      %v4188 = vrot.slane %v4186, 1
      %v4189 = vor.u32 %v4184, %v4188
      %v4191 = vshll.u32 %v4131, 16
      %v4193 = vrot.slane %v4191, 1
      %v4194 = vsel %vm4158, %v4189, %v4193
      %v4196 = vshrl.u32 %v4132, 16
      %v4198 = vshll.u32 %v4132, 16
      %v4200 = vrot.slane %v4198, 1
      %v4201 = vor.u32 %v4196, %v4200
      %v4203 = vshll.u32 %v4133, 16
      %v4205 = vrot.slane %v4203, 1
      %v4206 = vsel %vm4158, %v4201, %v4205
      %v4208 = vshrl.u32 %v4134, 16
      %v4210 = vshll.u32 %v4134, 16
      %v4212 = vrot.slane %v4210, 1
      %v4213 = vor.u32 %v4208, %v4212
      %v4215 = vshll.u32 %v4135, 16
      %v4217 = vrot.slane %v4215, 1
      %v4218 = vsel %vm4158, %v4213, %v4217
      %v4220 = vshrl.u32 %v4136, 16
      %v4222 = vshll.u32 %v4136, 16
      %v4224 = vrot.slane %v4222, 1
      %v4225 = vor.u32 %v4220, %v4224
      %v4227 = vshll.u32 %v4137, 16
      %v4229 = vrot.slane %v4227, 1
      %v4230 = vsel %vm4158, %v4225, %v4229
      %v4232 = vshrl.u32 %v4138, 16
      %v4234 = vshll.u32 %v4138, 16
      %v4236 = vrot.slane %v4234, 1
      %v4237 = vor.u32 %v4232, %v4236
      %v4239 = vshll.u32 %v4139, 16
      %v4241 = vrot.slane %v4239, 1
      %v4242 = vsel %vm4158, %v4237, %v4241
      %v4244 = vshrl.u32 %v4140, 16
      %v4246 = vshll.u32 %v4140, 16
      %v4248 = vrot.slane %v4246, 1
      %v4249 = vor.u32 %v4244, %v4248
      %v4251 = vshll.u32 %v4141, 16
      %v4253 = vrot.slane %v4251, 1
      %v4254 = vsel %vm4158, %v4249, %v4253
      %v4256 = vshrl.u32 %v4142, 16
      %v4258 = vshll.u32 %v4142, 16
      %v4260 = vrot.slane %v4258, 1
      %v4261 = vor.u32 %v4256, %v4260
      %v4263 = vshll.u32 %v4143, 16
      %v4265 = vrot.slane %v4263, 1
      %v4266 = vsel %vm4158, %v4261, %v4265
      %v4268 = vshrl.u32 %v4144, 16
      %v4270 = vshll.u32 %v4144, 16
      %v4272 = vrot.slane %v4270, 1
      %v4273 = vor.u32 %v4268, %v4272
      %v4275 = vshll.u32 %v4145, 16
      %v4277 = vrot.slane %v4275, 1
      %v4278 = vsel %vm4158, %v4273, %v4277
      %v4280 = vshrl.u32 %v4146, 16
      %v4282 = vshll.u32 %v4146, 16
      %v4284 = vrot.slane %v4282, 1
      %v4285 = vor.u32 %v4280, %v4284
      %v4287 = vshll.u32 %v4147, 16
      %v4289 = vrot.slane %v4287, 1
      %v4290 = vsel %vm4158, %v4285, %v4289
      %v4292 = vshrl.u32 %v4148, 16
      %v4294 = vshll.u32 %v4148, 16
      %v4296 = vrot.slane %v4294, 1
      %v4297 = vor.u32 %v4292, %v4296
      %v4299 = vshll.u32 %v4149, 16
      %v4301 = vrot.slane %v4299, 1
      %v4302 = vsel %vm4158, %v4297, %v4301
      %v4304 = vshrl.u32 %v4150, 16
      %v4306 = vshll.u32 %v4150, 16
      %v4308 = vrot.slane %v4306, 1
      %v4309 = vor.u32 %v4304, %v4308
      %v4311 = vshll.u32 %v4151, 16
      %v4313 = vrot.slane %v4311, 1
      %v4314 = vsel %vm4158, %v4309, %v4313
      %v4316 = vshrl.u32 %v4152, 16
      %v4318 = vshll.u32 %v4152, 16
      %v4320 = vrot.slane %v4318, 1
      %v4321 = vor.u32 %v4316, %v4320
      %v4323 = vshll.u32 %v4153, 16
      %v4325 = vrot.slane %v4323, 1
      %v4326 = vsel %vm4158, %v4321, %v4325
      %v4328 = vshrl.u32 %v4154, 16
      %v4330 = vshll.u32 %v4154, 16
      %v4332 = vrot.slane %v4330, 1
      %v4333 = vor.u32 %v4328, %v4332
      %v4335 = vshll.u32 %v4155, 16
      %v4337 = vrot.slane %v4335, 1
      %v4338 = vsel %vm4158, %v4333, %v4337
      %v4340 = vshrl.u32 %v4156, 16
      %v4342 = vshll.u32 %v4156, 16
      %v4344 = vrot.slane %v4342, 1
      %v4345 = vor.u32 %v4340, %v4344
      %v4347 = vshll.u32 %v4157, 16
      %v4349 = vrot.slane %v4347, 1
      %v4350 = vsel %vm4158, %v4345, %v4349
      %4351 = vrot.lane.b32.xlu0 %v4170, 16
      %v4352 = vpop.permute.xlu0 %4351
      %4353 = vrot.lane.b32.xlu0 %v4182, 16
      %v4354 = vpop.permute.xlu0 %4353
      %4355 = vrot.lane.b32.xlu0 %v4194, 16
      %v4356 = vpop.permute.xlu0 %4355
      %4357 = vrot.lane.b32.xlu0 %v4206, 16
      %v4358 = vpop.permute.xlu0 %4357
      %4359 = vrot.lane.b32.xlu0 %v4218, 16
      %v4360 = vpop.permute.xlu0 %4359
      %4361 = vrot.lane.b32.xlu0 %v4230, 16
      %v4362 = vpop.permute.xlu0 %4361
      %4363 = vrot.lane.b32.xlu0 %v4242, 16
      %v4364 = vpop.permute.xlu0 %4363
      %4365 = vrot.lane.b32.xlu0 %v4254, 16
      %v4366 = vpop.permute.xlu0 %4365
      %4367 = vrot.lane.b32.xlu0 %v4266, 16
      %v4368 = vpop.permute.xlu0 %4367
      %4369 = vrot.lane.b32.xlu0 %v4278, 16
      %v4370 = vpop.permute.xlu0 %4369
      %4371 = vrot.lane.b32.xlu0 %v4290, 16
      %v4372 = vpop.permute.xlu0 %4371
      %4373 = vrot.lane.b32.xlu0 %v4302, 16
      %v4374 = vpop.permute.xlu0 %4373
      %4375 = vrot.lane.b32.xlu0 %v4314, 16
      %v4376 = vpop.permute.xlu0 %4375
      %4377 = vrot.lane.b32.xlu0 %v4326, 16
      %v4378 = vpop.permute.xlu0 %4377
      %4379 = vrot.lane.b32.xlu0 %v4338, 16
      %v4380 = vpop.permute.xlu0 %4379
      %4381 = vrot.lane.b32.xlu0 %v4350, 16
      %v4382 = vpop.permute.xlu0 %4381
      %vm4399 = vcmask 195712
      %4400 = vst.msk [vmem:[#allocation4] sm:$0xff] %vm4399, %v4352
      %4401 = vst.msk [vmem:[#allocation4 + $0x8] sm:$0xff] %vm4399, %v4354
      %4402 = vst.msk [vmem:[#allocation4 + $0x10] sm:$0xff] %vm4399, %v4356
      %4403 = vst.msk [vmem:[#allocation4 + $0x18] sm:$0xff] %vm4399, %v4358
      %4404 = vst.msk [vmem:[#allocation4 + $0x20] sm:$0xff] %vm4399, %v4360
      %4405 = vst.msk [vmem:[#allocation4 + $0x28] sm:$0xff] %vm4399, %v4362
      %4406 = vst.msk [vmem:[#allocation4 + $0x30] sm:$0xff] %vm4399, %v4364
      %4407 = vst.msk [vmem:[#allocation4 + $0x38] sm:$0xff] %vm4399, %v4366
      %4408 = vst.msk [vmem:[#allocation4 + $0x40] sm:$0xff] %vm4399, %v4368
      %4409 = vst.msk [vmem:[#allocation4 + $0x48] sm:$0xff] %vm4399, %v4370
      %4410 = vst.msk [vmem:[#allocation4 + $0x50] sm:$0xff] %vm4399, %v4372
      %4411 = vst.msk [vmem:[#allocation4 + $0x58] sm:$0xff] %vm4399, %v4374
      %4412 = vst.msk [vmem:[#allocation4 + $0x60] sm:$0xff] %vm4399, %v4376
      %4413 = vst.msk [vmem:[#allocation4 + $0x68] sm:$0xff] %vm4399, %v4378
      %4414 = vst.msk [vmem:[#allocation4 + $0x70] sm:$0xff] %vm4399, %v4380
      %4415 = vst.msk [vmem:[#allocation4 + $0x78] sm:$0xff] %vm4399, %v4382
      %v4416 = vld [vmem:[%s3755] sm:$0x80]
      %v4417 = vld [vmem:[%s3755 + $0x8] sm:$0xff]
      %v4418 = vld [vmem:[%s3755 + $0x18] sm:$0x80]
      %v4419 = vld [vmem:[%s3755 + $0x20] sm:$0xff]
      %v4420 = vld [vmem:[%s3755 + $0x30] sm:$0x80]
      %v4421 = vld [vmem:[%s3755 + $0x38] sm:$0xff]
      %v4422 = vld [vmem:[%s3755 + $0x48] sm:$0x80]
      %v4423 = vld [vmem:[%s3755 + $0x50] sm:$0xff]
      %v4424 = vld [vmem:[%s3755 + $0x60] sm:$0x80]
      %v4425 = vld [vmem:[%s3755 + $0x68] sm:$0xff]
      %v4426 = vld [vmem:[%s3755 + $0x78] sm:$0x80]
      %v4427 = vld [vmem:[%s3755 + $0x80] sm:$0xff]
      %v4428 = vld [vmem:[%s3755 + $0x90] sm:$0x80]
      %v4429 = vld [vmem:[%s3755 + $0x98] sm:$0xff]
      %v4430 = vld [vmem:[%s3755 + $0xa8] sm:$0x80]
      %v4431 = vld [vmem:[%s3755 + $0xb0] sm:$0xff]
      %v4432 = vld [vmem:[%s3755 + $0xc0] sm:$0x80]
      %v4433 = vld [vmem:[%s3755 + $0xc8] sm:$0xff]
      %v4434 = vld [vmem:[%s3755 + $0xd8] sm:$0x80]
      %v4435 = vld [vmem:[%s3755 + $0xe0] sm:$0xff]
      %v4436 = vld [vmem:[%s3755 + $0xf0] sm:$0x80]
      %v4437 = vld [vmem:[%s3755 + $0xf8] sm:$0xff]
      %v4438 = vld [vmem:[%s3755 + $0x108] sm:$0x80]
      %v4439 = vld [vmem:[%s3755 + $0x110] sm:$0xff]
      %v4440 = vld [vmem:[%s3755 + $0x120] sm:$0x80]
      %v4441 = vld [vmem:[%s3755 + $0x128] sm:$0xff]
      %v4442 = vld [vmem:[%s3755 + $0x138] sm:$0x80]
      %v4443 = vld [vmem:[%s3755 + $0x140] sm:$0xff]
      %v4444 = vld [vmem:[%s3755 + $0x150] sm:$0x80]
      %v4445 = vld [vmem:[%s3755 + $0x158] sm:$0xff]
      %v4446 = vld [vmem:[%s3755 + $0x168] sm:$0x80]
      %v4447 = vld [vmem:[%s3755 + $0x170] sm:$0xff]
      %v4449 = vshrl.u32 %v4416, 16
      %v4451 = vrot.slane %v4449, 7
      %v4453 = vshrl.u32 %v4417, 16
      %v4455 = vrot.slane %v4453, 7
      %v4456 = vshll.u32 %v4417, 16
      %v4458 = vor.u32 %v4455, %v4456
      %v4459 = vsel %vm3804, %v4451, %v4458
      %v4461 = vshrl.u32 %v4418, 16
      %v4463 = vrot.slane %v4461, 7
      %v4465 = vshrl.u32 %v4419, 16
      %v4467 = vrot.slane %v4465, 7
      %v4468 = vshll.u32 %v4419, 16
      %v4470 = vor.u32 %v4467, %v4468
      %v4471 = vsel %vm3804, %v4463, %v4470
      %v4473 = vshrl.u32 %v4420, 16
      %v4475 = vrot.slane %v4473, 7
      %v4477 = vshrl.u32 %v4421, 16
      %v4479 = vrot.slane %v4477, 7
      %v4480 = vshll.u32 %v4421, 16
      %v4482 = vor.u32 %v4479, %v4480
      %v4483 = vsel %vm3804, %v4475, %v4482
      %v4485 = vshrl.u32 %v4422, 16
      %v4487 = vrot.slane %v4485, 7
      %v4489 = vshrl.u32 %v4423, 16
      %v4491 = vrot.slane %v4489, 7
      %v4492 = vshll.u32 %v4423, 16
      %v4494 = vor.u32 %v4491, %v4492
      %v4495 = vsel %vm3804, %v4487, %v4494
      %v4497 = vshrl.u32 %v4424, 16
      %v4499 = vrot.slane %v4497, 7
      %v4501 = vshrl.u32 %v4425, 16
      %v4503 = vrot.slane %v4501, 7
      %v4504 = vshll.u32 %v4425, 16
      %v4506 = vor.u32 %v4503, %v4504
      %v4507 = vsel %vm3804, %v4499, %v4506
      %v4509 = vshrl.u32 %v4426, 16
      %v4511 = vrot.slane %v4509, 7
      %v4513 = vshrl.u32 %v4427, 16
      %v4515 = vrot.slane %v4513, 7
      %v4516 = vshll.u32 %v4427, 16
      %v4518 = vor.u32 %v4515, %v4516
      %v4519 = vsel %vm3804, %v4511, %v4518
      %v4521 = vshrl.u32 %v4428, 16
      %v4523 = vrot.slane %v4521, 7
      %v4525 = vshrl.u32 %v4429, 16
      %v4527 = vrot.slane %v4525, 7
      %v4528 = vshll.u32 %v4429, 16
      %v4530 = vor.u32 %v4527, %v4528
      %v4531 = vsel %vm3804, %v4523, %v4530
      %v4533 = vshrl.u32 %v4430, 16
      %v4535 = vrot.slane %v4533, 7
      %v4537 = vshrl.u32 %v4431, 16
      %v4539 = vrot.slane %v4537, 7
      %v4540 = vshll.u32 %v4431, 16
      %v4542 = vor.u32 %v4539, %v4540
      %v4543 = vsel %vm3804, %v4535, %v4542
      %v4545 = vshrl.u32 %v4432, 16
      %v4547 = vrot.slane %v4545, 7
      %v4549 = vshrl.u32 %v4433, 16
      %v4551 = vrot.slane %v4549, 7
      %v4552 = vshll.u32 %v4433, 16
      %v4554 = vor.u32 %v4551, %v4552
      %v4555 = vsel %vm3804, %v4547, %v4554
      %v4557 = vshrl.u32 %v4434, 16
      %v4559 = vrot.slane %v4557, 7
      %v4561 = vshrl.u32 %v4435, 16
      %v4563 = vrot.slane %v4561, 7
      %v4564 = vshll.u32 %v4435, 16
      %v4566 = vor.u32 %v4563, %v4564
      %v4567 = vsel %vm3804, %v4559, %v4566
      %v4569 = vshrl.u32 %v4436, 16
      %v4571 = vrot.slane %v4569, 7
      %v4573 = vshrl.u32 %v4437, 16
      %v4575 = vrot.slane %v4573, 7
      %v4576 = vshll.u32 %v4437, 16
      %v4578 = vor.u32 %v4575, %v4576
      %v4579 = vsel %vm3804, %v4571, %v4578
      %v4581 = vshrl.u32 %v4438, 16
      %v4583 = vrot.slane %v4581, 7
      %v4585 = vshrl.u32 %v4439, 16
      %v4587 = vrot.slane %v4585, 7
      %v4588 = vshll.u32 %v4439, 16
      %v4590 = vor.u32 %v4587, %v4588
      %v4591 = vsel %vm3804, %v4583, %v4590
      %v4593 = vshrl.u32 %v4440, 16
      %v4595 = vrot.slane %v4593, 7
      %v4597 = vshrl.u32 %v4441, 16
      %v4599 = vrot.slane %v4597, 7
      %v4600 = vshll.u32 %v4441, 16
      %v4602 = vor.u32 %v4599, %v4600
      %v4603 = vsel %vm3804, %v4595, %v4602
      %v4605 = vshrl.u32 %v4442, 16
      %v4607 = vrot.slane %v4605, 7
      %v4609 = vshrl.u32 %v4443, 16
      %v4611 = vrot.slane %v4609, 7
      %v4612 = vshll.u32 %v4443, 16
      %v4614 = vor.u32 %v4611, %v4612
      %v4615 = vsel %vm3804, %v4607, %v4614
      %v4617 = vshrl.u32 %v4444, 16
      %v4619 = vrot.slane %v4617, 7
      %v4621 = vshrl.u32 %v4445, 16
      %v4623 = vrot.slane %v4621, 7
      %v4624 = vshll.u32 %v4445, 16
      %v4626 = vor.u32 %v4623, %v4624
      %v4627 = vsel %vm3804, %v4619, %v4626
      %v4629 = vshrl.u32 %v4446, 16
      %v4631 = vrot.slane %v4629, 7
      %v4633 = vshrl.u32 %v4447, 16
      %v4635 = vrot.slane %v4633, 7
      %v4636 = vshll.u32 %v4447, 16
      %v4638 = vor.u32 %v4635, %v4636
      %v4639 = vsel %vm3804, %v4631, %v4638
      %4640 = vrot.lane.b32.xlu0 %v4459, 24
      %v4641 = vpop.permute.xlu0 %4640
      %4642 = vrot.lane.b32.xlu0 %v4471, 24
      %v4643 = vpop.permute.xlu0 %4642
      %4644 = vrot.lane.b32.xlu0 %v4483, 24
      %v4645 = vpop.permute.xlu0 %4644
      %4646 = vrot.lane.b32.xlu0 %v4495, 24
      %v4647 = vpop.permute.xlu0 %4646
      %4648 = vrot.lane.b32.xlu0 %v4507, 24
      %v4649 = vpop.permute.xlu0 %4648
      %4650 = vrot.lane.b32.xlu0 %v4519, 24
      %v4651 = vpop.permute.xlu0 %4650
      %4652 = vrot.lane.b32.xlu0 %v4531, 24
      %v4653 = vpop.permute.xlu0 %4652
      %4654 = vrot.lane.b32.xlu0 %v4543, 24
      %v4655 = vpop.permute.xlu0 %4654
      %4656 = vrot.lane.b32.xlu0 %v4555, 24
      %v4657 = vpop.permute.xlu0 %4656
      %4658 = vrot.lane.b32.xlu0 %v4567, 24
      %v4659 = vpop.permute.xlu0 %4658
      %4660 = vrot.lane.b32.xlu0 %v4579, 24
      %v4661 = vpop.permute.xlu0 %4660
      %4662 = vrot.lane.b32.xlu0 %v4591, 24
      %v4663 = vpop.permute.xlu0 %4662
      %4664 = vrot.lane.b32.xlu0 %v4603, 24
      %v4665 = vpop.permute.xlu0 %4664
      %4666 = vrot.lane.b32.xlu0 %v4615, 24
      %v4667 = vpop.permute.xlu0 %4666
      %4668 = vrot.lane.b32.xlu0 %v4627, 24
      %v4669 = vpop.permute.xlu0 %4668
      %4670 = vrot.lane.b32.xlu0 %v4639, 24
      %v4671 = vpop.permute.xlu0 %4670
      %vm4688 = vcmask 261312
      %4689 = vst.msk [vmem:[#allocation4] sm:$0xff] %vm4688, %v4641
      %4690 = vst.msk [vmem:[#allocation4 + $0x8] sm:$0xff] %vm4688, %v4643
      %4691 = vst.msk [vmem:[#allocation4 + $0x10] sm:$0xff] %vm4688, %v4645
      %4692 = vst.msk [vmem:[#allocation4 + $0x18] sm:$0xff] %vm4688, %v4647
      %4693 = vst.msk [vmem:[#allocation4 + $0x20] sm:$0xff] %vm4688, %v4649
      %4694 = vst.msk [vmem:[#allocation4 + $0x28] sm:$0xff] %vm4688, %v4651
      %4695 = vst.msk [vmem:[#allocation4 + $0x30] sm:$0xff] %vm4688, %v4653
      %4696 = vst.msk [vmem:[#allocation4 + $0x38] sm:$0xff] %vm4688, %v4655
      %4697 = vst.msk [vmem:[#allocation4 + $0x40] sm:$0xff] %vm4688, %v4657
      %4698 = vst.msk [vmem:[#allocation4 + $0x48] sm:$0xff] %vm4688, %v4659
      %4699 = vst.msk [vmem:[#allocation4 + $0x50] sm:$0xff] %vm4688, %v4661
      %4700 = vst.msk [vmem:[#allocation4 + $0x58] sm:$0xff] %vm4688, %v4663
      %4701 = vst.msk [vmem:[#allocation4 + $0x60] sm:$0xff] %vm4688, %v4665
      %4702 = vst.msk [vmem:[#allocation4 + $0x68] sm:$0xff] %vm4688, %v4667
      %4703 = vst.msk [vmem:[#allocation4 + $0x70] sm:$0xff] %vm4688, %v4669
      %4704 = vst.msk [vmem:[#allocation4 + $0x78] sm:$0xff] %vm4688, %v4671
      %v4705 = vld [vmem:[%s3755 + $0x8] sm:$0xff]
      %v4706 = vld [vmem:[%s3755 + $0x20] sm:$0xff]
      %v4707 = vld [vmem:[%s3755 + $0x38] sm:$0xff]
      %v4708 = vld [vmem:[%s3755 + $0x50] sm:$0xff]
      %v4709 = vld [vmem:[%s3755 + $0x68] sm:$0xff]
      %v4710 = vld [vmem:[%s3755 + $0x80] sm:$0xff]
      %v4711 = vld [vmem:[%s3755 + $0x98] sm:$0xff]
      %v4712 = vld [vmem:[%s3755 + $0xb0] sm:$0xff]
      %v4713 = vld [vmem:[%s3755 + $0xc8] sm:$0xff]
      %v4714 = vld [vmem:[%s3755 + $0xe0] sm:$0xff]
      %v4715 = vld [vmem:[%s3755 + $0xf8] sm:$0xff]
      %v4716 = vld [vmem:[%s3755 + $0x110] sm:$0xff]
      %v4717 = vld [vmem:[%s3755 + $0x128] sm:$0xff]
      %v4718 = vld [vmem:[%s3755 + $0x140] sm:$0xff]
      %v4719 = vld [vmem:[%s3755 + $0x158] sm:$0xff]
      %v4720 = vld [vmem:[%s3755 + $0x170] sm:$0xff]
      %4737 = vrot.lane.b32.xlu0 %v4705, 32
      %v4738 = vpop.permute.xlu0 %4737
      %4739 = vrot.lane.b32.xlu0 %v4706, 32
      %v4740 = vpop.permute.xlu0 %4739
      %4741 = vrot.lane.b32.xlu0 %v4707, 32
      %v4742 = vpop.permute.xlu0 %4741
      %4743 = vrot.lane.b32.xlu0 %v4708, 32
      %v4744 = vpop.permute.xlu0 %4743
      %4745 = vrot.lane.b32.xlu0 %v4709, 32
      %v4746 = vpop.permute.xlu0 %4745
      %4747 = vrot.lane.b32.xlu0 %v4710, 32
      %v4748 = vpop.permute.xlu0 %4747
      %4749 = vrot.lane.b32.xlu0 %v4711, 32
      %v4750 = vpop.permute.xlu0 %4749
      %4751 = vrot.lane.b32.xlu0 %v4712, 32
      %v4752 = vpop.permute.xlu0 %4751
      %4753 = vrot.lane.b32.xlu0 %v4713, 32
      %v4754 = vpop.permute.xlu0 %4753
      %4755 = vrot.lane.b32.xlu0 %v4714, 32
      %v4756 = vpop.permute.xlu0 %4755
      %4757 = vrot.lane.b32.xlu0 %v4715, 32
      %v4758 = vpop.permute.xlu0 %4757
      %4759 = vrot.lane.b32.xlu0 %v4716, 32
      %v4760 = vpop.permute.xlu0 %4759
      %4761 = vrot.lane.b32.xlu0 %v4717, 32
      %v4762 = vpop.permute.xlu0 %4761
      %4763 = vrot.lane.b32.xlu0 %v4718, 32
      %v4764 = vpop.permute.xlu0 %4763
      %4765 = vrot.lane.b32.xlu0 %v4719, 32
      %v4766 = vpop.permute.xlu0 %4765
      %4767 = vrot.lane.b32.xlu0 %v4720, 32
      %v4768 = vpop.permute.xlu0 %4767
      %vm4785 = vcmask 326912
      %4786 = vst.msk [vmem:[#allocation4] sm:$0xff] %vm4785, %v4738
      %4787 = vst.msk [vmem:[#allocation4 + $0x8] sm:$0xff] %vm4785, %v4740
      %4788 = vst.msk [vmem:[#allocation4 + $0x10] sm:$0xff] %vm4785, %v4742
      %4789 = vst.msk [vmem:[#allocation4 + $0x18] sm:$0xff] %vm4785, %v4744
      %4790 = vst.msk [vmem:[#allocation4 + $0x20] sm:$0xff] %vm4785, %v4746
      %4791 = vst.msk [vmem:[#allocation4 + $0x28] sm:$0xff] %vm4785, %v4748
      %4792 = vst.msk [vmem:[#allocation4 + $0x30] sm:$0xff] %vm4785, %v4750
      %4793 = vst.msk [vmem:[#allocation4 + $0x38] sm:$0xff] %vm4785, %v4752
      %4794 = vst.msk [vmem:[#allocation4 + $0x40] sm:$0xff] %vm4785, %v4754
      %4795 = vst.msk [vmem:[#allocation4 + $0x48] sm:$0xff] %vm4785, %v4756
      %4796 = vst.msk [vmem:[#allocation4 + $0x50] sm:$0xff] %vm4785, %v4758
      %4797 = vst.msk [vmem:[#allocation4 + $0x58] sm:$0xff] %vm4785, %v4760
      %4798 = vst.msk [vmem:[#allocation4 + $0x60] sm:$0xff] %vm4785, %v4762
      %4799 = vst.msk [vmem:[#allocation4 + $0x68] sm:$0xff] %vm4785, %v4764
      %4800 = vst.msk [vmem:[#allocation4 + $0x70] sm:$0xff] %vm4785, %v4766
      %4801 = vst.msk [vmem:[#allocation4 + $0x78] sm:$0xff] %vm4785, %v4768
      %v4802 = vld [vmem:[%s3755 + $0x8] sm:$0xff]
      %v4803 = vld [vmem:[%s3755 + $0x10] sm:$0x1]
      %v4804 = vld [vmem:[%s3755 + $0x20] sm:$0xff]
      %v4805 = vld [vmem:[%s3755 + $0x28] sm:$0x1]
      %v4806 = vld [vmem:[%s3755 + $0x38] sm:$0xff]
      %v4807 = vld [vmem:[%s3755 + $0x40] sm:$0x1]
      %v4808 = vld [vmem:[%s3755 + $0x50] sm:$0xff]
      %v4809 = vld [vmem:[%s3755 + $0x58] sm:$0x1]
      %v4810 = vld [vmem:[%s3755 + $0x68] sm:$0xff]
      %v4811 = vld [vmem:[%s3755 + $0x70] sm:$0x1]
      %v4812 = vld [vmem:[%s3755 + $0x80] sm:$0xff]
      %v4813 = vld [vmem:[%s3755 + $0x88] sm:$0x1]
      %v4814 = vld [vmem:[%s3755 + $0x98] sm:$0xff]
      %v4815 = vld [vmem:[%s3755 + $0xa0] sm:$0x1]
      %v4816 = vld [vmem:[%s3755 + $0xb0] sm:$0xff]
      %v4817 = vld [vmem:[%s3755 + $0xb8] sm:$0x1]
      %v4818 = vld [vmem:[%s3755 + $0xc8] sm:$0xff]
      %v4819 = vld [vmem:[%s3755 + $0xd0] sm:$0x1]
      %v4820 = vld [vmem:[%s3755 + $0xe0] sm:$0xff]
      %v4821 = vld [vmem:[%s3755 + $0xe8] sm:$0x1]
      %v4822 = vld [vmem:[%s3755 + $0xf8] sm:$0xff]
      %v4823 = vld [vmem:[%s3755 + $0x100] sm:$0x1]
      %v4824 = vld [vmem:[%s3755 + $0x110] sm:$0xff]
      %v4825 = vld [vmem:[%s3755 + $0x118] sm:$0x1]
      %v4826 = vld [vmem:[%s3755 + $0x128] sm:$0xff]
      %v4827 = vld [vmem:[%s3755 + $0x130] sm:$0x1]
      %v4828 = vld [vmem:[%s3755 + $0x140] sm:$0xff]
      %v4829 = vld [vmem:[%s3755 + $0x148] sm:$0x1]
      %v4830 = vld [vmem:[%s3755 + $0x158] sm:$0xff]
      %v4831 = vld [vmem:[%s3755 + $0x160] sm:$0x1]
      %v4832 = vld [vmem:[%s3755 + $0x170] sm:$0xff]
      %v4833 = vld [vmem:[%s3755 + $0x178] sm:$0x1]
      %v4835 = vshrl.u32 %v4802, 16
      %v4837 = vshll.u32 %v4802, 16
      %v4839 = vrot.slane %v4837, 1
      %v4840 = vor.u32 %v4835, %v4839
      %v4842 = vshll.u32 %v4803, 16
      %v4844 = vrot.slane %v4842, 1
      %v4845 = vsel %vm4158, %v4840, %v4844
      %v4847 = vshrl.u32 %v4804, 16
      %v4849 = vshll.u32 %v4804, 16
      %v4851 = vrot.slane %v4849, 1
      %v4852 = vor.u32 %v4847, %v4851
      %v4854 = vshll.u32 %v4805, 16
      %v4856 = vrot.slane %v4854, 1
      %v4857 = vsel %vm4158, %v4852, %v4856
      %v4859 = vshrl.u32 %v4806, 16
      %v4861 = vshll.u32 %v4806, 16
      %v4863 = vrot.slane %v4861, 1
      %v4864 = vor.u32 %v4859, %v4863
      %v4866 = vshll.u32 %v4807, 16
      %v4868 = vrot.slane %v4866, 1
      %v4869 = vsel %vm4158, %v4864, %v4868
      %v4871 = vshrl.u32 %v4808, 16
      %v4873 = vshll.u32 %v4808, 16
      %v4875 = vrot.slane %v4873, 1
      %v4876 = vor.u32 %v4871, %v4875
      %v4878 = vshll.u32 %v4809, 16
      %v4880 = vrot.slane %v4878, 1
      %v4881 = vsel %vm4158, %v4876, %v4880
      %v4883 = vshrl.u32 %v4810, 16
      %v4885 = vshll.u32 %v4810, 16
      %v4887 = vrot.slane %v4885, 1
      %v4888 = vor.u32 %v4883, %v4887
      %v4890 = vshll.u32 %v4811, 16
      %v4892 = vrot.slane %v4890, 1
      %v4893 = vsel %vm4158, %v4888, %v4892
      %v4895 = vshrl.u32 %v4812, 16
      %v4897 = vshll.u32 %v4812, 16
      %v4899 = vrot.slane %v4897, 1
      %v4900 = vor.u32 %v4895, %v4899
      %v4902 = vshll.u32 %v4813, 16
      %v4904 = vrot.slane %v4902, 1
      %v4905 = vsel %vm4158, %v4900, %v4904
      %v4907 = vshrl.u32 %v4814, 16
      %v4909 = vshll.u32 %v4814, 16
      %v4911 = vrot.slane %v4909, 1
      %v4912 = vor.u32 %v4907, %v4911
      %v4914 = vshll.u32 %v4815, 16
      %v4916 = vrot.slane %v4914, 1
      %v4917 = vsel %vm4158, %v4912, %v4916
      %v4919 = vshrl.u32 %v4816, 16
      %v4921 = vshll.u32 %v4816, 16
      %v4923 = vrot.slane %v4921, 1
      %v4924 = vor.u32 %v4919, %v4923
      %v4926 = vshll.u32 %v4817, 16
      %v4928 = vrot.slane %v4926, 1
      %v4929 = vsel %vm4158, %v4924, %v4928
      %v4931 = vshrl.u32 %v4818, 16
      %v4933 = vshll.u32 %v4818, 16
      %v4935 = vrot.slane %v4933, 1
      %v4936 = vor.u32 %v4931, %v4935
      %v4938 = vshll.u32 %v4819, 16
      %v4940 = vrot.slane %v4938, 1
      %v4941 = vsel %vm4158, %v4936, %v4940
      %v4943 = vshrl.u32 %v4820, 16
      %v4945 = vshll.u32 %v4820, 16
      %v4947 = vrot.slane %v4945, 1
      %v4948 = vor.u32 %v4943, %v4947
      %v4950 = vshll.u32 %v4821, 16
      %v4952 = vrot.slane %v4950, 1
      %v4953 = vsel %vm4158, %v4948, %v4952
      %v4955 = vshrl.u32 %v4822, 16
      %v4957 = vshll.u32 %v4822, 16
      %v4959 = vrot.slane %v4957, 1
      %v4960 = vor.u32 %v4955, %v4959
      %v4962 = vshll.u32 %v4823, 16
      %v4964 = vrot.slane %v4962, 1
      %v4965 = vsel %vm4158, %v4960, %v4964
      %v4967 = vshrl.u32 %v4824, 16
      %v4969 = vshll.u32 %v4824, 16
      %v4971 = vrot.slane %v4969, 1
      %v4972 = vor.u32 %v4967, %v4971
      %v4974 = vshll.u32 %v4825, 16
      %v4976 = vrot.slane %v4974, 1
      %v4977 = vsel %vm4158, %v4972, %v4976
      %v4979 = vshrl.u32 %v4826, 16
      %v4981 = vshll.u32 %v4826, 16
      %v4983 = vrot.slane %v4981, 1
      %v4984 = vor.u32 %v4979, %v4983
      %v4986 = vshll.u32 %v4827, 16
      %v4988 = vrot.slane %v4986, 1
      %v4989 = vsel %vm4158, %v4984, %v4988
      %v4991 = vshrl.u32 %v4828, 16
      %v4993 = vshll.u32 %v4828, 16
      %v4995 = vrot.slane %v4993, 1
      %v4996 = vor.u32 %v4991, %v4995
      %v4998 = vshll.u32 %v4829, 16
      %v5000 = vrot.slane %v4998, 1
      %v5001 = vsel %vm4158, %v4996, %v5000
      %v5003 = vshrl.u32 %v4830, 16
      %v5005 = vshll.u32 %v4830, 16
      %v5007 = vrot.slane %v5005, 1
      %v5008 = vor.u32 %v5003, %v5007
      %v5010 = vshll.u32 %v4831, 16
      %v5012 = vrot.slane %v5010, 1
      %v5013 = vsel %vm4158, %v5008, %v5012
      %v5015 = vshrl.u32 %v4832, 16
      %v5017 = vshll.u32 %v4832, 16
      %v5019 = vrot.slane %v5017, 1
      %v5020 = vor.u32 %v5015, %v5019
      %v5022 = vshll.u32 %v4833, 16
      %v5024 = vrot.slane %v5022, 1
      %v5025 = vsel %vm4158, %v5020, %v5024
      %5026 = vrot.lane.b32.xlu0 %v4845, 40
      %v5027 = vpop.permute.xlu0 %5026
      %5028 = vrot.lane.b32.xlu0 %v4857, 40
      %v5029 = vpop.permute.xlu0 %5028
      %5030 = vrot.lane.b32.xlu0 %v4869, 40
      %v5031 = vpop.permute.xlu0 %5030
      %5032 = vrot.lane.b32.xlu0 %v4881, 40
      %v5033 = vpop.permute.xlu0 %5032
      %5034 = vrot.lane.b32.xlu0 %v4893, 40
      %v5035 = vpop.permute.xlu0 %5034
      %5036 = vrot.lane.b32.xlu0 %v4905, 40
      %v5037 = vpop.permute.xlu0 %5036
      %5038 = vrot.lane.b32.xlu0 %v4917, 40
      %v5039 = vpop.permute.xlu0 %5038
      %5040 = vrot.lane.b32.xlu0 %v4929, 40
      %v5041 = vpop.permute.xlu0 %5040
      %5042 = vrot.lane.b32.xlu0 %v4941, 40
      %v5043 = vpop.permute.xlu0 %5042
      %5044 = vrot.lane.b32.xlu0 %v4953, 40
      %v5045 = vpop.permute.xlu0 %5044
      %5046 = vrot.lane.b32.xlu0 %v4965, 40
      %v5047 = vpop.permute.xlu0 %5046
      %5048 = vrot.lane.b32.xlu0 %v4977, 40
      %v5049 = vpop.permute.xlu0 %5048
      %5050 = vrot.lane.b32.xlu0 %v4989, 40
      %v5051 = vpop.permute.xlu0 %5050
      %5052 = vrot.lane.b32.xlu0 %v5001, 40
      %v5053 = vpop.permute.xlu0 %5052
      %5054 = vrot.lane.b32.xlu0 %v5013, 40
      %v5055 = vpop.permute.xlu0 %5054
      %5056 = vrot.lane.b32.xlu0 %v5025, 40
      %v5057 = vpop.permute.xlu0 %5056
      %vm5074 = vcmask 392512
      %5075 = vst.msk [vmem:[#allocation4] sm:$0xff] %vm5074, %v5027
      %5076 = vst.msk [vmem:[#allocation4 + $0x8] sm:$0xff] %vm5074, %v5029
      %5077 = vst.msk [vmem:[#allocation4 + $0x10] sm:$0xff] %vm5074, %v5031
      %5078 = vst.msk [vmem:[#allocation4 + $0x18] sm:$0xff] %vm5074, %v5033
      %5079 = vst.msk [vmem:[#allocation4 + $0x20] sm:$0xff] %vm5074, %v5035
      %5080 = vst.msk [vmem:[#allocation4 + $0x28] sm:$0xff] %vm5074, %v5037
      %5081 = vst.msk [vmem:[#allocation4 + $0x30] sm:$0xff] %vm5074, %v5039
      %5082 = vst.msk [vmem:[#allocation4 + $0x38] sm:$0xff] %vm5074, %v5041
      %5083 = vst.msk [vmem:[#allocation4 + $0x40] sm:$0xff] %vm5074, %v5043
      %5084 = vst.msk [vmem:[#allocation4 + $0x48] sm:$0xff] %vm5074, %v5045
      %5085 = vst.msk [vmem:[#allocation4 + $0x50] sm:$0xff] %vm5074, %v5047
      %5086 = vst.msk [vmem:[#allocation4 + $0x58] sm:$0xff] %vm5074, %v5049
      %5087 = vst.msk [vmem:[#allocation4 + $0x60] sm:$0xff] %vm5074, %v5051
      %5088 = vst.msk [vmem:[#allocation4 + $0x68] sm:$0xff] %vm5074, %v5053
      %5089 = vst.msk [vmem:[#allocation4 + $0x70] sm:$0xff] %vm5074, %v5055
      %5090 = vst.msk [vmem:[#allocation4 + $0x78] sm:$0xff] %vm5074, %v5057
      %s5091 = scalar_lea.vmem [#allocation2], 48
      %v5092 = vld [vmem:[%s5091] sm:$0x80]
      %v5093 = vld [vmem:[%s5091 + $0x8] sm:$0xff]
      %v5094 = vld [vmem:[%s5091 + $0x18] sm:$0x80]
      %v5095 = vld [vmem:[%s5091 + $0x20] sm:$0xff]
      %v5096 = vld [vmem:[%s5091 + $0x30] sm:$0x80]
      %v5097 = vld [vmem:[%s5091 + $0x38] sm:$0xff]
      %v5098 = vld [vmem:[%s5091 + $0x48] sm:$0x80]
      %v5099 = vld [vmem:[%s5091 + $0x50] sm:$0xff]
      %v5100 = vld [vmem:[%s5091 + $0x60] sm:$0x80]
      %v5101 = vld [vmem:[%s5091 + $0x68] sm:$0xff]
      %v5102 = vld [vmem:[%s5091 + $0x78] sm:$0x80]
      %v5103 = vld [vmem:[%s5091 + $0x80] sm:$0xff]
      %v5104 = vld [vmem:[%s5091 + $0x90] sm:$0x80]
      %v5105 = vld [vmem:[%s5091 + $0x98] sm:$0xff]
      %v5106 = vld [vmem:[%s5091 + $0xa8] sm:$0x80]
      %v5107 = vld [vmem:[%s5091 + $0xb0] sm:$0xff]
      %v5108 = vld [vmem:[%s5091 + $0xc0] sm:$0x80]
      %v5109 = vld [vmem:[%s5091 + $0xc8] sm:$0xff]
      %v5110 = vld [vmem:[%s5091 + $0xd8] sm:$0x80]
      %v5111 = vld [vmem:[%s5091 + $0xe0] sm:$0xff]
      %v5112 = vld [vmem:[%s5091 + $0xf0] sm:$0x80]
      %v5113 = vld [vmem:[%s5091 + $0xf8] sm:$0xff]
      %v5114 = vld [vmem:[%s5091 + $0x108] sm:$0x80]
      %v5115 = vld [vmem:[%s5091 + $0x110] sm:$0xff]
      %v5116 = vld [vmem:[%s5091 + $0x120] sm:$0x80]
      %v5117 = vld [vmem:[%s5091 + $0x128] sm:$0xff]
      %v5118 = vld [vmem:[%s5091 + $0x138] sm:$0x80]
      %v5119 = vld [vmem:[%s5091 + $0x140] sm:$0xff]
      %v5120 = vld [vmem:[%s5091 + $0x150] sm:$0x80]
      %v5121 = vld [vmem:[%s5091 + $0x158] sm:$0xff]
      %v5122 = vld [vmem:[%s5091 + $0x168] sm:$0x80]
      %v5123 = vld [vmem:[%s5091 + $0x170] sm:$0xff]
      %v5125 = vshrl.u32 %v5092, 16
      %v5127 = vrot.slane %v5125, 7
      %v5129 = vshrl.u32 %v5093, 16
      %v5131 = vrot.slane %v5129, 7
      %v5132 = vshll.u32 %v5093, 16
      %v5134 = vor.u32 %v5131, %v5132
      %v5135 = vsel %vm3804, %v5127, %v5134
      %v5137 = vshrl.u32 %v5094, 16
      %v5139 = vrot.slane %v5137, 7
      %v5141 = vshrl.u32 %v5095, 16
      %v5143 = vrot.slane %v5141, 7
      %v5144 = vshll.u32 %v5095, 16
      %v5146 = vor.u32 %v5143, %v5144
      %v5147 = vsel %vm3804, %v5139, %v5146
      %v5149 = vshrl.u32 %v5096, 16
      %v5151 = vrot.slane %v5149, 7
      %v5153 = vshrl.u32 %v5097, 16
      %v5155 = vrot.slane %v5153, 7
      %v5156 = vshll.u32 %v5097, 16
      %v5158 = vor.u32 %v5155, %v5156
      %v5159 = vsel %vm3804, %v5151, %v5158
      %v5161 = vshrl.u32 %v5098, 16
      %v5163 = vrot.slane %v5161, 7
      %v5165 = vshrl.u32 %v5099, 16
      %v5167 = vrot.slane %v5165, 7
      %v5168 = vshll.u32 %v5099, 16
      %v5170 = vor.u32 %v5167, %v5168
      %v5171 = vsel %vm3804, %v5163, %v5170
      %v5173 = vshrl.u32 %v5100, 16
      %v5175 = vrot.slane %v5173, 7
      %v5177 = vshrl.u32 %v5101, 16
      %v5179 = vrot.slane %v5177, 7
      %v5180 = vshll.u32 %v5101, 16
      %v5182 = vor.u32 %v5179, %v5180
      %v5183 = vsel %vm3804, %v5175, %v5182
      %v5185 = vshrl.u32 %v5102, 16
      %v5187 = vrot.slane %v5185, 7
      %v5189 = vshrl.u32 %v5103, 16
      %v5191 = vrot.slane %v5189, 7
      %v5192 = vshll.u32 %v5103, 16
      %v5194 = vor.u32 %v5191, %v5192
      %v5195 = vsel %vm3804, %v5187, %v5194
      %v5197 = vshrl.u32 %v5104, 16
      %v5199 = vrot.slane %v5197, 7
      %v5201 = vshrl.u32 %v5105, 16
      %v5203 = vrot.slane %v5201, 7
      %v5204 = vshll.u32 %v5105, 16
      %v5206 = vor.u32 %v5203, %v5204
      %v5207 = vsel %vm3804, %v5199, %v5206
      %v5209 = vshrl.u32 %v5106, 16
      %v5211 = vrot.slane %v5209, 7
      %v5213 = vshrl.u32 %v5107, 16
      %v5215 = vrot.slane %v5213, 7
      %v5216 = vshll.u32 %v5107, 16
      %v5218 = vor.u32 %v5215, %v5216
      %v5219 = vsel %vm3804, %v5211, %v5218
      %v5221 = vshrl.u32 %v5108, 16
      %v5223 = vrot.slane %v5221, 7
      %v5225 = vshrl.u32 %v5109, 16
      %v5227 = vrot.slane %v5225, 7
      %v5228 = vshll.u32 %v5109, 16
      %v5230 = vor.u32 %v5227, %v5228
      %v5231 = vsel %vm3804, %v5223, %v5230
      %v5233 = vshrl.u32 %v5110, 16
      %v5235 = vrot.slane %v5233, 7
      %v5237 = vshrl.u32 %v5111, 16
      %v5239 = vrot.slane %v5237, 7
      %v5240 = vshll.u32 %v5111, 16
      %v5242 = vor.u32 %v5239, %v5240
      %v5243 = vsel %vm3804, %v5235, %v5242
      %v5245 = vshrl.u32 %v5112, 16
      %v5247 = vrot.slane %v5245, 7
      %v5249 = vshrl.u32 %v5113, 16
      %v5251 = vrot.slane %v5249, 7
      %v5252 = vshll.u32 %v5113, 16
      %v5254 = vor.u32 %v5251, %v5252
      %v5255 = vsel %vm3804, %v5247, %v5254
      %v5257 = vshrl.u32 %v5114, 16
      %v5259 = vrot.slane %v5257, 7
      %v5261 = vshrl.u32 %v5115, 16
      %v5263 = vrot.slane %v5261, 7
      %v5264 = vshll.u32 %v5115, 16
      %v5266 = vor.u32 %v5263, %v5264
      %v5267 = vsel %vm3804, %v5259, %v5266
      %v5269 = vshrl.u32 %v5116, 16
      %v5271 = vrot.slane %v5269, 7
      %v5273 = vshrl.u32 %v5117, 16
      %v5275 = vrot.slane %v5273, 7
      %v5276 = vshll.u32 %v5117, 16
      %v5278 = vor.u32 %v5275, %v5276
      %v5279 = vsel %vm3804, %v5271, %v5278
      %v5281 = vshrl.u32 %v5118, 16
      %v5283 = vrot.slane %v5281, 7
      %v5285 = vshrl.u32 %v5119, 16
      %v5287 = vrot.slane %v5285, 7
      %v5288 = vshll.u32 %v5119, 16
      %v5290 = vor.u32 %v5287, %v5288
      %v5291 = vsel %vm3804, %v5283, %v5290
      %v5293 = vshrl.u32 %v5120, 16
      %v5295 = vrot.slane %v5293, 7
      %v5297 = vshrl.u32 %v5121, 16
      %v5299 = vrot.slane %v5297, 7
      %v5300 = vshll.u32 %v5121, 16
      %v5302 = vor.u32 %v5299, %v5300
      %v5303 = vsel %vm3804, %v5295, %v5302
      %v5305 = vshrl.u32 %v5122, 16
      %v5307 = vrot.slane %v5305, 7
      %v5309 = vshrl.u32 %v5123, 16
      %v5311 = vrot.slane %v5309, 7
      %v5312 = vshll.u32 %v5123, 16
      %v5314 = vor.u32 %v5311, %v5312
      %v5315 = vsel %vm3804, %v5307, %v5314
      %5316 = vrot.lane.b32.xlu0 %v5135, 48
      %v5317 = vpop.permute.xlu0 %5316
      %5318 = vrot.lane.b32.xlu0 %v5147, 48
      %v5319 = vpop.permute.xlu0 %5318
      %5320 = vrot.lane.b32.xlu0 %v5159, 48
      %v5321 = vpop.permute.xlu0 %5320
      %5322 = vrot.lane.b32.xlu0 %v5171, 48
      %v5323 = vpop.permute.xlu0 %5322
      %5324 = vrot.lane.b32.xlu0 %v5183, 48
      %v5325 = vpop.permute.xlu0 %5324
      %5326 = vrot.lane.b32.xlu0 %v5195, 48
      %v5327 = vpop.permute.xlu0 %5326
      %5328 = vrot.lane.b32.xlu0 %v5207, 48
      %v5329 = vpop.permute.xlu0 %5328
      %5330 = vrot.lane.b32.xlu0 %v5219, 48
      %v5331 = vpop.permute.xlu0 %5330
      %5332 = vrot.lane.b32.xlu0 %v5231, 48
      %v5333 = vpop.permute.xlu0 %5332
      %5334 = vrot.lane.b32.xlu0 %v5243, 48
      %v5335 = vpop.permute.xlu0 %5334
      %5336 = vrot.lane.b32.xlu0 %v5255, 48
      %v5337 = vpop.permute.xlu0 %5336
      %5338 = vrot.lane.b32.xlu0 %v5267, 48
      %v5339 = vpop.permute.xlu0 %5338
      %5340 = vrot.lane.b32.xlu0 %v5279, 48
      %v5341 = vpop.permute.xlu0 %5340
      %5342 = vrot.lane.b32.xlu0 %v5291, 48
      %v5343 = vpop.permute.xlu0 %5342
      %5344 = vrot.lane.b32.xlu0 %v5303, 48
      %v5345 = vpop.permute.xlu0 %5344
      %5346 = vrot.lane.b32.xlu0 %v5315, 48
      %v5347 = vpop.permute.xlu0 %5346
      %vm5364 = vcmask 458112
      %5365 = vst.msk [vmem:[#allocation4] sm:$0xff] %vm5364, %v5317
      %5366 = vst.msk [vmem:[#allocation4 + $0x8] sm:$0xff] %vm5364, %v5319
      %5367 = vst.msk [vmem:[#allocation4 + $0x10] sm:$0xff] %vm5364, %v5321
      %5368 = vst.msk [vmem:[#allocation4 + $0x18] sm:$0xff] %vm5364, %v5323
      %5369 = vst.msk [vmem:[#allocation4 + $0x20] sm:$0xff] %vm5364, %v5325
      %5370 = vst.msk [vmem:[#allocation4 + $0x28] sm:$0xff] %vm5364, %v5327
      %5371 = vst.msk [vmem:[#allocation4 + $0x30] sm:$0xff] %vm5364, %v5329
      %5372 = vst.msk [vmem:[#allocation4 + $0x38] sm:$0xff] %vm5364, %v5331
      %5373 = vst.msk [vmem:[#allocation4 + $0x40] sm:$0xff] %vm5364, %v5333
      %5374 = vst.msk [vmem:[#allocation4 + $0x48] sm:$0xff] %vm5364, %v5335
      %5375 = vst.msk [vmem:[#allocation4 + $0x50] sm:$0xff] %vm5364, %v5337
      %5376 = vst.msk [vmem:[#allocation4 + $0x58] sm:$0xff] %vm5364, %v5339
      %5377 = vst.msk [vmem:[#allocation4 + $0x60] sm:$0xff] %vm5364, %v5341
      %5378 = vst.msk [vmem:[#allocation4 + $0x68] sm:$0xff] %vm5364, %v5343
      %5379 = vst.msk [vmem:[#allocation4 + $0x70] sm:$0xff] %vm5364, %v5345
      %5380 = vst.msk [vmem:[#allocation4 + $0x78] sm:$0xff] %vm5364, %v5347
      %v5381 = vld [vmem:[%s5091 + $0x8] sm:$0xff]
      %v5382 = vld [vmem:[%s5091 + $0x20] sm:$0xff]
      %v5383 = vld [vmem:[%s5091 + $0x38] sm:$0xff]
      %v5384 = vld [vmem:[%s5091 + $0x50] sm:$0xff]
      %v5385 = vld [vmem:[%s5091 + $0x68] sm:$0xff]
      %v5386 = vld [vmem:[%s5091 + $0x80] sm:$0xff]
      %v5387 = vld [vmem:[%s5091 + $0x98] sm:$0xff]
      %v5388 = vld [vmem:[%s5091 + $0xb0] sm:$0xff]
      %v5389 = vld [vmem:[%s5091 + $0xc8] sm:$0xff]
      %v5390 = vld [vmem:[%s5091 + $0xe0] sm:$0xff]
      %v5391 = vld [vmem:[%s5091 + $0xf8] sm:$0xff]
      %v5392 = vld [vmem:[%s5091 + $0x110] sm:$0xff]
      %v5393 = vld [vmem:[%s5091 + $0x128] sm:$0xff]
      %v5394 = vld [vmem:[%s5091 + $0x140] sm:$0xff]
      %v5395 = vld [vmem:[%s5091 + $0x158] sm:$0xff]
      %v5396 = vld [vmem:[%s5091 + $0x170] sm:$0xff]
      %5413 = vrot.lane.b32.xlu0 %v5381, 56
      %v5414 = vpop.permute.xlu0 %5413
      %5415 = vrot.lane.b32.xlu0 %v5382, 56
      %v5416 = vpop.permute.xlu0 %5415
      %5417 = vrot.lane.b32.xlu0 %v5383, 56
      %v5418 = vpop.permute.xlu0 %5417
      %5419 = vrot.lane.b32.xlu0 %v5384, 56
      %v5420 = vpop.permute.xlu0 %5419
      %5421 = vrot.lane.b32.xlu0 %v5385, 56
      %v5422 = vpop.permute.xlu0 %5421
      %5423 = vrot.lane.b32.xlu0 %v5386, 56
      %v5424 = vpop.permute.xlu0 %5423
      %5425 = vrot.lane.b32.xlu0 %v5387, 56
      %v5426 = vpop.permute.xlu0 %5425
      %5427 = vrot.lane.b32.xlu0 %v5388, 56
      %v5428 = vpop.permute.xlu0 %5427
      %5429 = vrot.lane.b32.xlu0 %v5389, 56
      %v5430 = vpop.permute.xlu0 %5429
      %5431 = vrot.lane.b32.xlu0 %v5390, 56
      %v5432 = vpop.permute.xlu0 %5431
      %5433 = vrot.lane.b32.xlu0 %v5391, 56
      %v5434 = vpop.permute.xlu0 %5433
      %5435 = vrot.lane.b32.xlu0 %v5392, 56
      %v5436 = vpop.permute.xlu0 %5435
      %5437 = vrot.lane.b32.xlu0 %v5393, 56
      %v5438 = vpop.permute.xlu0 %5437
      %5439 = vrot.lane.b32.xlu0 %v5394, 56
      %v5440 = vpop.permute.xlu0 %5439
      %5441 = vrot.lane.b32.xlu0 %v5395, 56
      %v5442 = vpop.permute.xlu0 %5441
      %5443 = vrot.lane.b32.xlu0 %v5396, 56
      %v5444 = vpop.permute.xlu0 %5443
      %vm5461 = vcmask 523712
      %5462 = vst.msk [vmem:[#allocation4] sm:$0xff] %vm5461, %v5414
      %5463 = vst.msk [vmem:[#allocation4 + $0x8] sm:$0xff] %vm5461, %v5416
      %5464 = vst.msk [vmem:[#allocation4 + $0x10] sm:$0xff] %vm5461, %v5418
      %5465 = vst.msk [vmem:[#allocation4 + $0x18] sm:$0xff] %vm5461, %v5420
      %5466 = vst.msk [vmem:[#allocation4 + $0x20] sm:$0xff] %vm5461, %v5422
      %5467 = vst.msk [vmem:[#allocation4 + $0x28] sm:$0xff] %vm5461, %v5424
      %5468 = vst.msk [vmem:[#allocation4 + $0x30] sm:$0xff] %vm5461, %v5426
      %5469 = vst.msk [vmem:[#allocation4 + $0x38] sm:$0xff] %vm5461, %v5428
      %5470 = vst.msk [vmem:[#allocation4 + $0x40] sm:$0xff] %vm5461, %v5430
      %5471 = vst.msk [vmem:[#allocation4 + $0x48] sm:$0xff] %vm5461, %v5432
      %5472 = vst.msk [vmem:[#allocation4 + $0x50] sm:$0xff] %vm5461, %v5434
      %5473 = vst.msk [vmem:[#allocation4 + $0x58] sm:$0xff] %vm5461, %v5436
      %5474 = vst.msk [vmem:[#allocation4 + $0x60] sm:$0xff] %vm5461, %v5438
      %5475 = vst.msk [vmem:[#allocation4 + $0x68] sm:$0xff] %vm5461, %v5440
      %5476 = vst.msk [vmem:[#allocation4 + $0x70] sm:$0xff] %vm5461, %v5442
      %5477 = vst.msk [vmem:[#allocation4 + $0x78] sm:$0xff] %vm5461, %v5444
      %v5478 = vld [vmem:[%s5091 + $0x8] sm:$0xff]
      %v5479 = vld [vmem:[%s5091 + $0x10] sm:$0x1]
      %v5480 = vld [vmem:[%s5091 + $0x20] sm:$0xff]
      %v5481 = vld [vmem:[%s5091 + $0x28] sm:$0x1]
      %v5482 = vld [vmem:[%s5091 + $0x38] sm:$0xff]
      %v5483 = vld [vmem:[%s5091 + $0x40] sm:$0x1]
      %v5484 = vld [vmem:[%s5091 + $0x50] sm:$0xff]
      %v5485 = vld [vmem:[%s5091 + $0x58] sm:$0x1]
      %v5486 = vld [vmem:[%s5091 + $0x68] sm:$0xff]
      %v5487 = vld [vmem:[%s5091 + $0x70] sm:$0x1]
      %v5488 = vld [vmem:[%s5091 + $0x80] sm:$0xff]
      %v5489 = vld [vmem:[%s5091 + $0x88] sm:$0x1]
      %v5490 = vld [vmem:[%s5091 + $0x98] sm:$0xff]
      %v5491 = vld [vmem:[%s5091 + $0xa0] sm:$0x1]
      %v5492 = vld [vmem:[%s5091 + $0xb0] sm:$0xff]
      %v5493 = vld [vmem:[%s5091 + $0xb8] sm:$0x1]
      %v5494 = vld [vmem:[%s5091 + $0xc8] sm:$0xff]
      %v5495 = vld [vmem:[%s5091 + $0xd0] sm:$0x1]
      %v5496 = vld [vmem:[%s5091 + $0xe0] sm:$0xff]
      %v5497 = vld [vmem:[%s5091 + $0xe8] sm:$0x1]
      %v5498 = vld [vmem:[%s5091 + $0xf8] sm:$0xff]
      %v5499 = vld [vmem:[%s5091 + $0x100] sm:$0x1]
      %v5500 = vld [vmem:[%s5091 + $0x110] sm:$0xff]
      %v5501 = vld [vmem:[%s5091 + $0x118] sm:$0x1]
      %v5502 = vld [vmem:[%s5091 + $0x128] sm:$0xff]
      %v5503 = vld [vmem:[%s5091 + $0x130] sm:$0x1]
      %v5504 = vld [vmem:[%s5091 + $0x140] sm:$0xff]
      %v5505 = vld [vmem:[%s5091 + $0x148] sm:$0x1]
      %v5506 = vld [vmem:[%s5091 + $0x158] sm:$0xff]
      %v5507 = vld [vmem:[%s5091 + $0x160] sm:$0x1]
      %v5508 = vld [vmem:[%s5091 + $0x170] sm:$0xff]
      %v5509 = vld [vmem:[%s5091 + $0x178] sm:$0x1]
      %v5511 = vshrl.u32 %v5478, 16
      %v5513 = vshll.u32 %v5478, 16
      %v5515 = vrot.slane %v5513, 1
      %v5516 = vor.u32 %v5511, %v5515
      %v5518 = vshll.u32 %v5479, 16
      %v5520 = vrot.slane %v5518, 1
      %v5521 = vsel %vm4158, %v5516, %v5520
      %v5523 = vshrl.u32 %v5480, 16
      %v5525 = vshll.u32 %v5480, 16
      %v5527 = vrot.slane %v5525, 1
      %v5528 = vor.u32 %v5523, %v5527
      %v5530 = vshll.u32 %v5481, 16
      %v5532 = vrot.slane %v5530, 1
      %v5533 = vsel %vm4158, %v5528, %v5532
      %v5535 = vshrl.u32 %v5482, 16
      %v5537 = vshll.u32 %v5482, 16
      %v5539 = vrot.slane %v5537, 1
      %v5540 = vor.u32 %v5535, %v5539
      %v5542 = vshll.u32 %v5483, 16
      %v5544 = vrot.slane %v5542, 1
      %v5545 = vsel %vm4158, %v5540, %v5544
      %v5547 = vshrl.u32 %v5484, 16
      %v5549 = vshll.u32 %v5484, 16
      %v5551 = vrot.slane %v5549, 1
      %v5552 = vor.u32 %v5547, %v5551
      %v5554 = vshll.u32 %v5485, 16
      %v5556 = vrot.slane %v5554, 1
      %v5557 = vsel %vm4158, %v5552, %v5556
      %v5559 = vshrl.u32 %v5486, 16
      %v5561 = vshll.u32 %v5486, 16
      %v5563 = vrot.slane %v5561, 1
      %v5564 = vor.u32 %v5559, %v5563
      %v5566 = vshll.u32 %v5487, 16
      %v5568 = vrot.slane %v5566, 1
      %v5569 = vsel %vm4158, %v5564, %v5568
      %v5571 = vshrl.u32 %v5488, 16
      %v5573 = vshll.u32 %v5488, 16
      %v5575 = vrot.slane %v5573, 1
      %v5576 = vor.u32 %v5571, %v5575
      %v5578 = vshll.u32 %v5489, 16
      %v5580 = vrot.slane %v5578, 1
      %v5581 = vsel %vm4158, %v5576, %v5580
      %v5583 = vshrl.u32 %v5490, 16
      %v5585 = vshll.u32 %v5490, 16
      %v5587 = vrot.slane %v5585, 1
      %v5588 = vor.u32 %v5583, %v5587
      %v5590 = vshll.u32 %v5491, 16
      %v5592 = vrot.slane %v5590, 1
      %v5593 = vsel %vm4158, %v5588, %v5592
      %v5595 = vshrl.u32 %v5492, 16
      %v5597 = vshll.u32 %v5492, 16
      %v5599 = vrot.slane %v5597, 1
      %v5600 = vor.u32 %v5595, %v5599
      %v5602 = vshll.u32 %v5493, 16
      %v5604 = vrot.slane %v5602, 1
      %v5605 = vsel %vm4158, %v5600, %v5604
      %v5607 = vshrl.u32 %v5494, 16
      %v5609 = vshll.u32 %v5494, 16
      %v5611 = vrot.slane %v5609, 1
      %v5612 = vor.u32 %v5607, %v5611
      %v5614 = vshll.u32 %v5495, 16
      %v5616 = vrot.slane %v5614, 1
      %v5617 = vsel %vm4158, %v5612, %v5616
      %v5619 = vshrl.u32 %v5496, 16
      %v5621 = vshll.u32 %v5496, 16
      %v5623 = vrot.slane %v5621, 1
      %v5624 = vor.u32 %v5619, %v5623
      %v5626 = vshll.u32 %v5497, 16
      %v5628 = vrot.slane %v5626, 1
      %v5629 = vsel %vm4158, %v5624, %v5628
      %v5631 = vshrl.u32 %v5498, 16
      %v5633 = vshll.u32 %v5498, 16
      %v5635 = vrot.slane %v5633, 1
      %v5636 = vor.u32 %v5631, %v5635
      %v5638 = vshll.u32 %v5499, 16
      %v5640 = vrot.slane %v5638, 1
      %v5641 = vsel %vm4158, %v5636, %v5640
      %v5643 = vshrl.u32 %v5500, 16
      %v5645 = vshll.u32 %v5500, 16
      %v5647 = vrot.slane %v5645, 1
      %v5648 = vor.u32 %v5643, %v5647
      %v5650 = vshll.u32 %v5501, 16
      %v5652 = vrot.slane %v5650, 1
      %v5653 = vsel %vm4158, %v5648, %v5652
      %v5655 = vshrl.u32 %v5502, 16
      %v5657 = vshll.u32 %v5502, 16
      %v5659 = vrot.slane %v5657, 1
      %v5660 = vor.u32 %v5655, %v5659
      %v5662 = vshll.u32 %v5503, 16
      %v5664 = vrot.slane %v5662, 1
      %v5665 = vsel %vm4158, %v5660, %v5664
      %v5667 = vshrl.u32 %v5504, 16
      %v5669 = vshll.u32 %v5504, 16
      %v5671 = vrot.slane %v5669, 1
      %v5672 = vor.u32 %v5667, %v5671
      %v5674 = vshll.u32 %v5505, 16
      %v5676 = vrot.slane %v5674, 1
      %v5677 = vsel %vm4158, %v5672, %v5676
      %v5679 = vshrl.u32 %v5506, 16
      %v5681 = vshll.u32 %v5506, 16
      %v5683 = vrot.slane %v5681, 1
      %v5684 = vor.u32 %v5679, %v5683
      %v5686 = vshll.u32 %v5507, 16
      %v5688 = vrot.slane %v5686, 1
      %v5689 = vsel %vm4158, %v5684, %v5688
      %v5691 = vshrl.u32 %v5508, 16
      %v5693 = vshll.u32 %v5508, 16
      %v5695 = vrot.slane %v5693, 1
      %v5696 = vor.u32 %v5691, %v5695
      %v5698 = vshll.u32 %v5509, 16
      %v5700 = vrot.slane %v5698, 1
      %v5701 = vsel %vm4158, %v5696, %v5700
      %5702 = vrot.lane.b32.xlu0 %v5521, 64
      %v5703 = vpop.permute.xlu0 %5702
      %5704 = vrot.lane.b32.xlu0 %v5533, 64
      %v5705 = vpop.permute.xlu0 %5704
      %5706 = vrot.lane.b32.xlu0 %v5545, 64
      %v5707 = vpop.permute.xlu0 %5706
      %5708 = vrot.lane.b32.xlu0 %v5557, 64
      %v5709 = vpop.permute.xlu0 %5708
      %5710 = vrot.lane.b32.xlu0 %v5569, 64
      %v5711 = vpop.permute.xlu0 %5710
      %5712 = vrot.lane.b32.xlu0 %v5581, 64
      %v5713 = vpop.permute.xlu0 %5712
      %5714 = vrot.lane.b32.xlu0 %v5593, 64
      %v5715 = vpop.permute.xlu0 %5714
      %5716 = vrot.lane.b32.xlu0 %v5605, 64
      %v5717 = vpop.permute.xlu0 %5716
      %5718 = vrot.lane.b32.xlu0 %v5617, 64
      %v5719 = vpop.permute.xlu0 %5718
      %5720 = vrot.lane.b32.xlu0 %v5629, 64
      %v5721 = vpop.permute.xlu0 %5720
      %5722 = vrot.lane.b32.xlu0 %v5641, 64
      %v5723 = vpop.permute.xlu0 %5722
      %5724 = vrot.lane.b32.xlu0 %v5653, 64
      %v5725 = vpop.permute.xlu0 %5724
      %5726 = vrot.lane.b32.xlu0 %v5665, 64
      %v5727 = vpop.permute.xlu0 %5726
      %5728 = vrot.lane.b32.xlu0 %v5677, 64
      %v5729 = vpop.permute.xlu0 %5728
      %5730 = vrot.lane.b32.xlu0 %v5689, 64
      %v5731 = vpop.permute.xlu0 %5730
      %5732 = vrot.lane.b32.xlu0 %v5701, 64
      %v5733 = vpop.permute.xlu0 %5732
      %vm5750 = vcmask 589312
      %5751 = vst.msk [vmem:[#allocation4] sm:$0xff] %vm5750, %v5703
      %5752 = vst.msk [vmem:[#allocation4 + $0x8] sm:$0xff] %vm5750, %v5705
      %5753 = vst.msk [vmem:[#allocation4 + $0x10] sm:$0xff] %vm5750, %v5707
      %5754 = vst.msk [vmem:[#allocation4 + $0x18] sm:$0xff] %vm5750, %v5709
      %5755 = vst.msk [vmem:[#allocation4 + $0x20] sm:$0xff] %vm5750, %v5711
      %5756 = vst.msk [vmem:[#allocation4 + $0x28] sm:$0xff] %vm5750, %v5713
      %5757 = vst.msk [vmem:[#allocation4 + $0x30] sm:$0xff] %vm5750, %v5715
      %5758 = vst.msk [vmem:[#allocation4 + $0x38] sm:$0xff] %vm5750, %v5717
      %5759 = vst.msk [vmem:[#allocation4 + $0x40] sm:$0xff] %vm5750, %v5719
      %5760 = vst.msk [vmem:[#allocation4 + $0x48] sm:$0xff] %vm5750, %v5721
      %5761 = vst.msk [vmem:[#allocation4 + $0x50] sm:$0xff] %vm5750, %v5723
      %5762 = vst.msk [vmem:[#allocation4 + $0x58] sm:$0xff] %vm5750, %v5725
      %5763 = vst.msk [vmem:[#allocation4 + $0x60] sm:$0xff] %vm5750, %v5727
      %5764 = vst.msk [vmem:[#allocation4 + $0x68] sm:$0xff] %vm5750, %v5729
      %5765 = vst.msk [vmem:[#allocation4 + $0x70] sm:$0xff] %vm5750, %v5731
      %5766 = vst.msk [vmem:[#allocation4 + $0x78] sm:$0xff] %vm5750, %v5733
      %v5767 = vld [vmem:[#allocation4] sm:$0xff]
      %v5768 = vld [vmem:[#allocation4 + $0x8] sm:$0xff]
      %v5769 = vld [vmem:[#allocation4 + $0x10] sm:$0xff]
      %v5770 = vld [vmem:[#allocation4 + $0x18] sm:$0xff]
      %v5771 = vld [vmem:[#allocation4 + $0x20] sm:$0xff]
      %v5772 = vld [vmem:[#allocation4 + $0x28] sm:$0xff]
      %v5773 = vld [vmem:[#allocation4 + $0x30] sm:$0xff]
      %v5774 = vld [vmem:[#allocation4 + $0x38] sm:$0xff]
      %v5775 = vld [vmem:[#allocation4 + $0x40] sm:$0xff]
      %v5776 = vld [vmem:[#allocation4 + $0x48] sm:$0xff]
      %v5777 = vld [vmem:[#allocation4 + $0x50] sm:$0xff]
      %v5778 = vld [vmem:[#allocation4 + $0x58] sm:$0xff]
      %v5779 = vld [vmem:[#allocation4 + $0x60] sm:$0xff]
      %v5780 = vld [vmem:[#allocation4 + $0x68] sm:$0xff]
      %v5781 = vld [vmem:[#allocation4 + $0x70] sm:$0xff]
      %v5782 = vld [vmem:[#allocation4 + $0x78] sm:$0xff]
      %v5783 = vld [vmem:[%s2] sm:$0xf]
      %v5784 = vld [vmem:[%s2 + $0x4] sm:$0xf]
      %v5785 = vld [vmem:[%s2 + $0x8] sm:$0xf]
      %v5786 = vld [vmem:[%s2 + $0xc] sm:$0xf]
      %v5787 = vld [vmem:[%s2 + $0x10] sm:$0xf]
      %v5788 = vld [vmem:[%s2 + $0x14] sm:$0xf]
      %v5789 = vld [vmem:[%s2 + $0x18] sm:$0xf]
      %v5790 = vld [vmem:[%s2 + $0x1c] sm:$0xf]
      %v5791 = vld [vmem:[%s2 + $0x20] sm:$0xf]
      %v5792 = vld [vmem:[%s5] sm:$0x1]
      %v5794 = vlaneseq
      %v5795 = vshrl.u32 %v5794, 7
      %v5796 = vsub.s32 0, %v5795
      %v5797 = vrot.slane %v5792, %v5796
      %v5808 = vunpack.c.l.b16 %v5783
      %v5809 = vunpack.c.l.b16 %v5784
      %v5810 = vunpack.c.l.b16 %v5785
      %v5811 = vunpack.c.l.b16 %v5786
      %v5812 = vunpack.c.l.b16 %v5787
      %v5813 = vunpack.c.l.b16 %v5788
      %v5814 = vunpack.c.l.b16 %v5789
      %v5815 = vunpack.c.l.b16 %v5790
      %v5816 = vunpack.c.l.b16 %v5791
      %v5817 = vpack.c.b16 %v5809, %v5808
      %v5818 = vpack.c.b16 %v5811, %v5810
      %v5819 = vpack.c.b16 %v5813, %v5812
      %v5820 = vpack.c.b16 %v5815, %v5814
      %v5821 = vpack.c.b16 %v5816, %v5816
      %vm5826 = vcmask 588800
      %v5828 = vsel %vm5826, %v5767, 0
      %v5831 = vsel %vm5826, %v5768, 0
      %v5834 = vsel %vm5826, %v5769, 0
      %v5837 = vsel %vm5826, %v5770, 0
      %v5840 = vsel %vm5826, %v5771, 0
      %v5843 = vsel %vm5826, %v5772, 0
      %v5846 = vsel %vm5826, %v5773, 0
      %v5849 = vsel %vm5826, %v5774, 0
      %v5852 = vsel %vm5826, %v5775, 0
      %v5855 = vsel %vm5826, %v5776, 0
      %v5858 = vsel %vm5826, %v5777, 0
      %v5861 = vsel %vm5826, %v5778, 0
      %v5864 = vsel %vm5826, %v5779, 0
      %v5867 = vsel %vm5826, %v5780, 0
      %v5870 = vsel %vm5826, %v5781, 0
      %v5873 = vsel %vm5826, %v5782, 0
      %vm5875 = vcmask 1043456
      %v5877 = vsel %vm5875, %v5821, 0
      %5879 = vmatprep.subr.bf16.mxu0 0
      %5880 = vmatpush1.bf16.msra.mxu0 %v5817
      %5881 = vmatprep.subr.bf16.mxu0 0
      %5882 = vmatpush1.bf16.msra.mxu0 %v5818
      %5883 = vmatprep.subr.bf16.mxu0 0
      %5884 = vmatpush1.bf16.msra.mxu0 %v5819
      %5885 = vmatprep.subr.bf16.mxu0 0
      %5886 = vmatpush1.bf16.msra.mxu0 %v5820
      %5887 = vmatprep.subr.bf16.mxu0 0
      %5888 = vmatpush1.bf16.msra.mxu0 %v5877
      %5889 = vmatprep.subr.bf16.mxu0 0
      %5890 = vmatpush1.bf16.msra.mxu0 0
      %5891 = vmatprep.subr.bf16.mxu0 0
      %5892 = vmatpush1.bf16.msra.mxu0 0
      %5893 = vmatprep.subr.bf16.mxu0 0
      %5894 = vmatpush1.bf16.msra.mxu0 0
      %5895 = vmatprep.subr.bf16.mxu0 0
      %5896 = vmatpush1.bf16.msra.mxu0 0
      %5897 = vmatprep.subr.bf16.mxu0 0
      %5898 = vmatpush1.bf16.msra.mxu0 0
      %5899 = vmatprep.subr.bf16.mxu0 0
      %5900 = vmatpush1.bf16.msra.mxu0 0
      %5901 = vmatprep.subr.bf16.mxu0 0
      %5902 = vmatpush1.bf16.msra.mxu0 0
      %5903 = vmatprep.subr.bf16.mxu0 0
      %5904 = vmatpush1.bf16.msra.mxu0 0
      %5905 = vmatprep.subr.bf16.mxu0 0
      %5906 = vmatpush1.bf16.msra.mxu0 0
      %5907 = vmatprep.subr.bf16.mxu0 0
      %5908 = vmatpush1.bf16.msra.mxu0 0
      %5909 = vmatprep.subr.bf16.mxu0 0
      %5910 = vmatpush1.bf16.msra.mxu0 0
      %5911 = vmatprep.mubr.bf16.mxu0 0
      %5912 = vmatmul.mubr.bf16.gmra.mrb[0].mxu0 %v5828
      %v5913 = vpop.f32.mrb[0].mxu0
      %v5914 = vadd.f32 %v5797, %v5913
      %v5915 = vpop.f32.mrb[0].mxu0
      %v5916 = vpop.f32.mrb[0].mxu0
      %v5917 = vadd.f32 %v5797, %v5916
      %v5918 = vpop.f32.mrb[0].mxu0
      %5919 = vmatprep.mubr.bf16.mxu0 0
      %5920 = vmatmul.mubr.bf16.gmra.mrb[0].mxu0 %v5831
      %v5921 = vpop.f32.mrb[0].mxu0
      %v5922 = vadd.f32 %v5797, %v5921
      %v5923 = vpop.f32.mrb[0].mxu0
      %v5924 = vpop.f32.mrb[0].mxu0
      %v5925 = vadd.f32 %v5797, %v5924
      %v5926 = vpop.f32.mrb[0].mxu0
      %5927 = vmatprep.mubr.bf16.mxu0 0
      %5928 = vmatmul.mubr.bf16.gmra.mrb[0].mxu0 %v5834
      %v5929 = vpop.f32.mrb[0].mxu0
      %v5930 = vadd.f32 %v5797, %v5929
      %v5931 = vpop.f32.mrb[0].mxu0
      %v5932 = vpop.f32.mrb[0].mxu0
      %v5933 = vadd.f32 %v5797, %v5932
      %v5934 = vpop.f32.mrb[0].mxu0
      %5935 = vmatprep.mubr.bf16.mxu0 0
      %5936 = vmatmul.mubr.bf16.gmra.mrb[0].mxu0 %v5837
      %v5937 = vpop.f32.mrb[0].mxu0
      %v5938 = vadd.f32 %v5797, %v5937
      %v5939 = vpop.f32.mrb[0].mxu0
      %v5940 = vpop.f32.mrb[0].mxu0
      %v5941 = vadd.f32 %v5797, %v5940
      %v5942 = vpop.f32.mrb[0].mxu0
      %5943 = vmatprep.mubr.bf16.mxu0 0
      %5944 = vmatmul.mubr.bf16.gmra.mrb[0].mxu0 %v5840
      %v5945 = vpop.f32.mrb[0].mxu0
      %v5946 = vadd.f32 %v5797, %v5945
      %v5947 = vpop.f32.mrb[0].mxu0
      %v5948 = vpop.f32.mrb[0].mxu0
      %v5949 = vadd.f32 %v5797, %v5948
      %v5950 = vpop.f32.mrb[0].mxu0
      %5951 = vmatprep.mubr.bf16.mxu0 0
      %5952 = vmatmul.mubr.bf16.gmra.mrb[0].mxu0 %v5843
      %v5953 = vpop.f32.mrb[0].mxu0
      %v5954 = vadd.f32 %v5797, %v5953
      %v5955 = vpop.f32.mrb[0].mxu0
      %v5956 = vpop.f32.mrb[0].mxu0
      %v5957 = vadd.f32 %v5797, %v5956
      %v5958 = vpop.f32.mrb[0].mxu0
      %5959 = vmatprep.mubr.bf16.mxu0 0
      %5960 = vmatmul.mubr.bf16.gmra.mrb[0].mxu0 %v5846
      %v5961 = vpop.f32.mrb[0].mxu0
      %v5962 = vadd.f32 %v5797, %v5961
      %v5963 = vpop.f32.mrb[0].mxu0
      %v5964 = vpop.f32.mrb[0].mxu0
      %v5965 = vadd.f32 %v5797, %v5964
      %v5966 = vpop.f32.mrb[0].mxu0
      %5967 = vmatprep.mubr.bf16.mxu0 0
      %5968 = vmatmul.mubr.bf16.gmra.mrb[0].mxu0 %v5849
      %v5969 = vpop.f32.mrb[0].mxu0
      %v5970 = vadd.f32 %v5797, %v5969
      %v5971 = vpop.f32.mrb[0].mxu0
      %v5972 = vpop.f32.mrb[0].mxu0
      %v5973 = vadd.f32 %v5797, %v5972
      %v5974 = vpop.f32.mrb[0].mxu0
      %5975 = vmatprep.mubr.bf16.mxu0 0
      %5976 = vmatmul.mubr.bf16.gmra.mrb[0].mxu0 %v5852
      %v5977 = vpop.f32.mrb[0].mxu0
      %v5978 = vadd.f32 %v5797, %v5977
      %v5979 = vpop.f32.mrb[0].mxu0
      %v5980 = vpop.f32.mrb[0].mxu0
      %v5981 = vadd.f32 %v5797, %v5980
      %v5982 = vpop.f32.mrb[0].mxu0
      %5983 = vmatprep.mubr.bf16.mxu0 0
      %5984 = vmatmul.mubr.bf16.gmra.mrb[0].mxu0 %v5855
      %v5985 = vpop.f32.mrb[0].mxu0
      %v5986 = vadd.f32 %v5797, %v5985
      %v5987 = vpop.f32.mrb[0].mxu0
      %v5988 = vpop.f32.mrb[0].mxu0
      %v5989 = vadd.f32 %v5797, %v5988
      %v5990 = vpop.f32.mrb[0].mxu0
      %5991 = vmatprep.mubr.bf16.mxu0 0
      %5992 = vmatmul.mubr.bf16.gmra.mrb[0].mxu0 %v5858
      %v5993 = vpop.f32.mrb[0].mxu0
      %v5994 = vadd.f32 %v5797, %v5993
      %v5995 = vpop.f32.mrb[0].mxu0
      %v5996 = vpop.f32.mrb[0].mxu0
      %v5997 = vadd.f32 %v5797, %v5996
      %v5998 = vpop.f32.mrb[0].mxu0
      %5999 = vmatprep.mubr.bf16.mxu0 0
      %6000 = vmatmul.mubr.bf16.gmra.mrb[0].mxu0 %v5861
      %v6001 = vpop.f32.mrb[0].mxu0
      %v6002 = vadd.f32 %v5797, %v6001
      %v6003 = vpop.f32.mrb[0].mxu0
      %v6004 = vpop.f32.mrb[0].mxu0
      %v6005 = vadd.f32 %v5797, %v6004
      %v6006 = vpop.f32.mrb[0].mxu0
      %6007 = vmatprep.mubr.bf16.mxu0 0
      %6008 = vmatmul.mubr.bf16.gmra.mrb[0].mxu0 %v5864
      %v6009 = vpop.f32.mrb[0].mxu0
      %v6010 = vadd.f32 %v5797, %v6009
      %v6011 = vpop.f32.mrb[0].mxu0
      %v6012 = vpop.f32.mrb[0].mxu0
      %v6013 = vadd.f32 %v5797, %v6012
      %v6014 = vpop.f32.mrb[0].mxu0
      %6015 = vmatprep.mubr.bf16.mxu0 0
      %6016 = vmatmul.mubr.bf16.gmra.mrb[0].mxu0 %v5867
      %v6017 = vpop.f32.mrb[0].mxu0
      %v6018 = vadd.f32 %v5797, %v6017
      %v6019 = vpop.f32.mrb[0].mxu0
      %v6020 = vpop.f32.mrb[0].mxu0
      %v6021 = vadd.f32 %v5797, %v6020
      %v6022 = vpop.f32.mrb[0].mxu0
      %6023 = vmatprep.mubr.bf16.mxu0 0
      %6024 = vmatmul.mubr.bf16.gmra.mrb[0].mxu0 %v5870
      %v6025 = vpop.f32.mrb[0].mxu0
      %v6026 = vadd.f32 %v5797, %v6025
      %v6027 = vpop.f32.mrb[0].mxu0
      %v6028 = vpop.f32.mrb[0].mxu0
      %v6029 = vadd.f32 %v5797, %v6028
      %v6030 = vpop.f32.mrb[0].mxu0
      %6031 = vmatprep.mubr.bf16.mxu0 0
      %6032 = vmatmul.mubr.bf16.gmra.mrb[0].mxu0 %v5873
      %v6033 = vpop.f32.mrb[0].mxu0
      %v6034 = vadd.f32 %v5797, %v6033
      %v6035 = vpop.f32.mrb[0].mxu0
      %v6036 = vpop.f32.mrb[0].mxu0
      %v6037 = vadd.f32 %v5797, %v6036
      %v6038 = vpop.f32.mrb[0].mxu0
      %6039 = vdwg.mxu0
      %v6041 = vshrl.u32 %v254, 16
      %v6043 = vrot.slane %v6041, 4
      %v6044 = vshll.u32 %v254, 16
      %v6046 = vrot.slane %v6044, 5
      %v6047 = vor.u32 %v6043, %v6046
      %v6048 = vrot.slane %v6047, 4
      %v6050 = vshll.u32 %v255, 16
      %v6052 = vrot.slane %v6050, 5
      %v6053 = vsel %vm497, %v6048, %v6052
      %v6054 = vshrl.u32 %v255, 16
      %v6056 = vrot.slane %v6054, 4
      %v6057 = vor.u32 %v6056, %v6052
      %v6058 = vrot.slane %v6057, 4
      %v6060 = vshll.u32 %v256, 16
      %v6062 = vrot.slane %v6060, 5
      %v6063 = vsel %vm497, %v6058, %v6062
      %v6065 = vshrl.u32 %v257, 16
      %v6067 = vrot.slane %v6065, 4
      %v6068 = vshll.u32 %v257, 16
      %v6070 = vrot.slane %v6068, 5
      %v6071 = vor.u32 %v6067, %v6070
      %v6072 = vrot.slane %v6071, 4
      %v6074 = vshll.u32 %v258, 16
      %v6076 = vrot.slane %v6074, 5
      %v6077 = vsel %vm497, %v6072, %v6076
      %v6078 = vshrl.u32 %v258, 16
      %v6080 = vrot.slane %v6078, 4
      %v6081 = vor.u32 %v6080, %v6076
      %v6082 = vrot.slane %v6081, 4
      %v6084 = vshll.u32 %v259, 16
      %v6086 = vrot.slane %v6084, 5
      %v6087 = vsel %vm497, %v6082, %v6086
      %v6089 = vshrl.u32 %v260, 16
      %v6091 = vrot.slane %v6089, 4
      %v6092 = vshll.u32 %v260, 16
      %v6094 = vrot.slane %v6092, 5
      %v6095 = vor.u32 %v6091, %v6094
      %v6096 = vrot.slane %v6095, 4
      %v6098 = vshll.u32 %v261, 16
      %v6100 = vrot.slane %v6098, 5
      %v6101 = vsel %vm497, %v6096, %v6100
      %v6102 = vshrl.u32 %v261, 16
      %v6104 = vrot.slane %v6102, 4
      %v6105 = vor.u32 %v6104, %v6100
      %v6106 = vrot.slane %v6105, 4
      %v6108 = vshll.u32 %v262, 16
      %v6110 = vrot.slane %v6108, 5
      %v6111 = vsel %vm497, %v6106, %v6110
      %v6113 = vshrl.u32 %v263, 16
      %v6115 = vrot.slane %v6113, 4
      %v6116 = vshll.u32 %v263, 16
      %v6118 = vrot.slane %v6116, 5
      %v6119 = vor.u32 %v6115, %v6118
      %v6120 = vrot.slane %v6119, 4
      %v6122 = vshll.u32 %v264, 16
      %v6124 = vrot.slane %v6122, 5
      %v6125 = vsel %vm497, %v6120, %v6124
      %v6126 = vshrl.u32 %v264, 16
      %v6128 = vrot.slane %v6126, 4
      %v6129 = vor.u32 %v6128, %v6124
      %v6130 = vrot.slane %v6129, 4
      %v6132 = vshll.u32 %v265, 16
      %v6134 = vrot.slane %v6132, 5
      %v6135 = vsel %vm497, %v6130, %v6134
      %v6137 = vshrl.u32 %v266, 16
      %v6139 = vrot.slane %v6137, 4
      %v6140 = vshll.u32 %v266, 16
      %v6142 = vrot.slane %v6140, 5
      %v6143 = vor.u32 %v6139, %v6142
      %v6144 = vrot.slane %v6143, 4
      %v6146 = vshll.u32 %v267, 16
      %v6148 = vrot.slane %v6146, 5
      %v6149 = vsel %vm497, %v6144, %v6148
      %v6150 = vshrl.u32 %v267, 16
      %v6152 = vrot.slane %v6150, 4
      %v6153 = vor.u32 %v6152, %v6148
      %v6154 = vrot.slane %v6153, 4
      %v6156 = vshll.u32 %v268, 16
      %v6158 = vrot.slane %v6156, 5
      %v6159 = vsel %vm497, %v6154, %v6158
      %v6161 = vshrl.u32 %v269, 16
      %v6163 = vrot.slane %v6161, 4
      %v6164 = vshll.u32 %v269, 16
      %v6166 = vrot.slane %v6164, 5
      %v6167 = vor.u32 %v6163, %v6166
      %v6168 = vrot.slane %v6167, 4
      %v6170 = vshll.u32 %v270, 16
      %v6172 = vrot.slane %v6170, 5
      %v6173 = vsel %vm497, %v6168, %v6172
      %v6174 = vshrl.u32 %v270, 16
      %v6176 = vrot.slane %v6174, 4
      %v6177 = vor.u32 %v6176, %v6172
      %v6178 = vrot.slane %v6177, 4
      %v6180 = vshll.u32 %v271, 16
      %v6182 = vrot.slane %v6180, 5
      %v6183 = vsel %vm497, %v6178, %v6182
      %v6185 = vshrl.u32 %v272, 16
      %v6187 = vrot.slane %v6185, 4
      %v6188 = vshll.u32 %v272, 16
      %v6190 = vrot.slane %v6188, 5
      %v6191 = vor.u32 %v6187, %v6190
      %v6192 = vrot.slane %v6191, 4
      %v6194 = vshll.u32 %v273, 16
      %v6196 = vrot.slane %v6194, 5
      %v6197 = vsel %vm497, %v6192, %v6196
      %v6198 = vshrl.u32 %v273, 16
      %v6200 = vrot.slane %v6198, 4
      %v6201 = vor.u32 %v6200, %v6196
      %v6202 = vrot.slane %v6201, 4
      %v6204 = vshll.u32 %v274, 16
      %v6206 = vrot.slane %v6204, 5
      %v6207 = vsel %vm497, %v6202, %v6206
      %v6209 = vshrl.u32 %v275, 16
      %v6211 = vrot.slane %v6209, 4
      %v6212 = vshll.u32 %v275, 16
      %v6214 = vrot.slane %v6212, 5
      %v6215 = vor.u32 %v6211, %v6214
      %v6216 = vrot.slane %v6215, 4
      %v6218 = vshll.u32 %v276, 16
      %v6220 = vrot.slane %v6218, 5
      %v6221 = vsel %vm497, %v6216, %v6220
      %v6222 = vshrl.u32 %v276, 16
      %v6224 = vrot.slane %v6222, 4
      %v6225 = vor.u32 %v6224, %v6220
      %v6226 = vrot.slane %v6225, 4
      %v6228 = vshll.u32 %v277, 16
      %v6230 = vrot.slane %v6228, 5
      %v6231 = vsel %vm497, %v6226, %v6230
      %v6233 = vshrl.u32 %v278, 16
      %v6235 = vrot.slane %v6233, 4
      %v6236 = vshll.u32 %v278, 16
      %v6238 = vrot.slane %v6236, 5
      %v6239 = vor.u32 %v6235, %v6238
      %v6240 = vrot.slane %v6239, 4
      %v6242 = vshll.u32 %v279, 16
      %v6244 = vrot.slane %v6242, 5
      %v6245 = vsel %vm497, %v6240, %v6244
      %v6246 = vshrl.u32 %v279, 16
      %v6248 = vrot.slane %v6246, 4
      %v6249 = vor.u32 %v6248, %v6244
      %v6250 = vrot.slane %v6249, 4
      %v6252 = vshll.u32 %v280, 16
      %v6254 = vrot.slane %v6252, 5
      %v6255 = vsel %vm497, %v6250, %v6254
      %v6257 = vshrl.u32 %v281, 16
      %v6259 = vrot.slane %v6257, 4
      %v6260 = vshll.u32 %v281, 16
      %v6262 = vrot.slane %v6260, 5
      %v6263 = vor.u32 %v6259, %v6262
      %v6264 = vrot.slane %v6263, 4
      %v6266 = vshll.u32 %v282, 16
      %v6268 = vrot.slane %v6266, 5
      %v6269 = vsel %vm497, %v6264, %v6268
      %v6270 = vshrl.u32 %v282, 16
      %v6272 = vrot.slane %v6270, 4
      %v6273 = vor.u32 %v6272, %v6268
      %v6274 = vrot.slane %v6273, 4
      %v6276 = vshll.u32 %v283, 16
      %v6278 = vrot.slane %v6276, 5
      %v6279 = vsel %vm497, %v6274, %v6278
      %v6281 = vshrl.u32 %v284, 16
      %v6283 = vrot.slane %v6281, 4
      %v6284 = vshll.u32 %v284, 16
      %v6286 = vrot.slane %v6284, 5
      %v6287 = vor.u32 %v6283, %v6286
      %v6288 = vrot.slane %v6287, 4
      %v6290 = vshll.u32 %v285, 16
      %v6292 = vrot.slane %v6290, 5
      %v6293 = vsel %vm497, %v6288, %v6292
      %v6294 = vshrl.u32 %v285, 16
      %v6296 = vrot.slane %v6294, 4
      %v6297 = vor.u32 %v6296, %v6292
      %v6298 = vrot.slane %v6297, 4
      %v6300 = vshll.u32 %v286, 16
      %v6302 = vrot.slane %v6300, 5
      %v6303 = vsel %vm497, %v6298, %v6302
      %v6305 = vshrl.u32 %v287, 16
      %v6307 = vrot.slane %v6305, 4
      %v6308 = vshll.u32 %v287, 16
      %v6310 = vrot.slane %v6308, 5
      %v6311 = vor.u32 %v6307, %v6310
      %v6312 = vrot.slane %v6311, 4
      %v6314 = vshll.u32 %v288, 16
      %v6316 = vrot.slane %v6314, 5
      %v6317 = vsel %vm497, %v6312, %v6316
      %v6318 = vshrl.u32 %v288, 16
      %v6320 = vrot.slane %v6318, 4
      %v6321 = vor.u32 %v6320, %v6316
      %v6322 = vrot.slane %v6321, 4
      %v6324 = vshll.u32 %v289, 16
      %v6326 = vrot.slane %v6324, 5
      %v6327 = vsel %vm497, %v6322, %v6326
      %v6329 = vshrl.u32 %v290, 16
      %v6331 = vrot.slane %v6329, 4
      %v6332 = vshll.u32 %v290, 16
      %v6334 = vrot.slane %v6332, 5
      %v6335 = vor.u32 %v6331, %v6334
      %v6336 = vrot.slane %v6335, 4
      %v6338 = vshll.u32 %v291, 16
      %v6340 = vrot.slane %v6338, 5
      %v6341 = vsel %vm497, %v6336, %v6340
      %v6342 = vshrl.u32 %v291, 16
      %v6344 = vrot.slane %v6342, 4
      %v6345 = vor.u32 %v6344, %v6340
      %v6346 = vrot.slane %v6345, 4
      %v6348 = vshll.u32 %v292, 16
      %v6350 = vrot.slane %v6348, 5
      %v6351 = vsel %vm497, %v6346, %v6350
      %v6353 = vshrl.u32 %v293, 16
      %v6355 = vrot.slane %v6353, 4
      %v6356 = vshll.u32 %v293, 16
      %v6358 = vrot.slane %v6356, 5
      %v6359 = vor.u32 %v6355, %v6358
      %v6360 = vrot.slane %v6359, 4
      %v6362 = vshll.u32 %v294, 16
      %v6364 = vrot.slane %v6362, 5
      %v6365 = vsel %vm497, %v6360, %v6364
      %v6366 = vshrl.u32 %v294, 16
      %v6368 = vrot.slane %v6366, 4
      %v6369 = vor.u32 %v6368, %v6364
      %v6370 = vrot.slane %v6369, 4
      %v6372 = vshll.u32 %v295, 16
      %v6374 = vrot.slane %v6372, 5
      %v6375 = vsel %vm497, %v6370, %v6374
      %v6377 = vshrl.u32 %v296, 16
      %v6379 = vrot.slane %v6377, 4
      %v6380 = vshll.u32 %v296, 16
      %v6382 = vrot.slane %v6380, 5
      %v6383 = vor.u32 %v6379, %v6382
      %v6384 = vrot.slane %v6383, 4
      %v6386 = vshll.u32 %v297, 16
      %v6388 = vrot.slane %v6386, 5
      %v6389 = vsel %vm497, %v6384, %v6388
      %v6390 = vshrl.u32 %v297, 16
      %v6392 = vrot.slane %v6390, 4
      %v6393 = vor.u32 %v6392, %v6388
      %v6394 = vrot.slane %v6393, 4
      %v6396 = vshll.u32 %v298, 16
      %v6398 = vrot.slane %v6396, 5
      %v6399 = vsel %vm497, %v6394, %v6398
      %v6401 = vshrl.u32 %v299, 16
      %v6403 = vrot.slane %v6401, 4
      %v6404 = vshll.u32 %v299, 16
      %v6406 = vrot.slane %v6404, 5
      %v6407 = vor.u32 %v6403, %v6406
      %v6408 = vrot.slane %v6407, 4
      %v6410 = vshll.u32 %v300, 16
      %v6412 = vrot.slane %v6410, 5
      %v6413 = vsel %vm497, %v6408, %v6412
      %v6414 = vshrl.u32 %v300, 16
      %v6416 = vrot.slane %v6414, 4
      %v6417 = vor.u32 %v6416, %v6412
      %v6418 = vrot.slane %v6417, 4
      %v6420 = vshll.u32 %v301, 16
      %v6422 = vrot.slane %v6420, 5
      %v6423 = vsel %vm497, %v6418, %v6422
      %v6424 = vld [vmem:[%s3] sm:$0x3]
      %v6425 = vunpack.c.l.b16 %v6053
      %v6426 = vunpack.c.l.b16 %v6063
      %v6427 = vunpack.c.l.b16 %v6077
      %v6428 = vunpack.c.l.b16 %v6087
      %v6429 = vunpack.c.l.b16 %v6101
      %v6430 = vunpack.c.l.b16 %v6111
      %v6431 = vunpack.c.l.b16 %v6125
      %v6432 = vunpack.c.l.b16 %v6135
      %v6433 = vunpack.c.l.b16 %v6149
      %v6434 = vunpack.c.l.b16 %v6159
      %v6435 = vunpack.c.l.b16 %v6173
      %v6436 = vunpack.c.l.b16 %v6183
      %v6437 = vunpack.c.l.b16 %v6197
      %v6438 = vunpack.c.l.b16 %v6207
      %v6439 = vunpack.c.l.b16 %v6221
      %v6440 = vunpack.c.l.b16 %v6231
      %v6441 = vunpack.c.l.b16 %v6245
      %v6442 = vunpack.c.l.b16 %v6255
      %v6443 = vunpack.c.l.b16 %v6269
      %v6444 = vunpack.c.l.b16 %v6279
      %v6445 = vunpack.c.l.b16 %v6293
      %v6446 = vunpack.c.l.b16 %v6303
      %v6447 = vunpack.c.l.b16 %v6317
      %v6448 = vunpack.c.l.b16 %v6327
      %v6449 = vunpack.c.l.b16 %v6341
      %v6450 = vunpack.c.l.b16 %v6351
      %v6451 = vunpack.c.l.b16 %v6365
      %v6452 = vunpack.c.l.b16 %v6375
      %v6453 = vunpack.c.l.b16 %v6389
      %v6454 = vunpack.c.l.b16 %v6399
      %v6455 = vunpack.c.l.b16 %v6413
      %v6456 = vunpack.c.l.b16 %v6423
      %v6457 = vpack.c.b16 %v6426, %v6425
      %v6458 = vpack.c.b16 %v6428, %v6427
      %v6459 = vpack.c.b16 %v6430, %v6429
      %v6460 = vpack.c.b16 %v6432, %v6431
      %v6461 = vpack.c.b16 %v6434, %v6433
      %v6462 = vpack.c.b16 %v6436, %v6435
      %v6463 = vpack.c.b16 %v6438, %v6437
      %v6464 = vpack.c.b16 %v6440, %v6439
      %v6465 = vpack.c.b16 %v6442, %v6441
      %v6466 = vpack.c.b16 %v6444, %v6443
      %v6467 = vpack.c.b16 %v6446, %v6445
      %v6468 = vpack.c.b16 %v6448, %v6447
      %v6469 = vpack.c.b16 %v6450, %v6449
      %v6470 = vpack.c.b16 %v6452, %v6451
      %v6471 = vpack.c.b16 %v6454, %v6453
      %v6472 = vpack.c.b16 %v6456, %v6455
      %v6474 = vsel %vm430, %v6457, 0
      %v6477 = vsel %vm430, %v6458, 0
      %v6480 = vsel %vm430, %v6459, 0
      %v6483 = vsel %vm430, %v6460, 0
      %v6486 = vsel %vm430, %v6461, 0
      %v6489 = vsel %vm430, %v6462, 0
      %v6492 = vsel %vm430, %v6463, 0
      %v6495 = vsel %vm430, %v6464, 0
      %v6498 = vsel %vm430, %v6465, 0
      %v6501 = vsel %vm430, %v6466, 0
      %v6504 = vsel %vm430, %v6467, 0
      %v6507 = vsel %vm430, %v6468, 0
      %v6510 = vsel %vm430, %v6469, 0
      %v6513 = vsel %vm430, %v6470, 0
      %v6516 = vsel %vm430, %v6471, 0
      %v6519 = vsel %vm430, %v6472, 0
      %v6522 = vsel %vm3498, %v6424, 0
      %6524 = vmatprep.subr.bf16.mxu0 0
      %6525 = vmatpush1.bf16.msra.mxu0 %v6522
      %6526 = vmatprep.subr.bf16.mxu0 0
      %6527 = vmatpush1.bf16.msra.mxu0 0
      %6528 = vmatprep.subr.bf16.mxu0 0
      %6529 = vmatpush1.bf16.msra.mxu0 0
      %6530 = vmatprep.subr.bf16.mxu0 0
      %6531 = vmatpush1.bf16.msra.mxu0 0
      %6532 = vmatprep.subr.bf16.mxu0 0
      %6533 = vmatpush1.bf16.msra.mxu0 0
      %6534 = vmatprep.subr.bf16.mxu0 0
      %6535 = vmatpush1.bf16.msra.mxu0 0
      %6536 = vmatprep.subr.bf16.mxu0 0
      %6537 = vmatpush1.bf16.msra.mxu0 0
      %6538 = vmatprep.subr.bf16.mxu0 0
      %6539 = vmatpush1.bf16.msra.mxu0 0
      %6540 = vmatprep.subr.bf16.mxu0 0
      %6541 = vmatpush1.bf16.msra.mxu0 0
      %6542 = vmatprep.subr.bf16.mxu0 0
      %6543 = vmatpush1.bf16.msra.mxu0 0
      %6544 = vmatprep.subr.bf16.mxu0 0
      %6545 = vmatpush1.bf16.msra.mxu0 0
      %6546 = vmatprep.subr.bf16.mxu0 0
      %6547 = vmatpush1.bf16.msra.mxu0 0
      %6548 = vmatprep.subr.bf16.mxu0 0
      %6549 = vmatpush1.bf16.msra.mxu0 0
      %6550 = vmatprep.subr.bf16.mxu0 0
      %6551 = vmatpush1.bf16.msra.mxu0 0
      %6552 = vmatprep.subr.bf16.mxu0 0
      %6553 = vmatpush1.bf16.msra.mxu0 0
      %6554 = vmatprep.subr.bf16.mxu0 0
      %6555 = vmatpush1.bf16.msra.mxu0 0
      %6556 = vmatprep.mubr.bf16.mxu0 0
      %6557 = vmatmul.mubr.bf16.gmra.mrb[0].mxu0 %v6474
      %v6558 = vpop.f32.mrb[0].mxu0
      %v6559 = vadd.f32 %v5914, %v6558
      %v6560 = vpop.f32.mrb[0].mxu0
      %v6561 = vpop.f32.mrb[0].mxu0
      %v6562 = vadd.f32 %v5917, %v6561
      %v6563 = vpop.f32.mrb[0].mxu0
      %6564 = vmatprep.mubr.bf16.mxu0 0
      %6565 = vmatmul.mubr.bf16.gmra.mrb[0].mxu0 %v6477
      %v6566 = vpop.f32.mrb[0].mxu0
      %v6567 = vadd.f32 %v5922, %v6566
      %v6568 = vpop.f32.mrb[0].mxu0
      %v6569 = vpop.f32.mrb[0].mxu0
      %v6570 = vadd.f32 %v5925, %v6569
      %v6571 = vpop.f32.mrb[0].mxu0
      %6572 = vmatprep.mubr.bf16.mxu0 0
      %6573 = vmatmul.mubr.bf16.gmra.mrb[0].mxu0 %v6480
      %v6574 = vpop.f32.mrb[0].mxu0
      %v6575 = vadd.f32 %v5930, %v6574
      %v6576 = vpop.f32.mrb[0].mxu0
      %v6577 = vpop.f32.mrb[0].mxu0
      %v6578 = vadd.f32 %v5933, %v6577
      %v6579 = vpop.f32.mrb[0].mxu0
      %6580 = vmatprep.mubr.bf16.mxu0 0
      %6581 = vmatmul.mubr.bf16.gmra.mrb[0].mxu0 %v6483
      %v6582 = vpop.f32.mrb[0].mxu0
      %v6583 = vadd.f32 %v5938, %v6582
      %v6584 = vpop.f32.mrb[0].mxu0
      %v6585 = vpop.f32.mrb[0].mxu0
      %v6586 = vadd.f32 %v5941, %v6585
      %v6587 = vpop.f32.mrb[0].mxu0
      %6588 = vmatprep.mubr.bf16.mxu0 0
      %6589 = vmatmul.mubr.bf16.gmra.mrb[0].mxu0 %v6486
      %v6590 = vpop.f32.mrb[0].mxu0
      %v6591 = vadd.f32 %v5946, %v6590
      %v6592 = vpop.f32.mrb[0].mxu0
      %v6593 = vpop.f32.mrb[0].mxu0
      %v6594 = vadd.f32 %v5949, %v6593
      %v6595 = vpop.f32.mrb[0].mxu0
      %6596 = vmatprep.mubr.bf16.mxu0 0
      %6597 = vmatmul.mubr.bf16.gmra.mrb[0].mxu0 %v6489
      %v6598 = vpop.f32.mrb[0].mxu0
      %v6599 = vadd.f32 %v5954, %v6598
      %v6600 = vpop.f32.mrb[0].mxu0
      %v6601 = vpop.f32.mrb[0].mxu0
      %v6602 = vadd.f32 %v5957, %v6601
      %v6603 = vpop.f32.mrb[0].mxu0
      %6604 = vmatprep.mubr.bf16.mxu0 0
      %6605 = vmatmul.mubr.bf16.gmra.mrb[0].mxu0 %v6492
      %v6606 = vpop.f32.mrb[0].mxu0
      %v6607 = vadd.f32 %v5962, %v6606
      %v6608 = vpop.f32.mrb[0].mxu0
      %v6609 = vpop.f32.mrb[0].mxu0
      %v6610 = vadd.f32 %v5965, %v6609
      %v6611 = vpop.f32.mrb[0].mxu0
      %6612 = vmatprep.mubr.bf16.mxu0 0
      %6613 = vmatmul.mubr.bf16.gmra.mrb[0].mxu0 %v6495
      %v6614 = vpop.f32.mrb[0].mxu0
      %v6615 = vadd.f32 %v5970, %v6614
      %v6616 = vpop.f32.mrb[0].mxu0
      %v6617 = vpop.f32.mrb[0].mxu0
      %v6618 = vadd.f32 %v5973, %v6617
      %v6619 = vpop.f32.mrb[0].mxu0
      %6620 = vmatprep.mubr.bf16.mxu0 0
      %6621 = vmatmul.mubr.bf16.gmra.mrb[0].mxu0 %v6498
      %v6622 = vpop.f32.mrb[0].mxu0
      %v6623 = vadd.f32 %v5978, %v6622
      %v6624 = vpop.f32.mrb[0].mxu0
      %v6625 = vpop.f32.mrb[0].mxu0
      %v6626 = vadd.f32 %v5981, %v6625
      %v6627 = vpop.f32.mrb[0].mxu0
      %6628 = vmatprep.mubr.bf16.mxu0 0
      %6629 = vmatmul.mubr.bf16.gmra.mrb[0].mxu0 %v6501
      %v6630 = vpop.f32.mrb[0].mxu0
      %v6631 = vadd.f32 %v5986, %v6630
      %v6632 = vpop.f32.mrb[0].mxu0
      %v6633 = vpop.f32.mrb[0].mxu0
      %v6634 = vadd.f32 %v5989, %v6633
      %v6635 = vpop.f32.mrb[0].mxu0
      %6636 = vmatprep.mubr.bf16.mxu0 0
      %6637 = vmatmul.mubr.bf16.gmra.mrb[0].mxu0 %v6504
      %v6638 = vpop.f32.mrb[0].mxu0
      %v6639 = vadd.f32 %v5994, %v6638
      %v6640 = vpop.f32.mrb[0].mxu0
      %v6641 = vpop.f32.mrb[0].mxu0
      %v6642 = vadd.f32 %v5997, %v6641
      %v6643 = vpop.f32.mrb[0].mxu0
      %6644 = vmatprep.mubr.bf16.mxu0 0
      %6645 = vmatmul.mubr.bf16.gmra.mrb[0].mxu0 %v6507
      %v6646 = vpop.f32.mrb[0].mxu0
      %v6647 = vadd.f32 %v6002, %v6646
      %v6648 = vpop.f32.mrb[0].mxu0
      %v6649 = vpop.f32.mrb[0].mxu0
      %v6650 = vadd.f32 %v6005, %v6649
      %v6651 = vpop.f32.mrb[0].mxu0
      %6652 = vmatprep.mubr.bf16.mxu0 0
      %6653 = vmatmul.mubr.bf16.gmra.mrb[0].mxu0 %v6510
      %v6654 = vpop.f32.mrb[0].mxu0
      %v6655 = vadd.f32 %v6010, %v6654
      %v6656 = vpop.f32.mrb[0].mxu0
      %v6657 = vpop.f32.mrb[0].mxu0
      %v6658 = vadd.f32 %v6013, %v6657
      %v6659 = vpop.f32.mrb[0].mxu0
      %6660 = vmatprep.mubr.bf16.mxu0 0
      %6661 = vmatmul.mubr.bf16.gmra.mrb[0].mxu0 %v6513
      %v6662 = vpop.f32.mrb[0].mxu0
      %v6663 = vadd.f32 %v6018, %v6662
      %v6664 = vpop.f32.mrb[0].mxu0
      %v6665 = vpop.f32.mrb[0].mxu0
      %v6666 = vadd.f32 %v6021, %v6665
      %v6667 = vpop.f32.mrb[0].mxu0
      %6668 = vmatprep.mubr.bf16.mxu0 0
      %6669 = vmatmul.mubr.bf16.gmra.mrb[0].mxu0 %v6516
      %v6670 = vpop.f32.mrb[0].mxu0
      %v6671 = vadd.f32 %v6026, %v6670
      %v6672 = vpop.f32.mrb[0].mxu0
      %v6673 = vpop.f32.mrb[0].mxu0
      %v6674 = vadd.f32 %v6029, %v6673
      %v6675 = vpop.f32.mrb[0].mxu0
      %6676 = vmatprep.mubr.bf16.mxu0 0
      %6677 = vmatmul.mubr.bf16.gmra.mrb[0].mxu0 %v6519
      %v6678 = vpop.f32.mrb[0].mxu0
      %v6679 = vadd.f32 %v6034, %v6678
      %v6680 = vpop.f32.mrb[0].mxu0
      %v6681 = vpop.f32.mrb[0].mxu0
      %v6682 = vadd.f32 %v6037, %v6681
      %v6683 = vpop.f32.mrb[0].mxu0
      %6684 = vdwg.mxu0
      %v6685 = vmax.f32 %v6559, 0.0
      %v6686 = vmax.f32 %v6562, 0.0
      %v6687 = vmax.f32 %v6567, 0.0
      %v6688 = vmax.f32 %v6570, 0.0
      %v6689 = vmax.f32 %v6575, 0.0
      %v6690 = vmax.f32 %v6578, 0.0
      %v6691 = vmax.f32 %v6583, 0.0
      %v6692 = vmax.f32 %v6586, 0.0
      %v6693 = vmax.f32 %v6591, 0.0
      %v6694 = vmax.f32 %v6594, 0.0
      %v6695 = vmax.f32 %v6599, 0.0
      %v6696 = vmax.f32 %v6602, 0.0
      %v6697 = vmax.f32 %v6607, 0.0
      %v6698 = vmax.f32 %v6610, 0.0
      %v6699 = vmax.f32 %v6615, 0.0
      %v6700 = vmax.f32 %v6618, 0.0
      %v6701 = vmax.f32 %v6623, 0.0
      %v6702 = vmax.f32 %v6626, 0.0
      %v6703 = vmax.f32 %v6631, 0.0
      %v6704 = vmax.f32 %v6634, 0.0
      %v6705 = vmax.f32 %v6639, 0.0
      %v6706 = vmax.f32 %v6642, 0.0
      %v6707 = vmax.f32 %v6647, 0.0
      %v6708 = vmax.f32 %v6650, 0.0
      %v6709 = vmax.f32 %v6655, 0.0
      %v6710 = vmax.f32 %v6658, 0.0
      %v6711 = vmax.f32 %v6663, 0.0
      %v6712 = vmax.f32 %v6666, 0.0
      %v6713 = vmax.f32 %v6671, 0.0
      %v6714 = vmax.f32 %v6674, 0.0
      %v6715 = vmax.f32 %v6679, 0.0
      %v6716 = vmax.f32 %v6682, 0.0
      %6717 = vst.msk [vmem:[%s251] sm:$0xff] %vm3695, %v6685
      %6718 = vst.msk [vmem:[%s251 + $0x8] sm:$0xff] %vm3695, %v6686
      %6719 = vst.msk [vmem:[%s251 + $0x10] sm:$0xff] %vm3695, %v6687
      %6720 = vst.msk [vmem:[%s251 + $0x18] sm:$0xff] %vm3695, %v6688
      %6721 = vst.msk [vmem:[%s251 + $0x20] sm:$0xff] %vm3695, %v6689
      %6722 = vst.msk [vmem:[%s251 + $0x28] sm:$0xff] %vm3695, %v6690
      %6723 = vst.msk [vmem:[%s251 + $0x30] sm:$0xff] %vm3695, %v6691
      %6724 = vst.msk [vmem:[%s251 + $0x38] sm:$0xff] %vm3695, %v6692
      %6725 = vst.msk [vmem:[%s251 + $0x40] sm:$0xff] %vm3695, %v6693
      %6726 = vst.msk [vmem:[%s251 + $0x48] sm:$0xff] %vm3695, %v6694
      %6727 = vst.msk [vmem:[%s251 + $0x50] sm:$0xff] %vm3695, %v6695
      %6728 = vst.msk [vmem:[%s251 + $0x58] sm:$0xff] %vm3695, %v6696
      %6729 = vst.msk [vmem:[%s251 + $0x60] sm:$0xff] %vm3695, %v6697
      %6730 = vst.msk [vmem:[%s251 + $0x68] sm:$0xff] %vm3695, %v6698
      %6731 = vst.msk [vmem:[%s251 + $0x70] sm:$0xff] %vm3695, %v6699
      %6732 = vst.msk [vmem:[%s251 + $0x78] sm:$0xff] %vm3695, %v6700
      %6733 = vst.msk [vmem:[%s251 + $0x80] sm:$0xff] %vm3695, %v6701
      %6734 = vst.msk [vmem:[%s251 + $0x88] sm:$0xff] %vm3695, %v6702
      %6735 = vst.msk [vmem:[%s251 + $0x90] sm:$0xff] %vm3695, %v6703
      %6736 = vst.msk [vmem:[%s251 + $0x98] sm:$0xff] %vm3695, %v6704
      %6737 = vst.msk [vmem:[%s251 + $0xa0] sm:$0xff] %vm3695, %v6705
      %6738 = vst.msk [vmem:[%s251 + $0xa8] sm:$0xff] %vm3695, %v6706
      %6739 = vst.msk [vmem:[%s251 + $0xb0] sm:$0xff] %vm3695, %v6707
      %6740 = vst.msk [vmem:[%s251 + $0xb8] sm:$0xff] %vm3695, %v6708
      %6741 = vst.msk [vmem:[%s251 + $0xc0] sm:$0xff] %vm3695, %v6709
      %6742 = vst.msk [vmem:[%s251 + $0xc8] sm:$0xff] %vm3695, %v6710
      %6743 = vst.msk [vmem:[%s251 + $0xd0] sm:$0xff] %vm3695, %v6711
      %6744 = vst.msk [vmem:[%s251 + $0xd8] sm:$0xff] %vm3695, %v6712
      %6745 = vst.msk [vmem:[%s251 + $0xe0] sm:$0xff] %vm3695, %v6713
      %6746 = vst.msk [vmem:[%s251 + $0xe8] sm:$0xff] %vm3695, %v6714
      %6747 = vst.msk [vmem:[%s251 + $0xf0] sm:$0xff] %vm3695, %v6715
      %6748 = vst.msk [vmem:[%s251 + $0xf8] sm:$0xff] %vm3695, %v6716
      %p6749 = scmp.lt.s32.totalorder %s17, 1
      %s6750 = scalar_select %p6749, %s17, 1
      %s6751 = smul.addr %s6750, 32
      %s6752 = smul.addr %s6751, 8
      %s6753 = scalar_lea.vmem %s6, %s6752
      // Predicated region
      $region45: #{resnet_block_pallas.1} parent=43 // pred_check
        %p6754 = pneg %p166
      $region46: #{resnet_block_pallas.1} parent=43 // pred_check_branch
        %6756 = sbr.rel (%p6754) target = $region48
      $region47: #{resnet_block_pallas.1} parent=43 // pred_region
        _
      $region48: #{resnet_block_pallas.1} parent=43 // pred_fallthru
        _
    $region44: #{resnet_block_pallas.1} parent=5 // pred_fallthru
      _
    %p6757 = scmp.le.s32.totalorder 2, %s12
    // Predicated region
    $region49: #{resnet_block_pallas.1} parent=5 // pred_check
      %p6758 = pneg %p6757
    $region50: #{resnet_block_pallas.1} parent=5 // pred_check_branch
      %6760 = sbr.rel (%p6758) target = $region52
    $region51: #{resnet_block_pallas.1} parent=5 // pred_region
      %s6761 = ssub.s32 %s12, 2
      // Predicated region
      $region53: #{resnet_block_pallas.1} parent=51 // pred_check
        %p6762 = pneg %p172
      $region54: #{resnet_block_pallas.1} parent=51 // pred_check_branch
        %6764 = sbr.rel (%p6762) target = $region56
      $region55: #{resnet_block_pallas.1} parent=51 // pred_region
        %p6765 = scmp.lt.s32.totalorder %s18, 1
        %s6766 = scalar_select %p6765, %s18, 1
        %s6767 = smul.addr %s6766, 32
        %s6768 = smul.addr %s6767, 8
        %s6769 = scalar_lea.vmem %s6, %s6768
      $region56: #{resnet_block_pallas.1} parent=51 // pred_fallthru
        _
    $region52: #{resnet_block_pallas.1} parent=5 // pred_fallthru
      _
  $region6: #{resnet_block_pallas.1} parent=0 // loop_footer
    %s16 = sadd.s32 1, %s12
  $region7: #{resnet_block_pallas.1} parent=0 // loop_footer_branch
    %11 = sbr.rel target = $region3
  $region8: #{resnet_block_pallas.1} parent=0 // loop_exit
    _

</llo_original>
